<compile_context>
chip_gen: v7x
topology: tpu7x:2x2x1
jax: 0.10.0
libtpu: 0.0.40
codegen_flags: <defaults>
</compile_context>

<pallas_src>
import functools

import numpy as np
import jax
import jax.numpy as jnp
from jax import lax
from jax.experimental import pallas as pl
from jax.experimental.pallas import tpu as pltpu

_LANE_PAD = 128  # zero guard band (lanes) on each side of the flat plane


def _group_conv2d_kernel(x_ref, w_ref, b_ref, o_ref, *, imgs, c_in, c_out,
                         k_h, k_w, w_img, padding, alpha, apply_act):
    """Grouped KxK conv, stride=1, 'same' padding, bias (+ LReLU).

    x_ref: (imgs*C_in,  H*W)        flat unpadded planes, row stride = w_img
    w_ref: (C_in*KH*KW, C_out, 1)   per-(in-channel, tap) output-weight columns
                                    (zero outside the channel's group)
    b_ref: (C_out, 1)               bias column
    o_ref: (imgs*C_out, H*W)
    """
    hw = x_ref.shape[-1]
    taps = k_h * k_w

    # In-kernel zero padding: 128-lane zero guard bands give every tap a
    # non-negative in-bounds lane shift (vertical halo); the horizontal halo is
    # handled by per-tap output-column masks below.
    zeros = jnp.zeros((x_ref.shape[0], _LANE_PAD), jnp.float32)
    buf = jnp.concatenate([zeros, x_ref[...].astype(jnp.float32), zeros], axis=1)

    # Output column index of every lane (for horizontal border masks).
    ow = lax.broadcasted_iota(jnp.int32, (1, hw), 1) % w_img

    accs = [jnp.zeros((c_out, hw), jnp.float32) for _ in range(imgs)]

    for t in range(taps):                               # static: 9 taps
        kh, kw = divmod(t, k_w)
        off = _LANE_PAD + (kh - padding) * w_img + (kw - padding)
        # ONE shifted window per tap, shared by every image / channel (XLU).
        win = buf[:, off:off + hw]                      # (imgs*C_in, hw)
        lo = padding - kw
        hi = w_img - 1 + padding - kw
        if lo > 0 or hi < w_img - 1:                    # horizontal border mask
            mask = jnp.logical_and(ow >= lo, ow <= hi)
            win = jnp.where(mask, win, 0.0)
        for c in range(c_in):                           # static: 8 channels
            wcol = w_ref[c * taps + t]                  # (C_out, 1) VMEM column
            for b in range(imgs):                       # static: 1 or 2 images
                row = win[b * c_in + c:b * c_in + c + 1, :]   # (1, hw)
                # (C_out,1) * (1,hw) -> (C_out,hw): sublane-vectorized VPU update.
                accs[b] = accs[b] + wcol * row

    bias = b_ref[...]                                   # (C_out, 1)
    outs = [acc + bias for acc in accs]
    y = outs[0] if imgs == 1 else jnp.concatenate(outs, axis=0)
    if apply_act:
        y = jnp.maximum(alpha * y, y)                   # LReLU
    o_ref[...] = y.astype(o_ref.dtype)                  # ONE full unmasked store


def _tensorcores_per_chip():
    # v4 / v5p / v7x expose two TensorCores behind one JAX device; v5e / v6e
    # have a single TensorCore.  Fallback: assume 1.
    try:
        kind = jax.devices()[0].device_kind.lower()
    except Exception:
        return 1
    return 2 if any(tag in kind for tag in ("v7", "v5p", "v4")) else 1


@functools.partial(jax.jit, static_argnames=("groups", "stride", "padding",
                                             "activation", "alpha"))
def group_conv2d(x, weight, bias, *, groups=4, stride=1, padding=1,
                 activation=True, alpha=0.05):
    """x: (N, C, H, W) NCHW; weight: (Cout, Cin//groups, KH, KW); bias: (Cout,)."""
    n, c_in, h, w = x.shape
    c_out, cin_g, k_h, k_w = weight.shape
    assert stride == 1, "only stride=1 implemented (module default)"
    assert c_in % groups == 0 and c_out % groups == 0 and cin_g == c_in // groups
    assert k_h == k_w and 2 * padding == k_h - 1, "only 'same' conv implemented"
    assert padding * (w + 1) <= _LANE_PAD, "plane too wide for the guard band"
    # TODO(synk): stride>1 / non-"same" padding of nn.Conv2d are not implemented.
    cout_g = c_out // groups
    hw = h * w
    taps = k_h * k_w

    # v5e/v6e (1 TC): whole batch in one grid step.  v7x/v5p/v4 (2 TCs): one
    # image per step, grid parallel over batch.
    imgs = 1 if (_tensorcores_per_chip() > 1 and n > 1) else n
    steps = n // imgs

    # Lane-dense flat layout (H*W = 256 = 2*128): plain reshapes, no pad HLOs.
    x2 = x.reshape(n * c_in, hw)

    # Weight columns: wtab[c*taps + t, r, 0] = weight[r, c - g(r)*cin_g, kh, kw]
    # if input channel c belongs to output channel r's group, else 0.
    r = np.arange(c_out)
    ci = np.arange(cin_g)
    cc = np.arange(c_in)
    sel = (cc[:, None, None] ==
           (r[None, :, None] // cout_g) * cin_g + ci[None, None, :])
    w_r = weight.astype(jnp.float32).reshape(c_out, cin_g, taps)
    wtab = jnp.einsum("crx,rxt->ctr", sel.astype(np.float32), w_r)
    wtab = wtab.reshape(c_in * taps, c_out, 1)
    bcol = bias.astype(jnp.float32).reshape(c_out, 1)

    kernel = functools.partial(
        _group_conv2d_kernel, imgs=imgs, c_in=c_in, c_out=c_out, k_h=k_h,
        k_w=k_w, w_img=w, padding=padding, alpha=alpha, apply_act=activation)

    out = pl.pallas_call(
        kernel,
        out_shape=jax.ShapeDtypeStruct((n * c_out, hw), x.dtype),
        grid=(steps,),
        in_specs=[
            pl.BlockSpec((imgs * c_in, hw), lambda i: (i, 0)),
            pl.BlockSpec((c_in * taps, c_out, 1), lambda i: (0, 0, 0)),
            pl.BlockSpec((c_out, 1), lambda i: (0, 0)),
        ],
        out_specs=pl.BlockSpec((imgs * c_out, hw), lambda i: (i, 0)),
        compiler_params=pltpu.CompilerParams(
            dimension_semantics=("parallel",)),
    )(x2, wtab, bcol)

    return out.reshape(n, c_out, h, w)


def _reference(x, weight, bias, groups, alpha, activation):
    y = lax.conv_general_dilated(
        x, weight, window_strides=(1, 1), padding=((1, 1), (1, 1)),
        dimension_numbers=("NCHW", "OIHW", "NCHW"),
        feature_group_count=groups)
    y = y + bias[None, :, None, None]
    if activation:
        y = jnp.maximum(alpha * y, y)
    return y


if __name__ == "__main__":
    # Module config: in_channels=8, out_channels=8, kernel=3, stride=1,
    # groups=4, padding=1, activation=True.
    N, C_IN, C_OUT, H, W = 2, 8, 8, 16, 16
    GROUPS, K = 4, 3
    ALPHA = 0.05

    key = jax.random.PRNGKey(0)
    kx, kw_, kb = jax.random.split(key, 3)

    x = jax.random.normal(kx, (N, C_IN, H, W), dtype=jnp.float32)

    # Deterministic PyTorch-like init: U(-bound, bound), bound = 1/sqrt(fan_in).
    fan_in = (C_IN // GROUPS) * K * K
    bound = 1.0 / (fan_in ** 0.5)
    weight = jax.random.uniform(kw_, (C_OUT, C_IN // GROUPS, K, K),
                                dtype=jnp.float32, minval=-bound, maxval=bound)
    bias = jax.random.uniform(kb, (C_OUT,), dtype=jnp.float32,
                              minval=-bound, maxval=bound)

    out = group_conv2d(x, weight, bias, groups=GROUPS, activation=True,
                       alpha=ALPHA)
    out = jax.block_until_ready(out)

    ref = _reference(x, weight, bias, GROUPS, ALPHA, True)
    assert out.shape == (N, C_OUT, H, W)
    err = float(jnp.max(jnp.abs(out - ref)))
    assert err < 1e-5, err

    print("KERNEL_OK")
</pallas_src>

<mosaic_0001>
module attributes {stable_mosaic.version = 11 : i64} {
  func.func @_group_conv2d_kernel(%arg0: i32, %arg1: memref<16x256xf32, #tpu.memory_space<vmem>>, %arg2: memref<72x8x1xf32, #tpu.memory_space<vmem>>, %arg3: memref<8x1xf32, #tpu.memory_space<vmem>>, %arg4: memref<16x256xf32, #tpu.memory_space<vmem>>) attributes {dimension_semantics = [#tpu.dimension_semantics<parallel>], iteration_bounds = array<i64: 1>, scalar_prefetch = 0 : i64, scratch_operands = 0 : i64, tpu.core_type = #tpu.core_type<tc>, window_params = [{transform_indices = @transform_0, window_bounds = array<i64: 16, 256>}, {pipeline_mode = #tpu.pipeline_mode<synchronous>, transform_indices = @transform_1, window_bounds = array<i64: 72, 8, 1>}, {pipeline_mode = #tpu.pipeline_mode<synchronous>, transform_indices = @transform_2, window_bounds = array<i64: 8, 1>}, {transform_indices = @transform_3, window_bounds = array<i64: 16, 256>}]} {
    %cst = arith.constant 0.000000e+00 : f32
    %0 = vector.broadcast %cst : f32 to vector<16x128xf32>
    %c0 = arith.constant 0 : index
    %c0_0 = arith.constant 0 : index
    %1 = vector.load %arg1[%c0, %c0_0] : memref<16x256xf32, #tpu.memory_space<vmem>>, vector<16x256xf32>
    %2 = tpu.concatenate %0, %1, %0 in 1 : vector<16x128xf32>, vector<16x256xf32>, vector<16x128xf32> -> vector<16x512xf32>
    %3 = tpu.iota {dimensions = array<i32: 1>} : vector<1x256xi32>
    %c16_i32 = arith.constant 16 : i32
    %c0_i32 = arith.constant 0 : i32
    %4 = arith.cmpi eq, %c16_i32, %c0_i32 : i32
    %c1_i32 = arith.constant 1 : i32
    %5 = arith.select %4, %c1_i32, %c16_i32 : i32
    %6 = vector.broadcast %5 : i32 to vector<1x256xi32>
    %7 = arith.remsi %3, %6 : vector<1x256xi32>
    %c0_i32_1 = arith.constant 0 : i32
    %8 = vector.broadcast %c0_i32_1 : i32 to vector<1x256xi32>
    %9 = arith.cmpi ne, %7, %8 : vector<1x256xi32>
    %c0_i32_2 = arith.constant 0 : i32
    %10 = vector.broadcast %c0_i32_2 : i32 to vector<1x256xi32>
    %11 = arith.cmpi slt, %7, %10 : vector<1x256xi32>
    %c0_i32_3 = arith.constant 0 : i32
    %12 = arith.cmpi slt, %5, %c0_i32_3 : i32
    %13 = vector.broadcast %12 : i1 to vector<1x256xi1>
    %14 = vector.broadcast %13 : vector<1x256xi1> to vector<1x256xi1>
    %15 = arith.xori %11, %14 : vector<1x256xi1>
    %16 = arith.andi %15, %9 : vector<1x256xi1>
    %17 = vector.broadcast %5 : i32 to vector<1x256xi32>
    %18 = arith.addi %7, %17 : vector<1x256xi32>
    %19 = arith.select %16, %18, %7 : vector<1x256xi1>, vector<1x256xi32>
    %cst_4 = arith.constant 0.000000e+00 : f32
    %20 = vector.broadcast %cst_4 : f32 to vector<8x256xf32>
    %cst_5 = arith.constant 0.000000e+00 : f32
    %21 = vector.broadcast %cst_5 : f32 to vector<8x256xf32>
    %22 = vector.extract_strided_slice %2 {offsets = [0, 111], sizes = [16, 256], strides = [1, 1]} : vector<16x512xf32> to vector<16x256xf32>
    %c1_i32_6 = arith.constant 1 : i32
    %23 = vector.broadcast %c1_i32_6 : i32 to vector<1x256xi32>
    %24 = arith.cmpi sge, %19, %23 : vector<1x256xi32>
    %c16_i32_7 = arith.constant 16 : i32
    %25 = vector.broadcast %c16_i32_7 : i32 to vector<1x256xi32>
    %26 = arith.cmpi sle, %19, %25 : vector<1x256xi32>
    %27 = arith.andi %24, %26 : vector<1x256xi1>
    %cst_8 = arith.constant 0.000000e+00 : f32
    %28 = vector.shape_cast %27 : vector<1x256xi1> to vector<1x256xi1>
    %29 = vector.broadcast %28 : vector<1x256xi1> to vector<16x256xi1>
    %30 = vector.broadcast %cst_8 : f32 to vector<16x256xf32>
    %31 = arith.select %29, %22, %30 : vector<16x256xi1>, vector<16x256xf32>
    %c0_9 = arith.constant 0 : index
    %c0_10 = arith.constant 0 : index
    %c0_11 = arith.constant 0 : index
    %32 = vector.load %arg2[%c0_9, %c0_10, %c0_11] : memref<72x8x1xf32, #tpu.memory_space<vmem>>, vector<1x8x1xf32>
    %33 = vector.shape_cast %32 : vector<1x8x1xf32> to vector<8x1xf32>
    %34 = vector.extract_strided_slice %31 {offsets = [0, 0], sizes = [1, 256], strides = [1, 1]} : vector<16x256xf32> to vector<1x256xf32>
    %35 = vector.broadcast %33 : vector<8x1xf32> to vector<8x256xf32>
    %36 = vector.broadcast %34 : vector<1x256xf32> to vector<8x256xf32>
    %37 = arith.mulf %35, %36 : vector<8x256xf32>
    %38 = arith.addf %20, %37 : vector<8x256xf32>
    %39 = vector.extract_strided_slice %31 {offsets = [8, 0], sizes = [1, 256], strides = [1, 1]} : vector<16x256xf32> to vector<1x256xf32>
    %40 = vector.broadcast %33 : vector<8x1xf32> to vector<8x256xf32>
    %41 = vector.broadcast %39 : vector<1x256xf32> to vector<8x256xf32>
    %42 = arith.mulf %40, %41 : vector<8x256xf32>
    %43 = arith.addf %21, %42 : vector<8x256xf32>
    %c9 = arith.constant 9 : index
    %c0_12 = arith.constant 0 : index
    %c0_13 = arith.constant 0 : index
    %44 = vector.load %arg2[%c9, %c0_12, %c0_13] : memref<72x8x1xf32, #tpu.memory_space<vmem>>, vector<1x8x1xf32>
    %45 = vector.shape_cast %44 : vector<1x8x1xf32> to vector<8x1xf32>
    %46 = vector.extract_strided_slice %31 {offsets = [1, 0], sizes = [1, 256], strides = [1, 1]} : vector<16x256xf32> to vector<1x256xf32>
    %47 = vector.broadcast %45 : vector<8x1xf32> to vector<8x256xf32>
    %48 = vector.broadcast %46 : vector<1x256xf32> to vector<8x256xf32>
    %49 = arith.mulf %47, %48 : vector<8x256xf32>
    %50 = arith.addf %38, %49 : vector<8x256xf32>
    %51 = vector.extract_strided_slice %31 {offsets = [9, 0], sizes = [1, 256], strides = [1, 1]} : vector<16x256xf32> to vector<1x256xf32>
    %52 = vector.broadcast %45 : vector<8x1xf32> to vector<8x256xf32>
    %53 = vector.broadcast %51 : vector<1x256xf32> to vector<8x256xf32>
    %54 = arith.mulf %52, %53 : vector<8x256xf32>
    %55 = arith.addf %43, %54 : vector<8x256xf32>
    %c18 = arith.constant 18 : index
    %c0_14 = arith.constant 0 : index
    %c0_15 = arith.constant 0 : index
    %56 = vector.load %arg2[%c18, %c0_14, %c0_15] : memref<72x8x1xf32, #tpu.memory_space<vmem>>, vector<1x8x1xf32>
    %57 = vector.shape_cast %56 : vector<1x8x1xf32> to vector<8x1xf32>
    %58 = vector.extract_strided_slice %31 {offsets = [2, 0], sizes = [1, 256], strides = [1, 1]} : vector<16x256xf32> to vector<1x256xf32>
    %59 = vector.broadcast %57 : vector<8x1xf32> to vector<8x256xf32>
    %60 = vector.broadcast %58 : vector<1x256xf32> to vector<8x256xf32>
    %61 = arith.mulf %59, %60 : vector<8x256xf32>
    %62 = arith.addf %50, %61 : vector<8x256xf32>
    %63 = vector.extract_strided_slice %31 {offsets = [10, 0], sizes = [1, 256], strides = [1, 1]} : vector<16x256xf32> to vector<1x256xf32>
    %64 = vector.broadcast %57 : vector<8x1xf32> to vector<8x256xf32>
    %65 = vector.broadcast %63 : vector<1x256xf32> to vector<8x256xf32>
    %66 = arith.mulf %64, %65 : vector<8x256xf32>
    %67 = arith.addf %55, %66 : vector<8x256xf32>
    %c27 = arith.constant 27 : index
    %c0_16 = arith.constant 0 : index
    %c0_17 = arith.constant 0 : index
    %68 = vector.load %arg2[%c27, %c0_16, %c0_17] : memref<72x8x1xf32, #tpu.memory_space<vmem>>, vector<1x8x1xf32>
    %69 = vector.shape_cast %68 : vector<1x8x1xf32> to vector<8x1xf32>
    %70 = vector.extract_strided_slice %31 {offsets = [3, 0], sizes = [1, 256], strides = [1, 1]} : vector<16x256xf32> to vector<1x256xf32>
    %71 = vector.broadcast %69 : vector<8x1xf32> to vector<8x256xf32>
    %72 = vector.broadcast %70 : vector<1x256xf32> to vector<8x256xf32>
    %73 = arith.mulf %71, %72 : vector<8x256xf32>
    %74 = arith.addf %62, %73 : vector<8x256xf32>
    %75 = vector.extract_strided_slice %31 {offsets = [11, 0], sizes = [1, 256], strides = [1, 1]} : vector<16x256xf32> to vector<1x256xf32>
    %76 = vector.broadcast %69 : vector<8x1xf32> to vector<8x256xf32>
    %77 = vector.broadcast %75 : vector<1x256xf32> to vector<8x256xf32>
    %78 = arith.mulf %76, %77 : vector<8x256xf32>
    %79 = arith.addf %67, %78 : vector<8x256xf32>
    %c36 = arith.constant 36 : index
    %c0_18 = arith.constant 0 : index
    %c0_19 = arith.constant 0 : index
    %80 = vector.load %arg2[%c36, %c0_18, %c0_19] : memref<72x8x1xf32, #tpu.memory_space<vmem>>, vector<1x8x1xf32>
    %81 = vector.shape_cast %80 : vector<1x8x1xf32> to vector<8x1xf32>
    %82 = vector.extract_strided_slice %31 {offsets = [4, 0], sizes = [1, 256], strides = [1, 1]} : vector<16x256xf32> to vector<1x256xf32>
    %83 = vector.broadcast %81 : vector<8x1xf32> to vector<8x256xf32>
    %84 = vector.broadcast %82 : vector<1x256xf32> to vector<8x256xf32>
    %85 = arith.mulf %83, %84 : vector<8x256xf32>
    %86 = arith.addf %74, %85 : vector<8x256xf32>
    %87 = vector.extract_strided_slice %31 {offsets = [12, 0], sizes = [1, 256], strides = [1, 1]} : vector<16x256xf32> to vector<1x256xf32>
    %88 = vector.broadcast %81 : vector<8x1xf32> to vector<8x256xf32>
    %89 = vector.broadcast %87 : vector<1x256xf32> to vector<8x256xf32>
    %90 = arith.mulf %88, %89 : vector<8x256xf32>
    %91 = arith.addf %79, %90 : vector<8x256xf32>
    %c45 = arith.constant 45 : index
    %c0_20 = arith.constant 0 : index
    %c0_21 = arith.constant 0 : index
    %92 = vector.load %arg2[%c45, %c0_20, %c0_21] : memref<72x8x1xf32, #tpu.memory_space<vmem>>, vector<1x8x1xf32>
    %93 = vector.shape_cast %92 : vector<1x8x1xf32> to vector<8x1xf32>
    %94 = vector.extract_strided_slice %31 {offsets = [5, 0], sizes = [1, 256], strides = [1, 1]} : vector<16x256xf32> to vector<1x256xf32>
    %95 = vector.broadcast %93 : vector<8x1xf32> to vector<8x256xf32>
    %96 = vector.broadcast %94 : vector<1x256xf32> to vector<8x256xf32>
    %97 = arith.mulf %95, %96 : vector<8x256xf32>
    %98 = arith.addf %86, %97 : vector<8x256xf32>
    %99 = vector.extract_strided_slice %31 {offsets = [13, 0], sizes = [1, 256], strides = [1, 1]} : vector<16x256xf32> to vector<1x256xf32>
    %100 = vector.broadcast %93 : vector<8x1xf32> to vector<8x256xf32>
    %101 = vector.broadcast %99 : vector<1x256xf32> to vector<8x256xf32>
    %102 = arith.mulf %100, %101 : vector<8x256xf32>
    %103 = arith.addf %91, %102 : vector<8x256xf32>
    %c54 = arith.constant 54 : index
    %c0_22 = arith.constant 0 : index
    %c0_23 = arith.constant 0 : index
    %104 = vector.load %arg2[%c54, %c0_22, %c0_23] : memref<72x8x1xf32, #tpu.memory_space<vmem>>, vector<1x8x1xf32>
    %105 = vector.shape_cast %104 : vector<1x8x1xf32> to vector<8x1xf32>
    %106 = vector.extract_strided_slice %31 {offsets = [6, 0], sizes = [1, 256], strides = [1, 1]} : vector<16x256xf32> to vector<1x256xf32>
    %107 = vector.broadcast %105 : vector<8x1xf32> to vector<8x256xf32>
    %108 = vector.broadcast %106 : vector<1x256xf32> to vector<8x256xf32>
    %109 = arith.mulf %107, %108 : vector<8x256xf32>
    %110 = arith.addf %98, %109 : vector<8x256xf32>
    %111 = vector.extract_strided_slice %31 {offsets = [14, 0], sizes = [1, 256], strides = [1, 1]} : vector<16x256xf32> to vector<1x256xf32>
    %112 = vector.broadcast %105 : vector<8x1xf32> to vector<8x256xf32>
    %113 = vector.broadcast %111 : vector<1x256xf32> to vector<8x256xf32>
    %114 = arith.mulf %112, %113 : vector<8x256xf32>
    %115 = arith.addf %103, %114 : vector<8x256xf32>
    %c63 = arith.constant 63 : index
    %c0_24 = arith.constant 0 : index
    %c0_25 = arith.constant 0 : index
    %116 = vector.load %arg2[%c63, %c0_24, %c0_25] : memref<72x8x1xf32, #tpu.memory_space<vmem>>, vector<1x8x1xf32>
    %117 = vector.shape_cast %116 : vector<1x8x1xf32> to vector<8x1xf32>
    %118 = vector.extract_strided_slice %31 {offsets = [7, 0], sizes = [1, 256], strides = [1, 1]} : vector<16x256xf32> to vector<1x256xf32>
    %119 = vector.broadcast %117 : vector<8x1xf32> to vector<8x256xf32>
    %120 = vector.broadcast %118 : vector<1x256xf32> to vector<8x256xf32>
    %121 = arith.mulf %119, %120 : vector<8x256xf32>
    %122 = arith.addf %110, %121 : vector<8x256xf32>
    %123 = vector.extract_strided_slice %31 {offsets = [15, 0], sizes = [1, 256], strides = [1, 1]} : vector<16x256xf32> to vector<1x256xf32>
    %124 = vector.broadcast %117 : vector<8x1xf32> to vector<8x256xf32>
    %125 = vector.broadcast %123 : vector<1x256xf32> to vector<8x256xf32>
    %126 = arith.mulf %124, %125 : vector<8x256xf32>
    %127 = arith.addf %115, %126 : vector<8x256xf32>
    %128 = vector.extract_strided_slice %2 {offsets = [0, 112], sizes = [16, 256], strides = [1, 1]} : vector<16x512xf32> to vector<16x256xf32>
    %c1 = arith.constant 1 : index
    %c0_26 = arith.constant 0 : index
    %c0_27 = arith.constant 0 : index
    %129 = vector.load %arg2[%c1, %c0_26, %c0_27] : memref<72x8x1xf32, #tpu.memory_space<vmem>>, vector<1x8x1xf32>
    %130 = vector.shape_cast %129 : vector<1x8x1xf32> to vector<8x1xf32>
    %131 = vector.extract_strided_slice %128 {offsets = [0, 0], sizes = [1, 256], strides = [1, 1]} : vector<16x256xf32> to vector<1x256xf32>
    %132 = vector.broadcast %130 : vector<8x1xf32> to vector<8x256xf32>
    %133 = vector.broadcast %131 : vector<1x256xf32> to vector<8x256xf32>
    %134 = arith.mulf %132, %133 : vector<8x256xf32>
    %135 = arith.addf %122, %134 : vector<8x256xf32>
    %136 = vector.extract_strided_slice %128 {offsets = [8, 0], sizes = [1, 256], strides = [1, 1]} : vector<16x256xf32> to vector<1x256xf32>
    %137 = vector.broadcast %130 : vector<8x1xf32> to vector<8x256xf32>
    %138 = vector.broadcast %136 : vector<1x256xf32> to vector<8x256xf32>
    %139 = arith.mulf %137, %138 : vector<8x256xf32>
    %140 = arith.addf %127, %139 : vector<8x256xf32>
    %c10 = arith.constant 10 : index
    %c0_28 = arith.constant 0 : index
    %c0_29 = arith.constant 0 : index
    %141 = vector.load %arg2[%c10, %c0_28, %c0_29] : memref<72x8x1xf32, #tpu.memory_space<vmem>>, vector<1x8x1xf32>
    %142 = vector.shape_cast %141 : vector<1x8x1xf32> to vector<8x1xf32>
    %143 = vector.extract_strided_slice %128 {offsets = [1, 0], sizes = [1, 256], strides = [1, 1]} : vector<16x256xf32> to vector<1x256xf32>
    %144 = vector.broadcast %142 : vector<8x1xf32> to vector<8x256xf32>
    %145 = vector.broadcast %143 : vector<1x256xf32> to vector<8x256xf32>
    %146 = arith.mulf %144, %145 : vector<8x256xf32>
    %147 = arith.addf %135, %146 : vector<8x256xf32>
    %148 = vector.extract_strided_slice %128 {offsets = [9, 0], sizes = [1, 256], strides = [1, 1]} : vector<16x256xf32> to vector<1x256xf32>
    %149 = vector.broadcast %142 : vector<8x1xf32> to vector<8x256xf32>
    %150 = vector.broadcast %148 : vector<1x256xf32> to vector<8x256xf32>
    %151 = arith.mulf %149, %150 : vector<8x256xf32>
    %152 = arith.addf %140, %151 : vector<8x256xf32>
    %c19 = arith.constant 19 : index
    %c0_30 = arith.constant 0 : index
    %c0_31 = arith.constant 0 : index
    %153 = vector.load %arg2[%c19, %c0_30, %c0_31] : memref<72x8x1xf32, #tpu.memory_space<vmem>>, vector<1x8x1xf32>
    %154 = vector.shape_cast %153 : vector<1x8x1xf32> to vector<8x1xf32>
    %155 = vector.extract_strided_slice %128 {offsets = [2, 0], sizes = [1, 256], strides = [1, 1]} : vector<16x256xf32> to vector<1x256xf32>
    %156 = vector.broadcast %154 : vector<8x1xf32> to vector<8x256xf32>
    %157 = vector.broadcast %155 : vector<1x256xf32> to vector<8x256xf32>
    %158 = arith.mulf %156, %157 : vector<8x256xf32>
    %159 = arith.addf %147, %158 : vector<8x256xf32>
    %160 = vector.extract_strided_slice %128 {offsets = [10, 0], sizes = [1, 256], strides = [1, 1]} : vector<16x256xf32> to vector<1x256xf32>
    %161 = vector.broadcast %154 : vector<8x1xf32> to vector<8x256xf32>
    %162 = vector.broadcast %160 : vector<1x256xf32> to vector<8x256xf32>
    %163 = arith.mulf %161, %162 : vector<8x256xf32>
    %164 = arith.addf %152, %163 : vector<8x256xf32>
    %c28 = arith.constant 28 : index
    %c0_32 = arith.constant 0 : index
    %c0_33 = arith.constant 0 : index
    %165 = vector.load %arg2[%c28, %c0_32, %c0_33] : memref<72x8x1xf32, #tpu.memory_space<vmem>>, vector<1x8x1xf32>
    %166 = vector.shape_cast %165 : vector<1x8x1xf32> to vector<8x1xf32>
    %167 = vector.extract_strided_slice %128 {offsets = [3, 0], sizes = [1, 256], strides = [1, 1]} : vector<16x256xf32> to vector<1x256xf32>
    %168 = vector.broadcast %166 : vector<8x1xf32> to vector<8x256xf32>
    %169 = vector.broadcast %167 : vector<1x256xf32> to vector<8x256xf32>
    %170 = arith.mulf %168, %169 : vector<8x256xf32>
    %171 = arith.addf %159, %170 : vector<8x256xf32>
    %172 = vector.extract_strided_slice %128 {offsets = [11, 0], sizes = [1, 256], strides = [1, 1]} : vector<16x256xf32> to vector<1x256xf32>
    %173 = vector.broadcast %166 : vector<8x1xf32> to vector<8x256xf32>
    %174 = vector.broadcast %172 : vector<1x256xf32> to vector<8x256xf32>
    %175 = arith.mulf %173, %174 : vector<8x256xf32>
    %176 = arith.addf %164, %175 : vector<8x256xf32>
    %c37 = arith.constant 37 : index
    %c0_34 = arith.constant 0 : index
    %c0_35 = arith.constant 0 : index
    %177 = vector.load %arg2[%c37, %c0_34, %c0_35] : memref<72x8x1xf32, #tpu.memory_space<vmem>>, vector<1x8x1xf32>
    %178 = vector.shape_cast %177 : vector<1x8x1xf32> to vector<8x1xf32>
    %179 = vector.extract_strided_slice %128 {offsets = [4, 0], sizes = [1, 256], strides = [1, 1]} : vector<16x256xf32> to vector<1x256xf32>
    %180 = vector.broadcast %178 : vector<8x1xf32> to vector<8x256xf32>
    %181 = vector.broadcast %179 : vector<1x256xf32> to vector<8x256xf32>
    %182 = arith.mulf %180, %181 : vector<8x256xf32>
    %183 = arith.addf %171, %182 : vector<8x256xf32>
    %184 = vector.extract_strided_slice %128 {offsets = [12, 0], sizes = [1, 256], strides = [1, 1]} : vector<16x256xf32> to vector<1x256xf32>
    %185 = vector.broadcast %178 : vector<8x1xf32> to vector<8x256xf32>
    %186 = vector.broadcast %184 : vector<1x256xf32> to vector<8x256xf32>
    %187 = arith.mulf %185, %186 : vector<8x256xf32>
    %188 = arith.addf %176, %187 : vector<8x256xf32>
    %c46 = arith.constant 46 : index
    %c0_36 = arith.constant 0 : index
    %c0_37 = arith.constant 0 : index
    %189 = vector.load %arg2[%c46, %c0_36, %c0_37] : memref<72x8x1xf32, #tpu.memory_space<vmem>>, vector<1x8x1xf32>
    %190 = vector.shape_cast %189 : vector<1x8x1xf32> to vector<8x1xf32>
    %191 = vector.extract_strided_slice %128 {offsets = [5, 0], sizes = [1, 256], strides = [1, 1]} : vector<16x256xf32> to vector<1x256xf32>
    %192 = vector.broadcast %190 : vector<8x1xf32> to vector<8x256xf32>
    %193 = vector.broadcast %191 : vector<1x256xf32> to vector<8x256xf32>
    %194 = arith.mulf %192, %193 : vector<8x256xf32>
    %195 = arith.addf %183, %194 : vector<8x256xf32>
    %196 = vector.extract_strided_slice %128 {offsets = [13, 0], sizes = [1, 256], strides = [1, 1]} : vector<16x256xf32> to vector<1x256xf32>
    %197 = vector.broadcast %190 : vector<8x1xf32> to vector<8x256xf32>
    %198 = vector.broadcast %196 : vector<1x256xf32> to vector<8x256xf32>
    %199 = arith.mulf %197, %198 : vector<8x256xf32>
    %200 = arith.addf %188, %199 : vector<8x256xf32>
    %c55 = arith.constant 55 : index
    %c0_38 = arith.constant 0 : index
    %c0_39 = arith.constant 0 : index
    %201 = vector.load %arg2[%c55, %c0_38, %c0_39] : memref<72x8x1xf32, #tpu.memory_space<vmem>>, vector<1x8x1xf32>
    %202 = vector.shape_cast %201 : vector<1x8x1xf32> to vector<8x1xf32>
    %203 = vector.extract_strided_slice %128 {offsets = [6, 0], sizes = [1, 256], strides = [1, 1]} : vector<16x256xf32> to vector<1x256xf32>
    %204 = vector.broadcast %202 : vector<8x1xf32> to vector<8x256xf32>
    %205 = vector.broadcast %203 : vector<1x256xf32> to vector<8x256xf32>
    %206 = arith.mulf %204, %205 : vector<8x256xf32>
    %207 = arith.addf %195, %206 : vector<8x256xf32>
    %208 = vector.extract_strided_slice %128 {offsets = [14, 0], sizes = [1, 256], strides = [1, 1]} : vector<16x256xf32> to vector<1x256xf32>
    %209 = vector.broadcast %202 : vector<8x1xf32> to vector<8x256xf32>
    %210 = vector.broadcast %208 : vector<1x256xf32> to vector<8x256xf32>
    %211 = arith.mulf %209, %210 : vector<8x256xf32>
    %212 = arith.addf %200, %211 : vector<8x256xf32>
    %c64 = arith.constant 64 : index
    %c0_40 = arith.constant 0 : index
    %c0_41 = arith.constant 0 : index
    %213 = vector.load %arg2[%c64, %c0_40, %c0_41] : memref<72x8x1xf32, #tpu.memory_space<vmem>>, vector<1x8x1xf32>
    %214 = vector.shape_cast %213 : vector<1x8x1xf32> to vector<8x1xf32>
    %215 = vector.extract_strided_slice %128 {offsets = [7, 0], sizes = [1, 256], strides = [1, 1]} : vector<16x256xf32> to vector<1x256xf32>
    %216 = vector.broadcast %214 : vector<8x1xf32> to vector<8x256xf32>
    %217 = vector.broadcast %215 : vector<1x256xf32> to vector<8x256xf32>
    %218 = arith.mulf %216, %217 : vector<8x256xf32>
    %219 = arith.addf %207, %218 : vector<8x256xf32>
    %220 = vector.extract_strided_slice %128 {offsets = [15, 0], sizes = [1, 256], strides = [1, 1]} : vector<16x256xf32> to vector<1x256xf32>
    %221 = vector.broadcast %214 : vector<8x1xf32> to vector<8x256xf32>
    %222 = vector.broadcast %220 : vector<1x256xf32> to vector<8x256xf32>
    %223 = arith.mulf %221, %222 : vector<8x256xf32>
    %224 = arith.addf %212, %223 : vector<8x256xf32>
    %225 = vector.extract_strided_slice %2 {offsets = [0, 113], sizes = [16, 256], strides = [1, 1]} : vector<16x512xf32> to vector<16x256xf32>
    %c-1_i32 = arith.constant -1 : i32
    %226 = vector.broadcast %c-1_i32 : i32 to vector<1x256xi32>
    %227 = arith.cmpi sge, %19, %226 : vector<1x256xi32>
    %c14_i32 = arith.constant 14 : i32
    %228 = vector.broadcast %c14_i32 : i32 to vector<1x256xi32>
    %229 = arith.cmpi sle, %19, %228 : vector<1x256xi32>
    %230 = arith.andi %227, %229 : vector<1x256xi1>
    %cst_42 = arith.constant 0.000000e+00 : f32
    %231 = vector.shape_cast %230 : vector<1x256xi1> to vector<1x256xi1>
    %232 = vector.broadcast %231 : vector<1x256xi1> to vector<16x256xi1>
    %233 = vector.broadcast %cst_42 : f32 to vector<16x256xf32>
    %234 = arith.select %232, %225, %233 : vector<16x256xi1>, vector<16x256xf32>
    %c2 = arith.constant 2 : index
    %c0_43 = arith.constant 0 : index
    %c0_44 = arith.constant 0 : index
    %235 = vector.load %arg2[%c2, %c0_43, %c0_44] : memref<72x8x1xf32, #tpu.memory_space<vmem>>, vector<1x8x1xf32>
    %236 = vector.shape_cast %235 : vector<1x8x1xf32> to vector<8x1xf32>
    %237 = vector.extract_strided_slice %234 {offsets = [0, 0], sizes = [1, 256], strides = [1, 1]} : vector<16x256xf32> to vector<1x256xf32>
    %238 = vector.broadcast %236 : vector<8x1xf32> to vector<8x256xf32>
    %239 = vector.broadcast %237 : vector<1x256xf32> to vector<8x256xf32>
    %240 = arith.mulf %238, %239 : vector<8x256xf32>
    %241 = arith.addf %219, %240 : vector<8x256xf32>
    %242 = vector.extract_strided_slice %234 {offsets = [8, 0], sizes = [1, 256], strides = [1, 1]} : vector<16x256xf32> to vector<1x256xf32>
    %243 = vector.broadcast %236 : vector<8x1xf32> to vector<8x256xf32>
    %244 = vector.broadcast %242 : vector<1x256xf32> to vector<8x256xf32>
    %245 = arith.mulf %243, %244 : vector<8x256xf32>
    %246 = arith.addf %224, %245 : vector<8x256xf32>
    %c11 = arith.constant 11 : index
    %c0_45 = arith.constant 0 : index
    %c0_46 = arith.constant 0 : index
    %247 = vector.load %arg2[%c11, %c0_45, %c0_46] : memref<72x8x1xf32, #tpu.memory_space<vmem>>, vector<1x8x1xf32>
    %248 = vector.shape_cast %247 : vector<1x8x1xf32> to vector<8x1xf32>
    %249 = vector.extract_strided_slice %234 {offsets = [1, 0], sizes = [1, 256], strides = [1, 1]} : vector<16x256xf32> to vector<1x256xf32>
    %250 = vector.broadcast %248 : vector<8x1xf32> to vector<8x256xf32>
    %251 = vector.broadcast %249 : vector<1x256xf32> to vector<8x256xf32>
    %252 = arith.mulf %250, %251 : vector<8x256xf32>
    %253 = arith.addf %241, %252 : vector<8x256xf32>
    %254 = vector.extract_strided_slice %234 {offsets = [9, 0], sizes = [1, 256], strides = [1, 1]} : vector<16x256xf32> to vector<1x256xf32>
    %255 = vector.broadcast %248 : vector<8x1xf32> to vector<8x256xf32>
    %256 = vector.broadcast %254 : vector<1x256xf32> to vector<8x256xf32>
    %257 = arith.mulf %255, %256 : vector<8x256xf32>
    %258 = arith.addf %246, %257 : vector<8x256xf32>
    %c20 = arith.constant 20 : index
    %c0_47 = arith.constant 0 : index
    %c0_48 = arith.constant 0 : index
    %259 = vector.load %arg2[%c20, %c0_47, %c0_48] : memref<72x8x1xf32, #tpu.memory_space<vmem>>, vector<1x8x1xf32>
    %260 = vector.shape_cast %259 : vector<1x8x1xf32> to vector<8x1xf32>
    %261 = vector.extract_strided_slice %234 {offsets = [2, 0], sizes = [1, 256], strides = [1, 1]} : vector<16x256xf32> to vector<1x256xf32>
    %262 = vector.broadcast %260 : vector<8x1xf32> to vector<8x256xf32>
    %263 = vector.broadcast %261 : vector<1x256xf32> to vector<8x256xf32>
    %264 = arith.mulf %262, %263 : vector<8x256xf32>
    %265 = arith.addf %253, %264 : vector<8x256xf32>
    %266 = vector.extract_strided_slice %234 {offsets = [10, 0], sizes = [1, 256], strides = [1, 1]} : vector<16x256xf32> to vector<1x256xf32>
    %267 = vector.broadcast %260 : vector<8x1xf32> to vector<8x256xf32>
    %268 = vector.broadcast %266 : vector<1x256xf32> to vector<8x256xf32>
    %269 = arith.mulf %267, %268 : vector<8x256xf32>
    %270 = arith.addf %258, %269 : vector<8x256xf32>
    %c29 = arith.constant 29 : index
    %c0_49 = arith.constant 0 : index
    %c0_50 = arith.constant 0 : index
    %271 = vector.load %arg2[%c29, %c0_49, %c0_50] : memref<72x8x1xf32, #tpu.memory_space<vmem>>, vector<1x8x1xf32>
    %272 = vector.shape_cast %271 : vector<1x8x1xf32> to vector<8x1xf32>
    %273 = vector.extract_strided_slice %234 {offsets = [3, 0], sizes = [1, 256], strides = [1, 1]} : vector<16x256xf32> to vector<1x256xf32>
    %274 = vector.broadcast %272 : vector<8x1xf32> to vector<8x256xf32>
    %275 = vector.broadcast %273 : vector<1x256xf32> to vector<8x256xf32>
    %276 = arith.mulf %274, %275 : vector<8x256xf32>
    %277 = arith.addf %265, %276 : vector<8x256xf32>
    %278 = vector.extract_strided_slice %234 {offsets = [11, 0], sizes = [1, 256], strides = [1, 1]} : vector<16x256xf32> to vector<1x256xf32>
    %279 = vector.broadcast %272 : vector<8x1xf32> to vector<8x256xf32>
    %280 = vector.broadcast %278 : vector<1x256xf32> to vector<8x256xf32>
    %281 = arith.mulf %279, %280 : vector<8x256xf32>
    %282 = arith.addf %270, %281 : vector<8x256xf32>
    %c38 = arith.constant 38 : index
    %c0_51 = arith.constant 0 : index
    %c0_52 = arith.constant 0 : index
    %283 = vector.load %arg2[%c38, %c0_51, %c0_52] : memref<72x8x1xf32, #tpu.memory_space<vmem>>, vector<1x8x1xf32>
    %284 = vector.shape_cast %283 : vector<1x8x1xf32> to vector<8x1xf32>
    %285 = vector.extract_strided_slice %234 {offsets = [4, 0], sizes = [1, 256], strides = [1, 1]} : vector<16x256xf32> to vector<1x256xf32>
    %286 = vector.broadcast %284 : vector<8x1xf32> to vector<8x256xf32>
    %287 = vector.broadcast %285 : vector<1x256xf32> to vector<8x256xf32>
    %288 = arith.mulf %286, %287 : vector<8x256xf32>
    %289 = arith.addf %277, %288 : vector<8x256xf32>
    %290 = vector.extract_strided_slice %234 {offsets = [12, 0], sizes = [1, 256], strides = [1, 1]} : vector<16x256xf32> to vector<1x256xf32>
    %291 = vector.broadcast %284 : vector<8x1xf32> to vector<8x256xf32>
    %292 = vector.broadcast %290 : vector<1x256xf32> to vector<8x256xf32>
    %293 = arith.mulf %291, %292 : vector<8x256xf32>
    %294 = arith.addf %282, %293 : vector<8x256xf32>
    %c47 = arith.constant 47 : index
    %c0_53 = arith.constant 0 : index
    %c0_54 = arith.constant 0 : index
    %295 = vector.load %arg2[%c47, %c0_53, %c0_54] : memref<72x8x1xf32, #tpu.memory_space<vmem>>, vector<1x8x1xf32>
    %296 = vector.shape_cast %295 : vector<1x8x1xf32> to vector<8x1xf32>
    %297 = vector.extract_strided_slice %234 {offsets = [5, 0], sizes = [1, 256], strides = [1, 1]} : vector<16x256xf32> to vector<1x256xf32>
    %298 = vector.broadcast %296 : vector<8x1xf32> to vector<8x256xf32>
    %299 = vector.broadcast %297 : vector<1x256xf32> to vector<8x256xf32>
    %300 = arith.mulf %298, %299 : vector<8x256xf32>
    %301 = arith.addf %289, %300 : vector<8x256xf32>
    %302 = vector.extract_strided_slice %234 {offsets = [13, 0], sizes = [1, 256], strides = [1, 1]} : vector<16x256xf32> to vector<1x256xf32>
    %303 = vector.broadcast %296 : vector<8x1xf32> to vector<8x256xf32>
    %304 = vector.broadcast %302 : vector<1x256xf32> to vector<8x256xf32>
    %305 = arith.mulf %303, %304 : vector<8x256xf32>
    %306 = arith.addf %294, %305 : vector<8x256xf32>
    %c56 = arith.constant 56 : index
    %c0_55 = arith.constant 0 : index
    %c0_56 = arith.constant 0 : index
    %307 = vector.load %arg2[%c56, %c0_55, %c0_56] : memref<72x8x1xf32, #tpu.memory_space<vmem>>, vector<1x8x1xf32>
    %308 = vector.shape_cast %307 : vector<1x8x1xf32> to vector<8x1xf32>
    %309 = vector.extract_strided_slice %234 {offsets = [6, 0], sizes = [1, 256], strides = [1, 1]} : vector<16x256xf32> to vector<1x256xf32>
    %310 = vector.broadcast %308 : vector<8x1xf32> to vector<8x256xf32>
    %311 = vector.broadcast %309 : vector<1x256xf32> to vector<8x256xf32>
    %312 = arith.mulf %310, %311 : vector<8x256xf32>
    %313 = arith.addf %301, %312 : vector<8x256xf32>
    %314 = vector.extract_strided_slice %234 {offsets = [14, 0], sizes = [1, 256], strides = [1, 1]} : vector<16x256xf32> to vector<1x256xf32>
    %315 = vector.broadcast %308 : vector<8x1xf32> to vector<8x256xf32>
    %316 = vector.broadcast %314 : vector<1x256xf32> to vector<8x256xf32>
    %317 = arith.mulf %315, %316 : vector<8x256xf32>
    %318 = arith.addf %306, %317 : vector<8x256xf32>
    %c65 = arith.constant 65 : index
    %c0_57 = arith.constant 0 : index
    %c0_58 = arith.constant 0 : index
    %319 = vector.load %arg2[%c65, %c0_57, %c0_58] : memref<72x8x1xf32, #tpu.memory_space<vmem>>, vector<1x8x1xf32>
    %320 = vector.shape_cast %319 : vector<1x8x1xf32> to vector<8x1xf32>
    %321 = vector.extract_strided_slice %234 {offsets = [7, 0], sizes = [1, 256], strides = [1, 1]} : vector<16x256xf32> to vector<1x256xf32>
    %322 = vector.broadcast %320 : vector<8x1xf32> to vector<8x256xf32>
    %323 = vector.broadcast %321 : vector<1x256xf32> to vector<8x256xf32>
    %324 = arith.mulf %322, %323 : vector<8x256xf32>
    %325 = arith.addf %313, %324 : vector<8x256xf32>
    %326 = vector.extract_strided_slice %234 {offsets = [15, 0], sizes = [1, 256], strides = [1, 1]} : vector<16x256xf32> to vector<1x256xf32>
    %327 = vector.broadcast %320 : vector<8x1xf32> to vector<8x256xf32>
    %328 = vector.broadcast %326 : vector<1x256xf32> to vector<8x256xf32>
    %329 = arith.mulf %327, %328 : vector<8x256xf32>
    %330 = arith.addf %318, %329 : vector<8x256xf32>
    %331 = vector.extract_strided_slice %2 {offsets = [0, 127], sizes = [16, 256], strides = [1, 1]} : vector<16x512xf32> to vector<16x256xf32>
    %c1_i32_59 = arith.constant 1 : i32
    %332 = vector.broadcast %c1_i32_59 : i32 to vector<1x256xi32>
    %333 = arith.cmpi sge, %19, %332 : vector<1x256xi32>
    %c16_i32_60 = arith.constant 16 : i32
    %334 = vector.broadcast %c16_i32_60 : i32 to vector<1x256xi32>
    %335 = arith.cmpi sle, %19, %334 : vector<1x256xi32>
    %336 = arith.andi %333, %335 : vector<1x256xi1>
    %cst_61 = arith.constant 0.000000e+00 : f32
    %337 = vector.shape_cast %336 : vector<1x256xi1> to vector<1x256xi1>
    %338 = vector.broadcast %337 : vector<1x256xi1> to vector<16x256xi1>
    %339 = vector.broadcast %cst_61 : f32 to vector<16x256xf32>
    %340 = arith.select %338, %331, %339 : vector<16x256xi1>, vector<16x256xf32>
    %c3 = arith.constant 3 : index
    %c0_62 = arith.constant 0 : index
    %c0_63 = arith.constant 0 : index
    %341 = vector.load %arg2[%c3, %c0_62, %c0_63] : memref<72x8x1xf32, #tpu.memory_space<vmem>>, vector<1x8x1xf32>
    %342 = vector.shape_cast %341 : vector<1x8x1xf32> to vector<8x1xf32>
    %343 = vector.extract_strided_slice %340 {offsets = [0, 0], sizes = [1, 256], strides = [1, 1]} : vector<16x256xf32> to vector<1x256xf32>
    %344 = vector.broadcast %342 : vector<8x1xf32> to vector<8x256xf32>
    %345 = vector.broadcast %343 : vector<1x256xf32> to vector<8x256xf32>
    %346 = arith.mulf %344, %345 : vector<8x256xf32>
    %347 = arith.addf %325, %346 : vector<8x256xf32>
    %348 = vector.extract_strided_slice %340 {offsets = [8, 0], sizes = [1, 256], strides = [1, 1]} : vector<16x256xf32> to vector<1x256xf32>
    %349 = vector.broadcast %342 : vector<8x1xf32> to vector<8x256xf32>
    %350 = vector.broadcast %348 : vector<1x256xf32> to vector<8x256xf32>
    %351 = arith.mulf %349, %350 : vector<8x256xf32>
    %352 = arith.addf %330, %351 : vector<8x256xf32>
    %c12 = arith.constant 12 : index
    %c0_64 = arith.constant 0 : index
    %c0_65 = arith.constant 0 : index
    %353 = vector.load %arg2[%c12, %c0_64, %c0_65] : memref<72x8x1xf32, #tpu.memory_space<vmem>>, vector<1x8x1xf32>
    %354 = vector.shape_cast %353 : vector<1x8x1xf32> to vector<8x1xf32>
    %355 = vector.extract_strided_slice %340 {offsets = [1, 0], sizes = [1, 256], strides = [1, 1]} : vector<16x256xf32> to vector<1x256xf32>
    %356 = vector.broadcast %354 : vector<8x1xf32> to vector<8x256xf32>
    %357 = vector.broadcast %355 : vector<1x256xf32> to vector<8x256xf32>
    %358 = arith.mulf %356, %357 : vector<8x256xf32>
    %359 = arith.addf %347, %358 : vector<8x256xf32>
    %360 = vector.extract_strided_slice %340 {offsets = [9, 0], sizes = [1, 256], strides = [1, 1]} : vector<16x256xf32> to vector<1x256xf32>
    %361 = vector.broadcast %354 : vector<8x1xf32> to vector<8x256xf32>
    %362 = vector.broadcast %360 : vector<1x256xf32> to vector<8x256xf32>
    %363 = arith.mulf %361, %362 : vector<8x256xf32>
    %364 = arith.addf %352, %363 : vector<8x256xf32>
    %c21 = arith.constant 21 : index
    %c0_66 = arith.constant 0 : index
    %c0_67 = arith.constant 0 : index
    %365 = vector.load %arg2[%c21, %c0_66, %c0_67] : memref<72x8x1xf32, #tpu.memory_space<vmem>>, vector<1x8x1xf32>
    %366 = vector.shape_cast %365 : vector<1x8x1xf32> to vector<8x1xf32>
    %367 = vector.extract_strided_slice %340 {offsets = [2, 0], sizes = [1, 256], strides = [1, 1]} : vector<16x256xf32> to vector<1x256xf32>
    %368 = vector.broadcast %366 : vector<8x1xf32> to vector<8x256xf32>
    %369 = vector.broadcast %367 : vector<1x256xf32> to vector<8x256xf32>
    %370 = arith.mulf %368, %369 : vector<8x256xf32>
    %371 = arith.addf %359, %370 : vector<8x256xf32>
    %372 = vector.extract_strided_slice %340 {offsets = [10, 0], sizes = [1, 256], strides = [1, 1]} : vector<16x256xf32> to vector<1x256xf32>
    %373 = vector.broadcast %366 : vector<8x1xf32> to vector<8x256xf32>
    %374 = vector.broadcast %372 : vector<1x256xf32> to vector<8x256xf32>
    %375 = arith.mulf %373, %374 : vector<8x256xf32>
    %376 = arith.addf %364, %375 : vector<8x256xf32>
    %c30 = arith.constant 30 : index
    %c0_68 = arith.constant 0 : index
    %c0_69 = arith.constant 0 : index
    %377 = vector.load %arg2[%c30, %c0_68, %c0_69] : memref<72x8x1xf32, #tpu.memory_space<vmem>>, vector<1x8x1xf32>
    %378 = vector.shape_cast %377 : vector<1x8x1xf32> to vector<8x1xf32>
    %379 = vector.extract_strided_slice %340 {offsets = [3, 0], sizes = [1, 256], strides = [1, 1]} : vector<16x256xf32> to vector<1x256xf32>
    %380 = vector.broadcast %378 : vector<8x1xf32> to vector<8x256xf32>
    %381 = vector.broadcast %379 : vector<1x256xf32> to vector<8x256xf32>
    %382 = arith.mulf %380, %381 : vector<8x256xf32>
    %383 = arith.addf %371, %382 : vector<8x256xf32>
    %384 = vector.extract_strided_slice %340 {offsets = [11, 0], sizes = [1, 256], strides = [1, 1]} : vector<16x256xf32> to vector<1x256xf32>
    %385 = vector.broadcast %378 : vector<8x1xf32> to vector<8x256xf32>
    %386 = vector.broadcast %384 : vector<1x256xf32> to vector<8x256xf32>
    %387 = arith.mulf %385, %386 : vector<8x256xf32>
    %388 = arith.addf %376, %387 : vector<8x256xf32>
    %c39 = arith.constant 39 : index
    %c0_70 = arith.constant 0 : index
    %c0_71 = arith.constant 0 : index
    %389 = vector.load %arg2[%c39, %c0_70, %c0_71] : memref<72x8x1xf32, #tpu.memory_space<vmem>>, vector<1x8x1xf32>
    %390 = vector.shape_cast %389 : vector<1x8x1xf32> to vector<8x1xf32>
    %391 = vector.extract_strided_slice %340 {offsets = [4, 0], sizes = [1, 256], strides = [1, 1]} : vector<16x256xf32> to vector<1x256xf32>
    %392 = vector.broadcast %390 : vector<8x1xf32> to vector<8x256xf32>
    %393 = vector.broadcast %391 : vector<1x256xf32> to vector<8x256xf32>
    %394 = arith.mulf %392, %393 : vector<8x256xf32>
    %395 = arith.addf %383, %394 : vector<8x256xf32>
    %396 = vector.extract_strided_slice %340 {offsets = [12, 0], sizes = [1, 256], strides = [1, 1]} : vector<16x256xf32> to vector<1x256xf32>
    %397 = vector.broadcast %390 : vector<8x1xf32> to vector<8x256xf32>
    %398 = vector.broadcast %396 : vector<1x256xf32> to vector<8x256xf32>
    %399 = arith.mulf %397, %398 : vector<8x256xf32>
    %400 = arith.addf %388, %399 : vector<8x256xf32>
    %c48 = arith.constant 48 : index
    %c0_72 = arith.constant 0 : index
    %c0_73 = arith.constant 0 : index
    %401 = vector.load %arg2[%c48, %c0_72, %c0_73] : memref<72x8x1xf32, #tpu.memory_space<vmem>>, vector<1x8x1xf32>
    %402 = vector.shape_cast %401 : vector<1x8x1xf32> to vector<8x1xf32>
    %403 = vector.extract_strided_slice %340 {offsets = [5, 0], sizes = [1, 256], strides = [1, 1]} : vector<16x256xf32> to vector<1x256xf32>
    %404 = vector.broadcast %402 : vector<8x1xf32> to vector<8x256xf32>
    %405 = vector.broadcast %403 : vector<1x256xf32> to vector<8x256xf32>
    %406 = arith.mulf %404, %405 : vector<8x256xf32>
    %407 = arith.addf %395, %406 : vector<8x256xf32>
    %408 = vector.extract_strided_slice %340 {offsets = [13, 0], sizes = [1, 256], strides = [1, 1]} : vector<16x256xf32> to vector<1x256xf32>
    %409 = vector.broadcast %402 : vector<8x1xf32> to vector<8x256xf32>
    %410 = vector.broadcast %408 : vector<1x256xf32> to vector<8x256xf32>
    %411 = arith.mulf %409, %410 : vector<8x256xf32>
    %412 = arith.addf %400, %411 : vector<8x256xf32>
    %c57 = arith.constant 57 : index
    %c0_74 = arith.constant 0 : index
    %c0_75 = arith.constant 0 : index
    %413 = vector.load %arg2[%c57, %c0_74, %c0_75] : memref<72x8x1xf32, #tpu.memory_space<vmem>>, vector<1x8x1xf32>
    %414 = vector.shape_cast %413 : vector<1x8x1xf32> to vector<8x1xf32>
    %415 = vector.extract_strided_slice %340 {offsets = [6, 0], sizes = [1, 256], strides = [1, 1]} : vector<16x256xf32> to vector<1x256xf32>
    %416 = vector.broadcast %414 : vector<8x1xf32> to vector<8x256xf32>
    %417 = vector.broadcast %415 : vector<1x256xf32> to vector<8x256xf32>
    %418 = arith.mulf %416, %417 : vector<8x256xf32>
    %419 = arith.addf %407, %418 : vector<8x256xf32>
    %420 = vector.extract_strided_slice %340 {offsets = [14, 0], sizes = [1, 256], strides = [1, 1]} : vector<16x256xf32> to vector<1x256xf32>
    %421 = vector.broadcast %414 : vector<8x1xf32> to vector<8x256xf32>
    %422 = vector.broadcast %420 : vector<1x256xf32> to vector<8x256xf32>
    %423 = arith.mulf %421, %422 : vector<8x256xf32>
    %424 = arith.addf %412, %423 : vector<8x256xf32>
    %c66 = arith.constant 66 : index
    %c0_76 = arith.constant 0 : index
    %c0_77 = arith.constant 0 : index
    %425 = vector.load %arg2[%c66, %c0_76, %c0_77] : memref<72x8x1xf32, #tpu.memory_space<vmem>>, vector<1x8x1xf32>
    %426 = vector.shape_cast %425 : vector<1x8x1xf32> to vector<8x1xf32>
    %427 = vector.extract_strided_slice %340 {offsets = [7, 0], sizes = [1, 256], strides = [1, 1]} : vector<16x256xf32> to vector<1x256xf32>
    %428 = vector.broadcast %426 : vector<8x1xf32> to vector<8x256xf32>
    %429 = vector.broadcast %427 : vector<1x256xf32> to vector<8x256xf32>
    %430 = arith.mulf %428, %429 : vector<8x256xf32>
    %431 = arith.addf %419, %430 : vector<8x256xf32>
    %432 = vector.extract_strided_slice %340 {offsets = [15, 0], sizes = [1, 256], strides = [1, 1]} : vector<16x256xf32> to vector<1x256xf32>
    %433 = vector.broadcast %426 : vector<8x1xf32> to vector<8x256xf32>
    %434 = vector.broadcast %432 : vector<1x256xf32> to vector<8x256xf32>
    %435 = arith.mulf %433, %434 : vector<8x256xf32>
    %436 = arith.addf %424, %435 : vector<8x256xf32>
    %437 = vector.extract_strided_slice %2 {offsets = [0, 128], sizes = [16, 256], strides = [1, 1]} : vector<16x512xf32> to vector<16x256xf32>
    %c4 = arith.constant 4 : index
    %c0_78 = arith.constant 0 : index
    %c0_79 = arith.constant 0 : index
    %438 = vector.load %arg2[%c4, %c0_78, %c0_79] : memref<72x8x1xf32, #tpu.memory_space<vmem>>, vector<1x8x1xf32>
    %439 = vector.shape_cast %438 : vector<1x8x1xf32> to vector<8x1xf32>
    %440 = vector.extract_strided_slice %437 {offsets = [0, 0], sizes = [1, 256], strides = [1, 1]} : vector<16x256xf32> to vector<1x256xf32>
    %441 = vector.broadcast %439 : vector<8x1xf32> to vector<8x256xf32>
    %442 = vector.broadcast %440 : vector<1x256xf32> to vector<8x256xf32>
    %443 = arith.mulf %441, %442 : vector<8x256xf32>
    %444 = arith.addf %431, %443 : vector<8x256xf32>
    %445 = vector.extract_strided_slice %437 {offsets = [8, 0], sizes = [1, 256], strides = [1, 1]} : vector<16x256xf32> to vector<1x256xf32>
    %446 = vector.broadcast %439 : vector<8x1xf32> to vector<8x256xf32>
    %447 = vector.broadcast %445 : vector<1x256xf32> to vector<8x256xf32>
    %448 = arith.mulf %446, %447 : vector<8x256xf32>
    %449 = arith.addf %436, %448 : vector<8x256xf32>
    %c13 = arith.constant 13 : index
    %c0_80 = arith.constant 0 : index
    %c0_81 = arith.constant 0 : index
    %450 = vector.load %arg2[%c13, %c0_80, %c0_81] : memref<72x8x1xf32, #tpu.memory_space<vmem>>, vector<1x8x1xf32>
    %451 = vector.shape_cast %450 : vector<1x8x1xf32> to vector<8x1xf32>
    %452 = vector.extract_strided_slice %437 {offsets = [1, 0], sizes = [1, 256], strides = [1, 1]} : vector<16x256xf32> to vector<1x256xf32>
    %453 = vector.broadcast %451 : vector<8x1xf32> to vector<8x256xf32>
    %454 = vector.broadcast %452 : vector<1x256xf32> to vector<8x256xf32>
    %455 = arith.mulf %453, %454 : vector<8x256xf32>
    %456 = arith.addf %444, %455 : vector<8x256xf32>
    %457 = vector.extract_strided_slice %437 {offsets = [9, 0], sizes = [1, 256], strides = [1, 1]} : vector<16x256xf32> to vector<1x256xf32>
    %458 = vector.broadcast %451 : vector<8x1xf32> to vector<8x256xf32>
    %459 = vector.broadcast %457 : vector<1x256xf32> to vector<8x256xf32>
    %460 = arith.mulf %458, %459 : vector<8x256xf32>
    %461 = arith.addf %449, %460 : vector<8x256xf32>
    %c22 = arith.constant 22 : index
    %c0_82 = arith.constant 0 : index
    %c0_83 = arith.constant 0 : index
    %462 = vector.load %arg2[%c22, %c0_82, %c0_83] : memref<72x8x1xf32, #tpu.memory_space<vmem>>, vector<1x8x1xf32>
    %463 = vector.shape_cast %462 : vector<1x8x1xf32> to vector<8x1xf32>
    %464 = vector.extract_strided_slice %437 {offsets = [2, 0], sizes = [1, 256], strides = [1, 1]} : vector<16x256xf32> to vector<1x256xf32>
    %465 = vector.broadcast %463 : vector<8x1xf32> to vector<8x256xf32>
    %466 = vector.broadcast %464 : vector<1x256xf32> to vector<8x256xf32>
    %467 = arith.mulf %465, %466 : vector<8x256xf32>
    %468 = arith.addf %456, %467 : vector<8x256xf32>
    %469 = vector.extract_strided_slice %437 {offsets = [10, 0], sizes = [1, 256], strides = [1, 1]} : vector<16x256xf32> to vector<1x256xf32>
    %470 = vector.broadcast %463 : vector<8x1xf32> to vector<8x256xf32>
    %471 = vector.broadcast %469 : vector<1x256xf32> to vector<8x256xf32>
    %472 = arith.mulf %470, %471 : vector<8x256xf32>
    %473 = arith.addf %461, %472 : vector<8x256xf32>
    %c31 = arith.constant 31 : index
    %c0_84 = arith.constant 0 : index
    %c0_85 = arith.constant 0 : index
    %474 = vector.load %arg2[%c31, %c0_84, %c0_85] : memref<72x8x1xf32, #tpu.memory_space<vmem>>, vector<1x8x1xf32>
    %475 = vector.shape_cast %474 : vector<1x8x1xf32> to vector<8x1xf32>
    %476 = vector.extract_strided_slice %437 {offsets = [3, 0], sizes = [1, 256], strides = [1, 1]} : vector<16x256xf32> to vector<1x256xf32>
    %477 = vector.broadcast %475 : vector<8x1xf32> to vector<8x256xf32>
    %478 = vector.broadcast %476 : vector<1x256xf32> to vector<8x256xf32>
    %479 = arith.mulf %477, %478 : vector<8x256xf32>
    %480 = arith.addf %468, %479 : vector<8x256xf32>
    %481 = vector.extract_strided_slice %437 {offsets = [11, 0], sizes = [1, 256], strides = [1, 1]} : vector<16x256xf32> to vector<1x256xf32>
    %482 = vector.broadcast %475 : vector<8x1xf32> to vector<8x256xf32>
    %483 = vector.broadcast %481 : vector<1x256xf32> to vector<8x256xf32>
    %484 = arith.mulf %482, %483 : vector<8x256xf32>
    %485 = arith.addf %473, %484 : vector<8x256xf32>
    %c40 = arith.constant 40 : index
    %c0_86 = arith.constant 0 : index
    %c0_87 = arith.constant 0 : index
    %486 = vector.load %arg2[%c40, %c0_86, %c0_87] : memref<72x8x1xf32, #tpu.memory_space<vmem>>, vector<1x8x1xf32>
    %487 = vector.shape_cast %486 : vector<1x8x1xf32> to vector<8x1xf32>
    %488 = vector.extract_strided_slice %437 {offsets = [4, 0], sizes = [1, 256], strides = [1, 1]} : vector<16x256xf32> to vector<1x256xf32>
    %489 = vector.broadcast %487 : vector<8x1xf32> to vector<8x256xf32>
    %490 = vector.broadcast %488 : vector<1x256xf32> to vector<8x256xf32>
    %491 = arith.mulf %489, %490 : vector<8x256xf32>
    %492 = arith.addf %480, %491 : vector<8x256xf32>
    %493 = vector.extract_strided_slice %437 {offsets = [12, 0], sizes = [1, 256], strides = [1, 1]} : vector<16x256xf32> to vector<1x256xf32>
    %494 = vector.broadcast %487 : vector<8x1xf32> to vector<8x256xf32>
    %495 = vector.broadcast %493 : vector<1x256xf32> to vector<8x256xf32>
    %496 = arith.mulf %494, %495 : vector<8x256xf32>
    %497 = arith.addf %485, %496 : vector<8x256xf32>
    %c49 = arith.constant 49 : index
    %c0_88 = arith.constant 0 : index
    %c0_89 = arith.constant 0 : index
    %498 = vector.load %arg2[%c49, %c0_88, %c0_89] : memref<72x8x1xf32, #tpu.memory_space<vmem>>, vector<1x8x1xf32>
    %499 = vector.shape_cast %498 : vector<1x8x1xf32> to vector<8x1xf32>
    %500 = vector.extract_strided_slice %437 {offsets = [5, 0], sizes = [1, 256], strides = [1, 1]} : vector<16x256xf32> to vector<1x256xf32>
    %501 = vector.broadcast %499 : vector<8x1xf32> to vector<8x256xf32>
    %502 = vector.broadcast %500 : vector<1x256xf32> to vector<8x256xf32>
    %503 = arith.mulf %501, %502 : vector<8x256xf32>
    %504 = arith.addf %492, %503 : vector<8x256xf32>
    %505 = vector.extract_strided_slice %437 {offsets = [13, 0], sizes = [1, 256], strides = [1, 1]} : vector<16x256xf32> to vector<1x256xf32>
    %506 = vector.broadcast %499 : vector<8x1xf32> to vector<8x256xf32>
    %507 = vector.broadcast %505 : vector<1x256xf32> to vector<8x256xf32>
    %508 = arith.mulf %506, %507 : vector<8x256xf32>
    %509 = arith.addf %497, %508 : vector<8x256xf32>
    %c58 = arith.constant 58 : index
    %c0_90 = arith.constant 0 : index
    %c0_91 = arith.constant 0 : index
    %510 = vector.load %arg2[%c58, %c0_90, %c0_91] : memref<72x8x1xf32, #tpu.memory_space<vmem>>, vector<1x8x1xf32>
    %511 = vector.shape_cast %510 : vector<1x8x1xf32> to vector<8x1xf32>
    %512 = vector.extract_strided_slice %437 {offsets = [6, 0], sizes = [1, 256], strides = [1, 1]} : vector<16x256xf32> to vector<1x256xf32>
    %513 = vector.broadcast %511 : vector<8x1xf32> to vector<8x256xf32>
    %514 = vector.broadcast %512 : vector<1x256xf32> to vector<8x256xf32>
    %515 = arith.mulf %513, %514 : vector<8x256xf32>
    %516 = arith.addf %504, %515 : vector<8x256xf32>
    %517 = vector.extract_strided_slice %437 {offsets = [14, 0], sizes = [1, 256], strides = [1, 1]} : vector<16x256xf32> to vector<1x256xf32>
    %518 = vector.broadcast %511 : vector<8x1xf32> to vector<8x256xf32>
    %519 = vector.broadcast %517 : vector<1x256xf32> to vector<8x256xf32>
    %520 = arith.mulf %518, %519 : vector<8x256xf32>
    %521 = arith.addf %509, %520 : vector<8x256xf32>
    %c67 = arith.constant 67 : index
    %c0_92 = arith.constant 0 : index
    %c0_93 = arith.constant 0 : index
    %522 = vector.load %arg2[%c67, %c0_92, %c0_93] : memref<72x8x1xf32, #tpu.memory_space<vmem>>, vector<1x8x1xf32>
    %523 = vector.shape_cast %522 : vector<1x8x1xf32> to vector<8x1xf32>
    %524 = vector.extract_strided_slice %437 {offsets = [7, 0], sizes = [1, 256], strides = [1, 1]} : vector<16x256xf32> to vector<1x256xf32>
    %525 = vector.broadcast %523 : vector<8x1xf32> to vector<8x256xf32>
    %526 = vector.broadcast %524 : vector<1x256xf32> to vector<8x256xf32>
    %527 = arith.mulf %525, %526 : vector<8x256xf32>
    %528 = arith.addf %516, %527 : vector<8x256xf32>
    %529 = vector.extract_strided_slice %437 {offsets = [15, 0], sizes = [1, 256], strides = [1, 1]} : vector<16x256xf32> to vector<1x256xf32>
    %530 = vector.broadcast %523 : vector<8x1xf32> to vector<8x256xf32>
    %531 = vector.broadcast %529 : vector<1x256xf32> to vector<8x256xf32>
    %532 = arith.mulf %530, %531 : vector<8x256xf32>
    %533 = arith.addf %521, %532 : vector<8x256xf32>
    %534 = vector.extract_strided_slice %2 {offsets = [0, 129], sizes = [16, 256], strides = [1, 1]} : vector<16x512xf32> to vector<16x256xf32>
    %c-1_i32_94 = arith.constant -1 : i32
    %535 = vector.broadcast %c-1_i32_94 : i32 to vector<1x256xi32>
    %536 = arith.cmpi sge, %19, %535 : vector<1x256xi32>
    %c14_i32_95 = arith.constant 14 : i32
    %537 = vector.broadcast %c14_i32_95 : i32 to vector<1x256xi32>
    %538 = arith.cmpi sle, %19, %537 : vector<1x256xi32>
    %539 = arith.andi %536, %538 : vector<1x256xi1>
    %cst_96 = arith.constant 0.000000e+00 : f32
    %540 = vector.shape_cast %539 : vector<1x256xi1> to vector<1x256xi1>
    %541 = vector.broadcast %540 : vector<1x256xi1> to vector<16x256xi1>
    %542 = vector.broadcast %cst_96 : f32 to vector<16x256xf32>
    %543 = arith.select %541, %534, %542 : vector<16x256xi1>, vector<16x256xf32>
    %c5 = arith.constant 5 : index
    %c0_97 = arith.constant 0 : index
    %c0_98 = arith.constant 0 : index
    %544 = vector.load %arg2[%c5, %c0_97, %c0_98] : memref<72x8x1xf32, #tpu.memory_space<vmem>>, vector<1x8x1xf32>
    %545 = vector.shape_cast %544 : vector<1x8x1xf32> to vector<8x1xf32>
    %546 = vector.extract_strided_slice %543 {offsets = [0, 0], sizes = [1, 256], strides = [1, 1]} : vector<16x256xf32> to vector<1x256xf32>
    %547 = vector.broadcast %545 : vector<8x1xf32> to vector<8x256xf32>
    %548 = vector.broadcast %546 : vector<1x256xf32> to vector<8x256xf32>
    %549 = arith.mulf %547, %548 : vector<8x256xf32>
    %550 = arith.addf %528, %549 : vector<8x256xf32>
    %551 = vector.extract_strided_slice %543 {offsets = [8, 0], sizes = [1, 256], strides = [1, 1]} : vector<16x256xf32> to vector<1x256xf32>
    %552 = vector.broadcast %545 : vector<8x1xf32> to vector<8x256xf32>
    %553 = vector.broadcast %551 : vector<1x256xf32> to vector<8x256xf32>
    %554 = arith.mulf %552, %553 : vector<8x256xf32>
    %555 = arith.addf %533, %554 : vector<8x256xf32>
    %c14 = arith.constant 14 : index
    %c0_99 = arith.constant 0 : index
    %c0_100 = arith.constant 0 : index
    %556 = vector.load %arg2[%c14, %c0_99, %c0_100] : memref<72x8x1xf32, #tpu.memory_space<vmem>>, vector<1x8x1xf32>
    %557 = vector.shape_cast %556 : vector<1x8x1xf32> to vector<8x1xf32>
    %558 = vector.extract_strided_slice %543 {offsets = [1, 0], sizes = [1, 256], strides = [1, 1]} : vector<16x256xf32> to vector<1x256xf32>
    %559 = vector.broadcast %557 : vector<8x1xf32> to vector<8x256xf32>
    %560 = vector.broadcast %558 : vector<1x256xf32> to vector<8x256xf32>
    %561 = arith.mulf %559, %560 : vector<8x256xf32>
    %562 = arith.addf %550, %561 : vector<8x256xf32>
    %563 = vector.extract_strided_slice %543 {offsets = [9, 0], sizes = [1, 256], strides = [1, 1]} : vector<16x256xf32> to vector<1x256xf32>
    %564 = vector.broadcast %557 : vector<8x1xf32> to vector<8x256xf32>
    %565 = vector.broadcast %563 : vector<1x256xf32> to vector<8x256xf32>
    %566 = arith.mulf %564, %565 : vector<8x256xf32>
    %567 = arith.addf %555, %566 : vector<8x256xf32>
    %c23 = arith.constant 23 : index
    %c0_101 = arith.constant 0 : index
    %c0_102 = arith.constant 0 : index
    %568 = vector.load %arg2[%c23, %c0_101, %c0_102] : memref<72x8x1xf32, #tpu.memory_space<vmem>>, vector<1x8x1xf32>
    %569 = vector.shape_cast %568 : vector<1x8x1xf32> to vector<8x1xf32>
    %570 = vector.extract_strided_slice %543 {offsets = [2, 0], sizes = [1, 256], strides = [1, 1]} : vector<16x256xf32> to vector<1x256xf32>
    %571 = vector.broadcast %569 : vector<8x1xf32> to vector<8x256xf32>
    %572 = vector.broadcast %570 : vector<1x256xf32> to vector<8x256xf32>
    %573 = arith.mulf %571, %572 : vector<8x256xf32>
    %574 = arith.addf %562, %573 : vector<8x256xf32>
    %575 = vector.extract_strided_slice %543 {offsets = [10, 0], sizes = [1, 256], strides = [1, 1]} : vector<16x256xf32> to vector<1x256xf32>
    %576 = vector.broadcast %569 : vector<8x1xf32> to vector<8x256xf32>
    %577 = vector.broadcast %575 : vector<1x256xf32> to vector<8x256xf32>
    %578 = arith.mulf %576, %577 : vector<8x256xf32>
    %579 = arith.addf %567, %578 : vector<8x256xf32>
    %c32 = arith.constant 32 : index
    %c0_103 = arith.constant 0 : index
    %c0_104 = arith.constant 0 : index
    %580 = vector.load %arg2[%c32, %c0_103, %c0_104] : memref<72x8x1xf32, #tpu.memory_space<vmem>>, vector<1x8x1xf32>
    %581 = vector.shape_cast %580 : vector<1x8x1xf32> to vector<8x1xf32>
    %582 = vector.extract_strided_slice %543 {offsets = [3, 0], sizes = [1, 256], strides = [1, 1]} : vector<16x256xf32> to vector<1x256xf32>
    %583 = vector.broadcast %581 : vector<8x1xf32> to vector<8x256xf32>
    %584 = vector.broadcast %582 : vector<1x256xf32> to vector<8x256xf32>
    %585 = arith.mulf %583, %584 : vector<8x256xf32>
    %586 = arith.addf %574, %585 : vector<8x256xf32>
    %587 = vector.extract_strided_slice %543 {offsets = [11, 0], sizes = [1, 256], strides = [1, 1]} : vector<16x256xf32> to vector<1x256xf32>
    %588 = vector.broadcast %581 : vector<8x1xf32> to vector<8x256xf32>
    %589 = vector.broadcast %587 : vector<1x256xf32> to vector<8x256xf32>
    %590 = arith.mulf %588, %589 : vector<8x256xf32>
    %591 = arith.addf %579, %590 : vector<8x256xf32>
    %c41 = arith.constant 41 : index
    %c0_105 = arith.constant 0 : index
    %c0_106 = arith.constant 0 : index
    %592 = vector.load %arg2[%c41, %c0_105, %c0_106] : memref<72x8x1xf32, #tpu.memory_space<vmem>>, vector<1x8x1xf32>
    %593 = vector.shape_cast %592 : vector<1x8x1xf32> to vector<8x1xf32>
    %594 = vector.extract_strided_slice %543 {offsets = [4, 0], sizes = [1, 256], strides = [1, 1]} : vector<16x256xf32> to vector<1x256xf32>
    %595 = vector.broadcast %593 : vector<8x1xf32> to vector<8x256xf32>
    %596 = vector.broadcast %594 : vector<1x256xf32> to vector<8x256xf32>
    %597 = arith.mulf %595, %596 : vector<8x256xf32>
    %598 = arith.addf %586, %597 : vector<8x256xf32>
    %599 = vector.extract_strided_slice %543 {offsets = [12, 0], sizes = [1, 256], strides = [1, 1]} : vector<16x256xf32> to vector<1x256xf32>
    %600 = vector.broadcast %593 : vector<8x1xf32> to vector<8x256xf32>
    %601 = vector.broadcast %599 : vector<1x256xf32> to vector<8x256xf32>
    %602 = arith.mulf %600, %601 : vector<8x256xf32>
    %603 = arith.addf %591, %602 : vector<8x256xf32>
    %c50 = arith.constant 50 : index
    %c0_107 = arith.constant 0 : index
    %c0_108 = arith.constant 0 : index
    %604 = vector.load %arg2[%c50, %c0_107, %c0_108] : memref<72x8x1xf32, #tpu.memory_space<vmem>>, vector<1x8x1xf32>
    %605 = vector.shape_cast %604 : vector<1x8x1xf32> to vector<8x1xf32>
    %606 = vector.extract_strided_slice %543 {offsets = [5, 0], sizes = [1, 256], strides = [1, 1]} : vector<16x256xf32> to vector<1x256xf32>
    %607 = vector.broadcast %605 : vector<8x1xf32> to vector<8x256xf32>
    %608 = vector.broadcast %606 : vector<1x256xf32> to vector<8x256xf32>
    %609 = arith.mulf %607, %608 : vector<8x256xf32>
    %610 = arith.addf %598, %609 : vector<8x256xf32>
    %611 = vector.extract_strided_slice %543 {offsets = [13, 0], sizes = [1, 256], strides = [1, 1]} : vector<16x256xf32> to vector<1x256xf32>
    %612 = vector.broadcast %605 : vector<8x1xf32> to vector<8x256xf32>
    %613 = vector.broadcast %611 : vector<1x256xf32> to vector<8x256xf32>
    %614 = arith.mulf %612, %613 : vector<8x256xf32>
    %615 = arith.addf %603, %614 : vector<8x256xf32>
    %c59 = arith.constant 59 : index
    %c0_109 = arith.constant 0 : index
    %c0_110 = arith.constant 0 : index
    %616 = vector.load %arg2[%c59, %c0_109, %c0_110] : memref<72x8x1xf32, #tpu.memory_space<vmem>>, vector<1x8x1xf32>
    %617 = vector.shape_cast %616 : vector<1x8x1xf32> to vector<8x1xf32>
    %618 = vector.extract_strided_slice %543 {offsets = [6, 0], sizes = [1, 256], strides = [1, 1]} : vector<16x256xf32> to vector<1x256xf32>
    %619 = vector.broadcast %617 : vector<8x1xf32> to vector<8x256xf32>
    %620 = vector.broadcast %618 : vector<1x256xf32> to vector<8x256xf32>
    %621 = arith.mulf %619, %620 : vector<8x256xf32>
    %622 = arith.addf %610, %621 : vector<8x256xf32>
    %623 = vector.extract_strided_slice %543 {offsets = [14, 0], sizes = [1, 256], strides = [1, 1]} : vector<16x256xf32> to vector<1x256xf32>
    %624 = vector.broadcast %617 : vector<8x1xf32> to vector<8x256xf32>
    %625 = vector.broadcast %623 : vector<1x256xf32> to vector<8x256xf32>
    %626 = arith.mulf %624, %625 : vector<8x256xf32>
    %627 = arith.addf %615, %626 : vector<8x256xf32>
    %c68 = arith.constant 68 : index
    %c0_111 = arith.constant 0 : index
    %c0_112 = arith.constant 0 : index
    %628 = vector.load %arg2[%c68, %c0_111, %c0_112] : memref<72x8x1xf32, #tpu.memory_space<vmem>>, vector<1x8x1xf32>
    %629 = vector.shape_cast %628 : vector<1x8x1xf32> to vector<8x1xf32>
    %630 = vector.extract_strided_slice %543 {offsets = [7, 0], sizes = [1, 256], strides = [1, 1]} : vector<16x256xf32> to vector<1x256xf32>
    %631 = vector.broadcast %629 : vector<8x1xf32> to vector<8x256xf32>
    %632 = vector.broadcast %630 : vector<1x256xf32> to vector<8x256xf32>
    %633 = arith.mulf %631, %632 : vector<8x256xf32>
    %634 = arith.addf %622, %633 : vector<8x256xf32>
    %635 = vector.extract_strided_slice %543 {offsets = [15, 0], sizes = [1, 256], strides = [1, 1]} : vector<16x256xf32> to vector<1x256xf32>
    %636 = vector.broadcast %629 : vector<8x1xf32> to vector<8x256xf32>
    %637 = vector.broadcast %635 : vector<1x256xf32> to vector<8x256xf32>
    %638 = arith.mulf %636, %637 : vector<8x256xf32>
    %639 = arith.addf %627, %638 : vector<8x256xf32>
    %640 = vector.extract_strided_slice %2 {offsets = [0, 143], sizes = [16, 256], strides = [1, 1]} : vector<16x512xf32> to vector<16x256xf32>
    %c1_i32_113 = arith.constant 1 : i32
    %641 = vector.broadcast %c1_i32_113 : i32 to vector<1x256xi32>
    %642 = arith.cmpi sge, %19, %641 : vector<1x256xi32>
    %c16_i32_114 = arith.constant 16 : i32
    %643 = vector.broadcast %c16_i32_114 : i32 to vector<1x256xi32>
    %644 = arith.cmpi sle, %19, %643 : vector<1x256xi32>
    %645 = arith.andi %642, %644 : vector<1x256xi1>
    %cst_115 = arith.constant 0.000000e+00 : f32
    %646 = vector.shape_cast %645 : vector<1x256xi1> to vector<1x256xi1>
    %647 = vector.broadcast %646 : vector<1x256xi1> to vector<16x256xi1>
    %648 = vector.broadcast %cst_115 : f32 to vector<16x256xf32>
    %649 = arith.select %647, %640, %648 : vector<16x256xi1>, vector<16x256xf32>
    %c6 = arith.constant 6 : index
    %c0_116 = arith.constant 0 : index
    %c0_117 = arith.constant 0 : index
    %650 = vector.load %arg2[%c6, %c0_116, %c0_117] : memref<72x8x1xf32, #tpu.memory_space<vmem>>, vector<1x8x1xf32>
    %651 = vector.shape_cast %650 : vector<1x8x1xf32> to vector<8x1xf32>
    %652 = vector.extract_strided_slice %649 {offsets = [0, 0], sizes = [1, 256], strides = [1, 1]} : vector<16x256xf32> to vector<1x256xf32>
    %653 = vector.broadcast %651 : vector<8x1xf32> to vector<8x256xf32>
    %654 = vector.broadcast %652 : vector<1x256xf32> to vector<8x256xf32>
    %655 = arith.mulf %653, %654 : vector<8x256xf32>
    %656 = arith.addf %634, %655 : vector<8x256xf32>
    %657 = vector.extract_strided_slice %649 {offsets = [8, 0], sizes = [1, 256], strides = [1, 1]} : vector<16x256xf32> to vector<1x256xf32>
    %658 = vector.broadcast %651 : vector<8x1xf32> to vector<8x256xf32>
    %659 = vector.broadcast %657 : vector<1x256xf32> to vector<8x256xf32>
    %660 = arith.mulf %658, %659 : vector<8x256xf32>
    %661 = arith.addf %639, %660 : vector<8x256xf32>
    %c15 = arith.constant 15 : index
    %c0_118 = arith.constant 0 : index
    %c0_119 = arith.constant 0 : index
    %662 = vector.load %arg2[%c15, %c0_118, %c0_119] : memref<72x8x1xf32, #tpu.memory_space<vmem>>, vector<1x8x1xf32>
    %663 = vector.shape_cast %662 : vector<1x8x1xf32> to vector<8x1xf32>
    %664 = vector.extract_strided_slice %649 {offsets = [1, 0], sizes = [1, 256], strides = [1, 1]} : vector<16x256xf32> to vector<1x256xf32>
    %665 = vector.broadcast %663 : vector<8x1xf32> to vector<8x256xf32>
    %666 = vector.broadcast %664 : vector<1x256xf32> to vector<8x256xf32>
    %667 = arith.mulf %665, %666 : vector<8x256xf32>
    %668 = arith.addf %656, %667 : vector<8x256xf32>
    %669 = vector.extract_strided_slice %649 {offsets = [9, 0], sizes = [1, 256], strides = [1, 1]} : vector<16x256xf32> to vector<1x256xf32>
    %670 = vector.broadcast %663 : vector<8x1xf32> to vector<8x256xf32>
    %671 = vector.broadcast %669 : vector<1x256xf32> to vector<8x256xf32>
    %672 = arith.mulf %670, %671 : vector<8x256xf32>
    %673 = arith.addf %661, %672 : vector<8x256xf32>
    %c24 = arith.constant 24 : index
    %c0_120 = arith.constant 0 : index
    %c0_121 = arith.constant 0 : index
    %674 = vector.load %arg2[%c24, %c0_120, %c0_121] : memref<72x8x1xf32, #tpu.memory_space<vmem>>, vector<1x8x1xf32>
    %675 = vector.shape_cast %674 : vector<1x8x1xf32> to vector<8x1xf32>
    %676 = vector.extract_strided_slice %649 {offsets = [2, 0], sizes = [1, 256], strides = [1, 1]} : vector<16x256xf32> to vector<1x256xf32>
    %677 = vector.broadcast %675 : vector<8x1xf32> to vector<8x256xf32>
    %678 = vector.broadcast %676 : vector<1x256xf32> to vector<8x256xf32>
    %679 = arith.mulf %677, %678 : vector<8x256xf32>
    %680 = arith.addf %668, %679 : vector<8x256xf32>
    %681 = vector.extract_strided_slice %649 {offsets = [10, 0], sizes = [1, 256], strides = [1, 1]} : vector<16x256xf32> to vector<1x256xf32>
    %682 = vector.broadcast %675 : vector<8x1xf32> to vector<8x256xf32>
    %683 = vector.broadcast %681 : vector<1x256xf32> to vector<8x256xf32>
    %684 = arith.mulf %682, %683 : vector<8x256xf32>
    %685 = arith.addf %673, %684 : vector<8x256xf32>
    %c33 = arith.constant 33 : index
    %c0_122 = arith.constant 0 : index
    %c0_123 = arith.constant 0 : index
    %686 = vector.load %arg2[%c33, %c0_122, %c0_123] : memref<72x8x1xf32, #tpu.memory_space<vmem>>, vector<1x8x1xf32>
    %687 = vector.shape_cast %686 : vector<1x8x1xf32> to vector<8x1xf32>
    %688 = vector.extract_strided_slice %649 {offsets = [3, 0], sizes = [1, 256], strides = [1, 1]} : vector<16x256xf32> to vector<1x256xf32>
    %689 = vector.broadcast %687 : vector<8x1xf32> to vector<8x256xf32>
    %690 = vector.broadcast %688 : vector<1x256xf32> to vector<8x256xf32>
    %691 = arith.mulf %689, %690 : vector<8x256xf32>
    %692 = arith.addf %680, %691 : vector<8x256xf32>
    %693 = vector.extract_strided_slice %649 {offsets = [11, 0], sizes = [1, 256], strides = [1, 1]} : vector<16x256xf32> to vector<1x256xf32>
    %694 = vector.broadcast %687 : vector<8x1xf32> to vector<8x256xf32>
    %695 = vector.broadcast %693 : vector<1x256xf32> to vector<8x256xf32>
    %696 = arith.mulf %694, %695 : vector<8x256xf32>
    %697 = arith.addf %685, %696 : vector<8x256xf32>
    %c42 = arith.constant 42 : index
    %c0_124 = arith.constant 0 : index
    %c0_125 = arith.constant 0 : index
    %698 = vector.load %arg2[%c42, %c0_124, %c0_125] : memref<72x8x1xf32, #tpu.memory_space<vmem>>, vector<1x8x1xf32>
    %699 = vector.shape_cast %698 : vector<1x8x1xf32> to vector<8x1xf32>
    %700 = vector.extract_strided_slice %649 {offsets = [4, 0], sizes = [1, 256], strides = [1, 1]} : vector<16x256xf32> to vector<1x256xf32>
    %701 = vector.broadcast %699 : vector<8x1xf32> to vector<8x256xf32>
    %702 = vector.broadcast %700 : vector<1x256xf32> to vector<8x256xf32>
    %703 = arith.mulf %701, %702 : vector<8x256xf32>
    %704 = arith.addf %692, %703 : vector<8x256xf32>
    %705 = vector.extract_strided_slice %649 {offsets = [12, 0], sizes = [1, 256], strides = [1, 1]} : vector<16x256xf32> to vector<1x256xf32>
    %706 = vector.broadcast %699 : vector<8x1xf32> to vector<8x256xf32>
    %707 = vector.broadcast %705 : vector<1x256xf32> to vector<8x256xf32>
    %708 = arith.mulf %706, %707 : vector<8x256xf32>
    %709 = arith.addf %697, %708 : vector<8x256xf32>
    %c51 = arith.constant 51 : index
    %c0_126 = arith.constant 0 : index
    %c0_127 = arith.constant 0 : index
    %710 = vector.load %arg2[%c51, %c0_126, %c0_127] : memref<72x8x1xf32, #tpu.memory_space<vmem>>, vector<1x8x1xf32>
    %711 = vector.shape_cast %710 : vector<1x8x1xf32> to vector<8x1xf32>
    %712 = vector.extract_strided_slice %649 {offsets = [5, 0], sizes = [1, 256], strides = [1, 1]} : vector<16x256xf32> to vector<1x256xf32>
    %713 = vector.broadcast %711 : vector<8x1xf32> to vector<8x256xf32>
    %714 = vector.broadcast %712 : vector<1x256xf32> to vector<8x256xf32>
    %715 = arith.mulf %713, %714 : vector<8x256xf32>
    %716 = arith.addf %704, %715 : vector<8x256xf32>
    %717 = vector.extract_strided_slice %649 {offsets = [13, 0], sizes = [1, 256], strides = [1, 1]} : vector<16x256xf32> to vector<1x256xf32>
    %718 = vector.broadcast %711 : vector<8x1xf32> to vector<8x256xf32>
    %719 = vector.broadcast %717 : vector<1x256xf32> to vector<8x256xf32>
    %720 = arith.mulf %718, %719 : vector<8x256xf32>
    %721 = arith.addf %709, %720 : vector<8x256xf32>
    %c60 = arith.constant 60 : index
    %c0_128 = arith.constant 0 : index
    %c0_129 = arith.constant 0 : index
    %722 = vector.load %arg2[%c60, %c0_128, %c0_129] : memref<72x8x1xf32, #tpu.memory_space<vmem>>, vector<1x8x1xf32>
    %723 = vector.shape_cast %722 : vector<1x8x1xf32> to vector<8x1xf32>
    %724 = vector.extract_strided_slice %649 {offsets = [6, 0], sizes = [1, 256], strides = [1, 1]} : vector<16x256xf32> to vector<1x256xf32>
    %725 = vector.broadcast %723 : vector<8x1xf32> to vector<8x256xf32>
    %726 = vector.broadcast %724 : vector<1x256xf32> to vector<8x256xf32>
    %727 = arith.mulf %725, %726 : vector<8x256xf32>
    %728 = arith.addf %716, %727 : vector<8x256xf32>
    %729 = vector.extract_strided_slice %649 {offsets = [14, 0], sizes = [1, 256], strides = [1, 1]} : vector<16x256xf32> to vector<1x256xf32>
    %730 = vector.broadcast %723 : vector<8x1xf32> to vector<8x256xf32>
    %731 = vector.broadcast %729 : vector<1x256xf32> to vector<8x256xf32>
    %732 = arith.mulf %730, %731 : vector<8x256xf32>
    %733 = arith.addf %721, %732 : vector<8x256xf32>
    %c69 = arith.constant 69 : index
    %c0_130 = arith.constant 0 : index
    %c0_131 = arith.constant 0 : index
    %734 = vector.load %arg2[%c69, %c0_130, %c0_131] : memref<72x8x1xf32, #tpu.memory_space<vmem>>, vector<1x8x1xf32>
    %735 = vector.shape_cast %734 : vector<1x8x1xf32> to vector<8x1xf32>
    %736 = vector.extract_strided_slice %649 {offsets = [7, 0], sizes = [1, 256], strides = [1, 1]} : vector<16x256xf32> to vector<1x256xf32>
    %737 = vector.broadcast %735 : vector<8x1xf32> to vector<8x256xf32>
    %738 = vector.broadcast %736 : vector<1x256xf32> to vector<8x256xf32>
    %739 = arith.mulf %737, %738 : vector<8x256xf32>
    %740 = arith.addf %728, %739 : vector<8x256xf32>
    %741 = vector.extract_strided_slice %649 {offsets = [15, 0], sizes = [1, 256], strides = [1, 1]} : vector<16x256xf32> to vector<1x256xf32>
    %742 = vector.broadcast %735 : vector<8x1xf32> to vector<8x256xf32>
    %743 = vector.broadcast %741 : vector<1x256xf32> to vector<8x256xf32>
    %744 = arith.mulf %742, %743 : vector<8x256xf32>
    %745 = arith.addf %733, %744 : vector<8x256xf32>
    %746 = vector.extract_strided_slice %2 {offsets = [0, 144], sizes = [16, 256], strides = [1, 1]} : vector<16x512xf32> to vector<16x256xf32>
    %c7 = arith.constant 7 : index
    %c0_132 = arith.constant 0 : index
    %c0_133 = arith.constant 0 : index
    %747 = vector.load %arg2[%c7, %c0_132, %c0_133] : memref<72x8x1xf32, #tpu.memory_space<vmem>>, vector<1x8x1xf32>
    %748 = vector.shape_cast %747 : vector<1x8x1xf32> to vector<8x1xf32>
    %749 = vector.extract_strided_slice %746 {offsets = [0, 0], sizes = [1, 256], strides = [1, 1]} : vector<16x256xf32> to vector<1x256xf32>
    %750 = vector.broadcast %748 : vector<8x1xf32> to vector<8x256xf32>
    %751 = vector.broadcast %749 : vector<1x256xf32> to vector<8x256xf32>
    %752 = arith.mulf %750, %751 : vector<8x256xf32>
    %753 = arith.addf %740, %752 : vector<8x256xf32>
    %754 = vector.extract_strided_slice %746 {offsets = [8, 0], sizes = [1, 256], strides = [1, 1]} : vector<16x256xf32> to vector<1x256xf32>
    %755 = vector.broadcast %748 : vector<8x1xf32> to vector<8x256xf32>
    %756 = vector.broadcast %754 : vector<1x256xf32> to vector<8x256xf32>
    %757 = arith.mulf %755, %756 : vector<8x256xf32>
    %758 = arith.addf %745, %757 : vector<8x256xf32>
    %c16 = arith.constant 16 : index
    %c0_134 = arith.constant 0 : index
    %c0_135 = arith.constant 0 : index
    %759 = vector.load %arg2[%c16, %c0_134, %c0_135] : memref<72x8x1xf32, #tpu.memory_space<vmem>>, vector<1x8x1xf32>
    %760 = vector.shape_cast %759 : vector<1x8x1xf32> to vector<8x1xf32>
    %761 = vector.extract_strided_slice %746 {offsets = [1, 0], sizes = [1, 256], strides = [1, 1]} : vector<16x256xf32> to vector<1x256xf32>
    %762 = vector.broadcast %760 : vector<8x1xf32> to vector<8x256xf32>
    %763 = vector.broadcast %761 : vector<1x256xf32> to vector<8x256xf32>
    %764 = arith.mulf %762, %763 : vector<8x256xf32>
    %765 = arith.addf %753, %764 : vector<8x256xf32>
    %766 = vector.extract_strided_slice %746 {offsets = [9, 0], sizes = [1, 256], strides = [1, 1]} : vector<16x256xf32> to vector<1x256xf32>
    %767 = vector.broadcast %760 : vector<8x1xf32> to vector<8x256xf32>
    %768 = vector.broadcast %766 : vector<1x256xf32> to vector<8x256xf32>
    %769 = arith.mulf %767, %768 : vector<8x256xf32>
    %770 = arith.addf %758, %769 : vector<8x256xf32>
    %c25 = arith.constant 25 : index
    %c0_136 = arith.constant 0 : index
    %c0_137 = arith.constant 0 : index
    %771 = vector.load %arg2[%c25, %c0_136, %c0_137] : memref<72x8x1xf32, #tpu.memory_space<vmem>>, vector<1x8x1xf32>
    %772 = vector.shape_cast %771 : vector<1x8x1xf32> to vector<8x1xf32>
    %773 = vector.extract_strided_slice %746 {offsets = [2, 0], sizes = [1, 256], strides = [1, 1]} : vector<16x256xf32> to vector<1x256xf32>
    %774 = vector.broadcast %772 : vector<8x1xf32> to vector<8x256xf32>
    %775 = vector.broadcast %773 : vector<1x256xf32> to vector<8x256xf32>
    %776 = arith.mulf %774, %775 : vector<8x256xf32>
    %777 = arith.addf %765, %776 : vector<8x256xf32>
    %778 = vector.extract_strided_slice %746 {offsets = [10, 0], sizes = [1, 256], strides = [1, 1]} : vector<16x256xf32> to vector<1x256xf32>
    %779 = vector.broadcast %772 : vector<8x1xf32> to vector<8x256xf32>
    %780 = vector.broadcast %778 : vector<1x256xf32> to vector<8x256xf32>
    %781 = arith.mulf %779, %780 : vector<8x256xf32>
    %782 = arith.addf %770, %781 : vector<8x256xf32>
    %c34 = arith.constant 34 : index
    %c0_138 = arith.constant 0 : index
    %c0_139 = arith.constant 0 : index
    %783 = vector.load %arg2[%c34, %c0_138, %c0_139] : memref<72x8x1xf32, #tpu.memory_space<vmem>>, vector<1x8x1xf32>
    %784 = vector.shape_cast %783 : vector<1x8x1xf32> to vector<8x1xf32>
    %785 = vector.extract_strided_slice %746 {offsets = [3, 0], sizes = [1, 256], strides = [1, 1]} : vector<16x256xf32> to vector<1x256xf32>
    %786 = vector.broadcast %784 : vector<8x1xf32> to vector<8x256xf32>
    %787 = vector.broadcast %785 : vector<1x256xf32> to vector<8x256xf32>
    %788 = arith.mulf %786, %787 : vector<8x256xf32>
    %789 = arith.addf %777, %788 : vector<8x256xf32>
    %790 = vector.extract_strided_slice %746 {offsets = [11, 0], sizes = [1, 256], strides = [1, 1]} : vector<16x256xf32> to vector<1x256xf32>
    %791 = vector.broadcast %784 : vector<8x1xf32> to vector<8x256xf32>
    %792 = vector.broadcast %790 : vector<1x256xf32> to vector<8x256xf32>
    %793 = arith.mulf %791, %792 : vector<8x256xf32>
    %794 = arith.addf %782, %793 : vector<8x256xf32>
    %c43 = arith.constant 43 : index
    %c0_140 = arith.constant 0 : index
    %c0_141 = arith.constant 0 : index
    %795 = vector.load %arg2[%c43, %c0_140, %c0_141] : memref<72x8x1xf32, #tpu.memory_space<vmem>>, vector<1x8x1xf32>
    %796 = vector.shape_cast %795 : vector<1x8x1xf32> to vector<8x1xf32>
    %797 = vector.extract_strided_slice %746 {offsets = [4, 0], sizes = [1, 256], strides = [1, 1]} : vector<16x256xf32> to vector<1x256xf32>
    %798 = vector.broadcast %796 : vector<8x1xf32> to vector<8x256xf32>
    %799 = vector.broadcast %797 : vector<1x256xf32> to vector<8x256xf32>
    %800 = arith.mulf %798, %799 : vector<8x256xf32>
    %801 = arith.addf %789, %800 : vector<8x256xf32>
    %802 = vector.extract_strided_slice %746 {offsets = [12, 0], sizes = [1, 256], strides = [1, 1]} : vector<16x256xf32> to vector<1x256xf32>
    %803 = vector.broadcast %796 : vector<8x1xf32> to vector<8x256xf32>
    %804 = vector.broadcast %802 : vector<1x256xf32> to vector<8x256xf32>
    %805 = arith.mulf %803, %804 : vector<8x256xf32>
    %806 = arith.addf %794, %805 : vector<8x256xf32>
    %c52 = arith.constant 52 : index
    %c0_142 = arith.constant 0 : index
    %c0_143 = arith.constant 0 : index
    %807 = vector.load %arg2[%c52, %c0_142, %c0_143] : memref<72x8x1xf32, #tpu.memory_space<vmem>>, vector<1x8x1xf32>
    %808 = vector.shape_cast %807 : vector<1x8x1xf32> to vector<8x1xf32>
    %809 = vector.extract_strided_slice %746 {offsets = [5, 0], sizes = [1, 256], strides = [1, 1]} : vector<16x256xf32> to vector<1x256xf32>
    %810 = vector.broadcast %808 : vector<8x1xf32> to vector<8x256xf32>
    %811 = vector.broadcast %809 : vector<1x256xf32> to vector<8x256xf32>
    %812 = arith.mulf %810, %811 : vector<8x256xf32>
    %813 = arith.addf %801, %812 : vector<8x256xf32>
    %814 = vector.extract_strided_slice %746 {offsets = [13, 0], sizes = [1, 256], strides = [1, 1]} : vector<16x256xf32> to vector<1x256xf32>
    %815 = vector.broadcast %808 : vector<8x1xf32> to vector<8x256xf32>
    %816 = vector.broadcast %814 : vector<1x256xf32> to vector<8x256xf32>
    %817 = arith.mulf %815, %816 : vector<8x256xf32>
    %818 = arith.addf %806, %817 : vector<8x256xf32>
    %c61 = arith.constant 61 : index
    %c0_144 = arith.constant 0 : index
    %c0_145 = arith.constant 0 : index
    %819 = vector.load %arg2[%c61, %c0_144, %c0_145] : memref<72x8x1xf32, #tpu.memory_space<vmem>>, vector<1x8x1xf32>
    %820 = vector.shape_cast %819 : vector<1x8x1xf32> to vector<8x1xf32>
    %821 = vector.extract_strided_slice %746 {offsets = [6, 0], sizes = [1, 256], strides = [1, 1]} : vector<16x256xf32> to vector<1x256xf32>
    %822 = vector.broadcast %820 : vector<8x1xf32> to vector<8x256xf32>
    %823 = vector.broadcast %821 : vector<1x256xf32> to vector<8x256xf32>
    %824 = arith.mulf %822, %823 : vector<8x256xf32>
    %825 = arith.addf %813, %824 : vector<8x256xf32>
    %826 = vector.extract_strided_slice %746 {offsets = [14, 0], sizes = [1, 256], strides = [1, 1]} : vector<16x256xf32> to vector<1x256xf32>
    %827 = vector.broadcast %820 : vector<8x1xf32> to vector<8x256xf32>
    %828 = vector.broadcast %826 : vector<1x256xf32> to vector<8x256xf32>
    %829 = arith.mulf %827, %828 : vector<8x256xf32>
    %830 = arith.addf %818, %829 : vector<8x256xf32>
    %c70 = arith.constant 70 : index
    %c0_146 = arith.constant 0 : index
    %c0_147 = arith.constant 0 : index
    %831 = vector.load %arg2[%c70, %c0_146, %c0_147] : memref<72x8x1xf32, #tpu.memory_space<vmem>>, vector<1x8x1xf32>
    %832 = vector.shape_cast %831 : vector<1x8x1xf32> to vector<8x1xf32>
    %833 = vector.extract_strided_slice %746 {offsets = [7, 0], sizes = [1, 256], strides = [1, 1]} : vector<16x256xf32> to vector<1x256xf32>
    %834 = vector.broadcast %832 : vector<8x1xf32> to vector<8x256xf32>
    %835 = vector.broadcast %833 : vector<1x256xf32> to vector<8x256xf32>
    %836 = arith.mulf %834, %835 : vector<8x256xf32>
    %837 = arith.addf %825, %836 : vector<8x256xf32>
    %838 = vector.extract_strided_slice %746 {offsets = [15, 0], sizes = [1, 256], strides = [1, 1]} : vector<16x256xf32> to vector<1x256xf32>
    %839 = vector.broadcast %832 : vector<8x1xf32> to vector<8x256xf32>
    %840 = vector.broadcast %838 : vector<1x256xf32> to vector<8x256xf32>
    %841 = arith.mulf %839, %840 : vector<8x256xf32>
    %842 = arith.addf %830, %841 : vector<8x256xf32>
    %843 = vector.extract_strided_slice %2 {offsets = [0, 145], sizes = [16, 256], strides = [1, 1]} : vector<16x512xf32> to vector<16x256xf32>
    %c-1_i32_148 = arith.constant -1 : i32
    %844 = vector.broadcast %c-1_i32_148 : i32 to vector<1x256xi32>
    %845 = arith.cmpi sge, %19, %844 : vector<1x256xi32>
    %c14_i32_149 = arith.constant 14 : i32
    %846 = vector.broadcast %c14_i32_149 : i32 to vector<1x256xi32>
    %847 = arith.cmpi sle, %19, %846 : vector<1x256xi32>
    %848 = arith.andi %845, %847 : vector<1x256xi1>
    %cst_150 = arith.constant 0.000000e+00 : f32
    %849 = vector.shape_cast %848 : vector<1x256xi1> to vector<1x256xi1>
    %850 = vector.broadcast %849 : vector<1x256xi1> to vector<16x256xi1>
    %851 = vector.broadcast %cst_150 : f32 to vector<16x256xf32>
    %852 = arith.select %850, %843, %851 : vector<16x256xi1>, vector<16x256xf32>
    %c8 = arith.constant 8 : index
    %c0_151 = arith.constant 0 : index
    %c0_152 = arith.constant 0 : index
    %853 = vector.load %arg2[%c8, %c0_151, %c0_152] : memref<72x8x1xf32, #tpu.memory_space<vmem>>, vector<1x8x1xf32>
    %854 = vector.shape_cast %853 : vector<1x8x1xf32> to vector<8x1xf32>
    %855 = vector.extract_strided_slice %852 {offsets = [0, 0], sizes = [1, 256], strides = [1, 1]} : vector<16x256xf32> to vector<1x256xf32>
    %856 = vector.broadcast %854 : vector<8x1xf32> to vector<8x256xf32>
    %857 = vector.broadcast %855 : vector<1x256xf32> to vector<8x256xf32>
    %858 = arith.mulf %856, %857 : vector<8x256xf32>
    %859 = arith.addf %837, %858 : vector<8x256xf32>
    %860 = vector.extract_strided_slice %852 {offsets = [8, 0], sizes = [1, 256], strides = [1, 1]} : vector<16x256xf32> to vector<1x256xf32>
    %861 = vector.broadcast %854 : vector<8x1xf32> to vector<8x256xf32>
    %862 = vector.broadcast %860 : vector<1x256xf32> to vector<8x256xf32>
    %863 = arith.mulf %861, %862 : vector<8x256xf32>
    %864 = arith.addf %842, %863 : vector<8x256xf32>
    %c17 = arith.constant 17 : index
    %c0_153 = arith.constant 0 : index
    %c0_154 = arith.constant 0 : index
    %865 = vector.load %arg2[%c17, %c0_153, %c0_154] : memref<72x8x1xf32, #tpu.memory_space<vmem>>, vector<1x8x1xf32>
    %866 = vector.shape_cast %865 : vector<1x8x1xf32> to vector<8x1xf32>
    %867 = vector.extract_strided_slice %852 {offsets = [1, 0], sizes = [1, 256], strides = [1, 1]} : vector<16x256xf32> to vector<1x256xf32>
    %868 = vector.broadcast %866 : vector<8x1xf32> to vector<8x256xf32>
    %869 = vector.broadcast %867 : vector<1x256xf32> to vector<8x256xf32>
    %870 = arith.mulf %868, %869 : vector<8x256xf32>
    %871 = arith.addf %859, %870 : vector<8x256xf32>
    %872 = vector.extract_strided_slice %852 {offsets = [9, 0], sizes = [1, 256], strides = [1, 1]} : vector<16x256xf32> to vector<1x256xf32>
    %873 = vector.broadcast %866 : vector<8x1xf32> to vector<8x256xf32>
    %874 = vector.broadcast %872 : vector<1x256xf32> to vector<8x256xf32>
    %875 = arith.mulf %873, %874 : vector<8x256xf32>
    %876 = arith.addf %864, %875 : vector<8x256xf32>
    %c26 = arith.constant 26 : index
    %c0_155 = arith.constant 0 : index
    %c0_156 = arith.constant 0 : index
    %877 = vector.load %arg2[%c26, %c0_155, %c0_156] : memref<72x8x1xf32, #tpu.memory_space<vmem>>, vector<1x8x1xf32>
    %878 = vector.shape_cast %877 : vector<1x8x1xf32> to vector<8x1xf32>
    %879 = vector.extract_strided_slice %852 {offsets = [2, 0], sizes = [1, 256], strides = [1, 1]} : vector<16x256xf32> to vector<1x256xf32>
    %880 = vector.broadcast %878 : vector<8x1xf32> to vector<8x256xf32>
    %881 = vector.broadcast %879 : vector<1x256xf32> to vector<8x256xf32>
    %882 = arith.mulf %880, %881 : vector<8x256xf32>
    %883 = arith.addf %871, %882 : vector<8x256xf32>
    %884 = vector.extract_strided_slice %852 {offsets = [10, 0], sizes = [1, 256], strides = [1, 1]} : vector<16x256xf32> to vector<1x256xf32>
    %885 = vector.broadcast %878 : vector<8x1xf32> to vector<8x256xf32>
    %886 = vector.broadcast %884 : vector<1x256xf32> to vector<8x256xf32>
    %887 = arith.mulf %885, %886 : vector<8x256xf32>
    %888 = arith.addf %876, %887 : vector<8x256xf32>
    %c35 = arith.constant 35 : index
    %c0_157 = arith.constant 0 : index
    %c0_158 = arith.constant 0 : index
    %889 = vector.load %arg2[%c35, %c0_157, %c0_158] : memref<72x8x1xf32, #tpu.memory_space<vmem>>, vector<1x8x1xf32>
    %890 = vector.shape_cast %889 : vector<1x8x1xf32> to vector<8x1xf32>
    %891 = vector.extract_strided_slice %852 {offsets = [3, 0], sizes = [1, 256], strides = [1, 1]} : vector<16x256xf32> to vector<1x256xf32>
    %892 = vector.broadcast %890 : vector<8x1xf32> to vector<8x256xf32>
    %893 = vector.broadcast %891 : vector<1x256xf32> to vector<8x256xf32>
    %894 = arith.mulf %892, %893 : vector<8x256xf32>
    %895 = arith.addf %883, %894 : vector<8x256xf32>
    %896 = vector.extract_strided_slice %852 {offsets = [11, 0], sizes = [1, 256], strides = [1, 1]} : vector<16x256xf32> to vector<1x256xf32>
    %897 = vector.broadcast %890 : vector<8x1xf32> to vector<8x256xf32>
    %898 = vector.broadcast %896 : vector<1x256xf32> to vector<8x256xf32>
    %899 = arith.mulf %897, %898 : vector<8x256xf32>
    %900 = arith.addf %888, %899 : vector<8x256xf32>
    %c44 = arith.constant 44 : index
    %c0_159 = arith.constant 0 : index
    %c0_160 = arith.constant 0 : index
    %901 = vector.load %arg2[%c44, %c0_159, %c0_160] : memref<72x8x1xf32, #tpu.memory_space<vmem>>, vector<1x8x1xf32>
    %902 = vector.shape_cast %901 : vector<1x8x1xf32> to vector<8x1xf32>
    %903 = vector.extract_strided_slice %852 {offsets = [4, 0], sizes = [1, 256], strides = [1, 1]} : vector<16x256xf32> to vector<1x256xf32>
    %904 = vector.broadcast %902 : vector<8x1xf32> to vector<8x256xf32>
    %905 = vector.broadcast %903 : vector<1x256xf32> to vector<8x256xf32>
    %906 = arith.mulf %904, %905 : vector<8x256xf32>
    %907 = arith.addf %895, %906 : vector<8x256xf32>
    %908 = vector.extract_strided_slice %852 {offsets = [12, 0], sizes = [1, 256], strides = [1, 1]} : vector<16x256xf32> to vector<1x256xf32>
    %909 = vector.broadcast %902 : vector<8x1xf32> to vector<8x256xf32>
    %910 = vector.broadcast %908 : vector<1x256xf32> to vector<8x256xf32>
    %911 = arith.mulf %909, %910 : vector<8x256xf32>
    %912 = arith.addf %900, %911 : vector<8x256xf32>
    %c53 = arith.constant 53 : index
    %c0_161 = arith.constant 0 : index
    %c0_162 = arith.constant 0 : index
    %913 = vector.load %arg2[%c53, %c0_161, %c0_162] : memref<72x8x1xf32, #tpu.memory_space<vmem>>, vector<1x8x1xf32>
    %914 = vector.shape_cast %913 : vector<1x8x1xf32> to vector<8x1xf32>
    %915 = vector.extract_strided_slice %852 {offsets = [5, 0], sizes = [1, 256], strides = [1, 1]} : vector<16x256xf32> to vector<1x256xf32>
    %916 = vector.broadcast %914 : vector<8x1xf32> to vector<8x256xf32>
    %917 = vector.broadcast %915 : vector<1x256xf32> to vector<8x256xf32>
    %918 = arith.mulf %916, %917 : vector<8x256xf32>
    %919 = arith.addf %907, %918 : vector<8x256xf32>
    %920 = vector.extract_strided_slice %852 {offsets = [13, 0], sizes = [1, 256], strides = [1, 1]} : vector<16x256xf32> to vector<1x256xf32>
    %921 = vector.broadcast %914 : vector<8x1xf32> to vector<8x256xf32>
    %922 = vector.broadcast %920 : vector<1x256xf32> to vector<8x256xf32>
    %923 = arith.mulf %921, %922 : vector<8x256xf32>
    %924 = arith.addf %912, %923 : vector<8x256xf32>
    %c62 = arith.constant 62 : index
    %c0_163 = arith.constant 0 : index
    %c0_164 = arith.constant 0 : index
    %925 = vector.load %arg2[%c62, %c0_163, %c0_164] : memref<72x8x1xf32, #tpu.memory_space<vmem>>, vector<1x8x1xf32>
    %926 = vector.shape_cast %925 : vector<1x8x1xf32> to vector<8x1xf32>
    %927 = vector.extract_strided_slice %852 {offsets = [6, 0], sizes = [1, 256], strides = [1, 1]} : vector<16x256xf32> to vector<1x256xf32>
    %928 = vector.broadcast %926 : vector<8x1xf32> to vector<8x256xf32>
    %929 = vector.broadcast %927 : vector<1x256xf32> to vector<8x256xf32>
    %930 = arith.mulf %928, %929 : vector<8x256xf32>
    %931 = arith.addf %919, %930 : vector<8x256xf32>
    %932 = vector.extract_strided_slice %852 {offsets = [14, 0], sizes = [1, 256], strides = [1, 1]} : vector<16x256xf32> to vector<1x256xf32>
    %933 = vector.broadcast %926 : vector<8x1xf32> to vector<8x256xf32>
    %934 = vector.broadcast %932 : vector<1x256xf32> to vector<8x256xf32>
    %935 = arith.mulf %933, %934 : vector<8x256xf32>
    %936 = arith.addf %924, %935 : vector<8x256xf32>
    %c71 = arith.constant 71 : index
    %c0_165 = arith.constant 0 : index
    %c0_166 = arith.constant 0 : index
    %937 = vector.load %arg2[%c71, %c0_165, %c0_166] : memref<72x8x1xf32, #tpu.memory_space<vmem>>, vector<1x8x1xf32>
    %938 = vector.shape_cast %937 : vector<1x8x1xf32> to vector<8x1xf32>
    %939 = vector.extract_strided_slice %852 {offsets = [7, 0], sizes = [1, 256], strides = [1, 1]} : vector<16x256xf32> to vector<1x256xf32>
    %940 = vector.broadcast %938 : vector<8x1xf32> to vector<8x256xf32>
    %941 = vector.broadcast %939 : vector<1x256xf32> to vector<8x256xf32>
    %942 = arith.mulf %940, %941 : vector<8x256xf32>
    %943 = arith.addf %931, %942 : vector<8x256xf32>
    %944 = vector.extract_strided_slice %852 {offsets = [15, 0], sizes = [1, 256], strides = [1, 1]} : vector<16x256xf32> to vector<1x256xf32>
    %945 = vector.broadcast %938 : vector<8x1xf32> to vector<8x256xf32>
    %946 = vector.broadcast %944 : vector<1x256xf32> to vector<8x256xf32>
    %947 = arith.mulf %945, %946 : vector<8x256xf32>
    %948 = arith.addf %936, %947 : vector<8x256xf32>
    %c0_167 = arith.constant 0 : index
    %c0_168 = arith.constant 0 : index
    %949 = vector.load %arg3[%c0_167, %c0_168] : memref<8x1xf32, #tpu.memory_space<vmem>>, vector<8x1xf32>
    %950 = vector.broadcast %949 : vector<8x1xf32> to vector<8x256xf32>
    %951 = arith.addf %943, %950 : vector<8x256xf32>
    %952 = vector.broadcast %949 : vector<8x1xf32> to vector<8x256xf32>
    %953 = arith.addf %948, %952 : vector<8x256xf32>
    %954 = tpu.concatenate %951, %953 in 0 : vector<8x256xf32>, vector<8x256xf32> -> vector<16x256xf32>
    %cst_169 = arith.constant 5.000000e-02 : f32
    %955 = vector.broadcast %cst_169 : f32 to vector<16x256xf32>
    %956 = arith.mulf %955, %954 : vector<16x256xf32>
    %957 = arith.maximumf %956, %954 : vector<16x256xf32>
    %c0_170 = arith.constant 0 : index
    %c0_171 = arith.constant 0 : index
    %958 = vector.load %arg4[%c0_170, %c0_171] : memref<16x256xf32, #tpu.memory_space<vmem>>, vector<16x256xf32>
    tpu.vector_store %arg4[%c0_170, %c0_171], %957 {strides = array<i32>} : memref<16x256xf32, #tpu.memory_space<vmem>>, vector<16x256xf32>,
    return
  }
  func.func @transform_0(%arg0: i32) -> (i32, i32) {
    %c0_i32 = arith.constant 0 : i32
    %c0_i32_0 = arith.constant 0 : i32
    return %arg0, %c0_i32 : i32, i32
  }
  func.func @transform_1(%arg0: i32) -> (i32, i32, i32) {
    %c0_i32 = arith.constant 0 : i32
    %c0_i32_0 = arith.constant 0 : i32
    %c0_i32_1 = arith.constant 0 : i32
    %c0_i32_2 = arith.constant 0 : i32
    return %c0_i32, %c0_i32_0, %c0_i32_1 : i32, i32, i32
  }
  func.func @transform_2(%arg0: i32) -> (i32, i32) {
    %c0_i32 = arith.constant 0 : i32
    %c0_i32_0 = arith.constant 0 : i32
    %c0_i32_1 = arith.constant 0 : i32
    return %c0_i32, %c0_i32_0 : i32, i32
  }
  func.func @transform_3(%arg0: i32) -> (i32, i32) {
    %c0_i32 = arith.constant 0 : i32
    %c0_i32_0 = arith.constant 0 : i32
    return %arg0, %c0_i32 : i32, i32
  }
}

</mosaic_0001>

<llo_original>
// kernel: group_conv2d.1
$region0: #{group_conv2d.1}
  #allocation0 [shape = 'u32[]', space=smem, size = 0x4, offset = 0x4, fixed_abs, tag = 'smem constant byte address 0x4 - core index']
  #allocation1 [shape = 'u32[144,128]{1,0:T(1,128)}', space=vmem, size = 0x12000, scoped, tag = 'internal scratch']
  %s0 = inlined_call_operand.vmem [shape: f32[16,256], index: 0, kind: input, shape index: {}]
  %s1 = inlined_call_operand.vmem [shape: f32[72,8,1], index: 1, kind: input, shape index: {}]
  %s2 = inlined_call_operand.vmem [shape: f32[8,1], index: 2, kind: input, shape index: {}]
  %s3 = inlined_call_operand.vmem [shape: f32[16,256], index: 3, kind: output, shape index: {}]
  %s4 = sld [smem:[#allocation0]]
  $region22: #{group_conv2d.1} parent=0
    _
  %s6 = ssub.s32 1, %s4
  %s7 = scalar_select 0, %s6, %s4
  // Predicated region
  $region2: #{group_conv2d.1} parent=0 // pred_check
    _
  $region3: #{group_conv2d.1} parent=0 // pred_check_branch
    %9 = sbr.rel (0) target = $region5
  $region4: #{group_conv2d.1} parent=0 // pred_region
    _
  $region5: #{group_conv2d.1} parent=0 // pred_fallthru
    _
  // Predicated region
  $region6: #{group_conv2d.1} parent=0 // pred_check
    _
  $region7: #{group_conv2d.1} parent=0 // pred_check_branch
    %11 = sbr.rel (0) target = $region9
  $region8: #{group_conv2d.1} parent=0 // pred_region
    _
  $region9: #{group_conv2d.1} parent=0 // pred_fallthru
    _
  // Predicated region
  $region10: #{group_conv2d.1} parent=0 // pred_check
    _
  $region11: #{group_conv2d.1} parent=0 // pred_check_branch
    %13 = sbr.rel (0) target = $region13
  $region12: #{group_conv2d.1} parent=0 // pred_region
    _
  $region13: #{group_conv2d.1} parent=0 // pred_fallthru
    _
  %v14 = vld [vmem:[%s0] sm:$0xff]
  %v15 = vld [vmem:[%s0 + $0x8] sm:$0xff]
  %v16 = vld [vmem:[%s0 + $0x10] sm:$0xff]
  %v17 = vld [vmem:[%s0 + $0x18] sm:$0xff]
  %v18 = vlaneseq
  %v19 = vand.u32 %v18, 127
  %v20 = vadd.s32 %v19, 128
  %vm21 = vcmp.lt.s32.totalorder %v19, 0
  %v22 = vsub.s32 0, %v19
  %v23 = vsel %vm21, %v22, %v19
  %v24 = vshrl.u32 %v23, 4
  %v25 = vand.u32 %v23, 15
  %v26 = vsub.s32 0, %v25
  %v27 = vsel %vm21, %v26, %v25
  %vm28 = vcmp.lt.s32.totalorder %v20, 0
  %v29 = vsub.s32 0, %v20
  %v30 = vsel %vm28, %v29, %v20
  %v31 = vshrl.u32 %v30, 4
  %v32 = vand.u32 %v30, 15
  %v33 = vsub.s32 0, %v32
  %v34 = vsel %vm28, %v33, %v32
  %vm35 = vcmp.ne.s32.totalorder %v27, 0
  %vm36 = vcmp.ne.s32.totalorder %v34, 0
  %vm37 = vcmp.lt.s32.totalorder %v27, 0
  %vm38 = vcmp.lt.s32.totalorder %v34, 0
  %vm39 = vmand %vm37, %vm35
  %vm40 = vmand %vm38, %vm36
  %v41 = vadd.s32 %v27, 16
  %v42 = vadd.s32 %v34, 16
  %v43 = vsel %vm39, %v41, %v27
  %v44 = vsel %vm40, %v42, %v34
  %vm45 = vcmp.ge.s32.totalorder %v43, 1
  %vm46 = vcmp.ge.s32.totalorder %v44, 1
  %vm47 = vcmp.le.s32.totalorder %v43, 16
  %vm48 = vcmp.le.s32.totalorder %v44, 16
  %vm49 = vmand %vm45, %vm47
  %vm50 = vmand %vm46, %vm48
  %v51 = vsel %vm49, 1, 0
  %v52 = vsel %vm50, 1, 0
  %vm53 = vcmp.eq.s32.totalorder %v51, 1
  %vm54 = vcmp.eq.s32.totalorder %v52, 1
  %60 = vrot.lane.b32.xlu0 0.0, 17
  %v61 = vpop.permute.xlu0 %60
  %62 = vrot.lane.b32.xlu0 %v14, 17
  %v63 = vpop.permute.xlu0 %62
  %64 = vrot.lane.b32.xlu0 %v15, 17
  %v65 = vpop.permute.xlu0 %64
  %66 = vrot.lane.b32.xlu0 %v16, 17
  %v67 = vpop.permute.xlu0 %66
  %68 = vrot.lane.b32.xlu0 %v17, 17
  %v69 = vpop.permute.xlu0 %68
  %vm70 = vcmask 138240
  %v71 = vsel %vm70, %v61, %v63
  %v72 = vsel %vm70, %v63, %v65
  %v73 = vsel %vm70, %v61, %v67
  %v74 = vsel %vm70, %v67, %v69
  %v79 = vsel %vm53, %v71, 0.0
  %v80 = vsel %vm54, %v72, 0.0
  %v81 = vsel %vm53, %v73, 0.0
  %v82 = vsel %vm54, %v74, 0.0
  %v83 = vld [vmem:[%s1] sm:$0xff]
  %85 = vset.pattern.permute.xlu0 0
  %86 = vperm.xlu0 %85, %v83
  %v87 = vpop.permute.xlu0 %86
  %v89 = vlaneseq
  %v90 = vshrl.u32 %v89, 7
  %v91 = vsub.s32 0, %v90
  %v92 = vrot.slane %v79, %v91
  %v93 = vlaneseq
  %v94 = vshrl.u32 %v93, 7
  %v95 = vsub.s32 0, %v94
  %v96 = vrot.slane %v80, %v95
  %v97 = vmul.f32 %v87, %v92
  %v98 = vmul.f32 %v87, %v96
  %v99 = vadd.f32 %v97, 0.0
  %v100 = vadd.f32 %v98, 0.0
  %v101 = vlaneseq
  %v102 = vshrl.u32 %v101, 7
  %v103 = vsub.s32 0, %v102
  %v104 = vrot.slane %v81, %v103
  %v105 = vlaneseq
  %v106 = vshrl.u32 %v105, 7
  %v107 = vsub.s32 0, %v106
  %v108 = vrot.slane %v82, %v107
  %v109 = vmul.f32 %v87, %v104
  %v110 = vmul.f32 %v87, %v108
  %v111 = vadd.f32 %v109, 0.0
  %v112 = vadd.f32 %v110, 0.0
  %s113 = scalar_lea.vmem %s1, 72
  %v114 = vld [vmem:[%s113] sm:$0xff]
  %116 = vset.pattern.permute.xlu0 0
  %117 = vperm.xlu0 %116, %v114
  %v118 = vpop.permute.xlu0 %117
  %v120 = vlaneseq
  %v121 = vshrl.u32 %v120, 7
  %v122 = vsub.s32 1, %v121
  %v123 = vrot.slane %v79, %v122
  %v124 = vlaneseq
  %v125 = vshrl.u32 %v124, 7
  %v126 = vsub.s32 1, %v125
  %v127 = vrot.slane %v80, %v126
  %v128 = vmul.f32 %v118, %v123
  %v129 = vmul.f32 %v118, %v127
  %v130 = vadd.f32 %v99, %v128
  %v131 = vadd.f32 %v100, %v129
  %v132 = vlaneseq
  %v133 = vshrl.u32 %v132, 7
  %v134 = vsub.s32 1, %v133
  %v135 = vrot.slane %v81, %v134
  %v136 = vlaneseq
  %v137 = vshrl.u32 %v136, 7
  %v138 = vsub.s32 1, %v137
  %v139 = vrot.slane %v82, %v138
  %v140 = vmul.f32 %v118, %v135
  %v141 = vmul.f32 %v118, %v139
  %v142 = vadd.f32 %v111, %v140
  %v143 = vadd.f32 %v112, %v141
  %s144 = scalar_lea.vmem %s1, 144
  %v145 = vld [vmem:[%s144] sm:$0xff]
  %147 = vset.pattern.permute.xlu0 0
  %148 = vperm.xlu0 %147, %v145
  %v149 = vpop.permute.xlu0 %148
  %v151 = vlaneseq
  %v152 = vshrl.u32 %v151, 7
  %v153 = vsub.s32 2, %v152
  %v154 = vrot.slane %v79, %v153
  %v155 = vlaneseq
  %v156 = vshrl.u32 %v155, 7
  %v157 = vsub.s32 2, %v156
  %v158 = vrot.slane %v80, %v157
  %v159 = vmul.f32 %v149, %v154
  %v160 = vmul.f32 %v149, %v158
  %v161 = vadd.f32 %v130, %v159
  %v162 = vadd.f32 %v131, %v160
  %v163 = vlaneseq
  %v164 = vshrl.u32 %v163, 7
  %v165 = vsub.s32 2, %v164
  %v166 = vrot.slane %v81, %v165
  %v167 = vlaneseq
  %v168 = vshrl.u32 %v167, 7
  %v169 = vsub.s32 2, %v168
  %v170 = vrot.slane %v82, %v169
  %v171 = vmul.f32 %v149, %v166
  %v172 = vmul.f32 %v149, %v170
  %v173 = vadd.f32 %v142, %v171
  %v174 = vadd.f32 %v143, %v172
  %s175 = scalar_lea.vmem %s1, 216
  %v176 = vld [vmem:[%s175] sm:$0xff]
  %178 = vset.pattern.permute.xlu0 0
  %179 = vperm.xlu0 %178, %v176
  %v180 = vpop.permute.xlu0 %179
  %v182 = vlaneseq
  %v183 = vshrl.u32 %v182, 7
  %v184 = vsub.s32 3, %v183
  %v185 = vrot.slane %v79, %v184
  %v186 = vlaneseq
  %v187 = vshrl.u32 %v186, 7
  %v188 = vsub.s32 3, %v187
  %v189 = vrot.slane %v80, %v188
  %v190 = vmul.f32 %v180, %v185
  %v191 = vmul.f32 %v180, %v189
  %v192 = vadd.f32 %v161, %v190
  %v193 = vadd.f32 %v162, %v191
  %v194 = vlaneseq
  %v195 = vshrl.u32 %v194, 7
  %v196 = vsub.s32 3, %v195
  %v197 = vrot.slane %v81, %v196
  %v198 = vlaneseq
  %v199 = vshrl.u32 %v198, 7
  %v200 = vsub.s32 3, %v199
  %v201 = vrot.slane %v82, %v200
  %v202 = vmul.f32 %v180, %v197
  %v203 = vmul.f32 %v180, %v201
  %v204 = vadd.f32 %v173, %v202
  %v205 = vadd.f32 %v174, %v203
  %s206 = scalar_lea.vmem %s1, 288
  %v207 = vld [vmem:[%s206] sm:$0xff]
  %209 = vset.pattern.permute.xlu0 0
  %210 = vperm.xlu0 %209, %v207
  %v211 = vpop.permute.xlu0 %210
  %v213 = vlaneseq
  %v214 = vshrl.u32 %v213, 7
  %v215 = vsub.s32 4, %v214
  %v216 = vrot.slane %v79, %v215
  %v217 = vlaneseq
  %v218 = vshrl.u32 %v217, 7
  %v219 = vsub.s32 4, %v218
  %v220 = vrot.slane %v80, %v219
  %v221 = vmul.f32 %v211, %v216
  %v222 = vmul.f32 %v211, %v220
  %v223 = vadd.f32 %v192, %v221
  %v224 = vadd.f32 %v193, %v222
  %v225 = vlaneseq
  %v226 = vshrl.u32 %v225, 7
  %v227 = vsub.s32 4, %v226
  %v228 = vrot.slane %v81, %v227
  %v229 = vlaneseq
  %v230 = vshrl.u32 %v229, 7
  %v231 = vsub.s32 4, %v230
  %v232 = vrot.slane %v82, %v231
  %v233 = vmul.f32 %v211, %v228
  %v234 = vmul.f32 %v211, %v232
  %v235 = vadd.f32 %v204, %v233
  %v236 = vadd.f32 %v205, %v234
  %s237 = scalar_lea.vmem %s1, 360
  %v238 = vld [vmem:[%s237] sm:$0xff]
  %240 = vset.pattern.permute.xlu0 0
  %241 = vperm.xlu0 %240, %v238
  %v242 = vpop.permute.xlu0 %241
  %v244 = vlaneseq
  %v245 = vshrl.u32 %v244, 7
  %v246 = vsub.s32 5, %v245
  %v247 = vrot.slane %v79, %v246
  %v248 = vlaneseq
  %v249 = vshrl.u32 %v248, 7
  %v250 = vsub.s32 5, %v249
  %v251 = vrot.slane %v80, %v250
  %v252 = vmul.f32 %v242, %v247
  %v253 = vmul.f32 %v242, %v251
  %v254 = vadd.f32 %v223, %v252
  %v255 = vadd.f32 %v224, %v253
  %v256 = vlaneseq
  %v257 = vshrl.u32 %v256, 7
  %v258 = vsub.s32 5, %v257
  %v259 = vrot.slane %v81, %v258
  %v260 = vlaneseq
  %v261 = vshrl.u32 %v260, 7
  %v262 = vsub.s32 5, %v261
  %v263 = vrot.slane %v82, %v262
  %v264 = vmul.f32 %v242, %v259
  %v265 = vmul.f32 %v242, %v263
  %v266 = vadd.f32 %v235, %v264
  %v267 = vadd.f32 %v236, %v265
  %s268 = scalar_lea.vmem %s1, 432
  %v269 = vld [vmem:[%s268] sm:$0xff]
  %271 = vset.pattern.permute.xlu0 0
  %272 = vperm.xlu0 %271, %v269
  %v273 = vpop.permute.xlu0 %272
  %v275 = vlaneseq
  %v276 = vshrl.u32 %v275, 7
  %v277 = vsub.s32 6, %v276
  %v278 = vrot.slane %v79, %v277
  %v279 = vlaneseq
  %v280 = vshrl.u32 %v279, 7
  %v281 = vsub.s32 6, %v280
  %v282 = vrot.slane %v80, %v281
  %v283 = vmul.f32 %v273, %v278
  %v284 = vmul.f32 %v273, %v282
  %v285 = vadd.f32 %v254, %v283
  %v286 = vadd.f32 %v255, %v284
  %v287 = vlaneseq
  %v288 = vshrl.u32 %v287, 7
  %v289 = vsub.s32 6, %v288
  %v290 = vrot.slane %v81, %v289
  %v291 = vlaneseq
  %v292 = vshrl.u32 %v291, 7
  %v293 = vsub.s32 6, %v292
  %v294 = vrot.slane %v82, %v293
  %v295 = vmul.f32 %v273, %v290
  %v296 = vmul.f32 %v273, %v294
  %v297 = vadd.f32 %v266, %v295
  %v298 = vadd.f32 %v267, %v296
  %s299 = scalar_lea.vmem %s1, 504
  %v300 = vld [vmem:[%s299] sm:$0xff]
  %302 = vset.pattern.permute.xlu0 0
  %303 = vperm.xlu0 %302, %v300
  %v304 = vpop.permute.xlu0 %303
  %v306 = vlaneseq
  %v307 = vshrl.u32 %v306, 7
  %v308 = vsub.s32 7, %v307
  %v309 = vrot.slane %v79, %v308
  %v310 = vlaneseq
  %v311 = vshrl.u32 %v310, 7
  %v312 = vsub.s32 7, %v311
  %v313 = vrot.slane %v80, %v312
  %v314 = vmul.f32 %v304, %v309
  %v315 = vmul.f32 %v304, %v313
  %v316 = vadd.f32 %v285, %v314
  %v317 = vadd.f32 %v286, %v315
  %v318 = vlaneseq
  %v319 = vshrl.u32 %v318, 7
  %v320 = vsub.s32 7, %v319
  %v321 = vrot.slane %v81, %v320
  %v322 = vlaneseq
  %v323 = vshrl.u32 %v322, 7
  %v324 = vsub.s32 7, %v323
  %v325 = vrot.slane %v82, %v324
  %v326 = vmul.f32 %v304, %v321
  %v327 = vmul.f32 %v304, %v325
  %v328 = vadd.f32 %v297, %v326
  %v329 = vadd.f32 %v298, %v327
  %s330 = scalar_lea.vmem %s1, 8
  %v331 = vld [vmem:[%s330] sm:$0xff]
  %333 = vset.pattern.permute.xlu0 0
  %334 = vperm.xlu0 %333, %v331
  %v335 = vpop.permute.xlu0 %334
  %v337 = vlaneseq
  %v338 = vshrl.u32 %v337, 7
  %v339 = vsub.s32 0, %v338
  %v340 = vlaneseq
  %v341 = vshrl.u32 %v340, 7
  %v342 = vsub.s32 0, %v341
  %v343 = vrot.slane %v14, %v342
  %v344 = vlaneseq
  %v345 = vshrl.u32 %v344, 7
  %v346 = vsub.s32 0, %v345
  %v347 = vrot.slane %v15, %v346
  %v348 = vmul.f32 %v335, 0.0
  %v349 = vmul.f32 %v335, %v343
  %v350 = vmul.f32 %v335, %v347
  %354 = vrot.lane.b32.xlu0 %v348, 16
  %v355 = vpop.permute.xlu0 %354
  %356 = vrot.lane.b32.xlu0 %v349, 16
  %v357 = vpop.permute.xlu0 %356
  %358 = vrot.lane.b32.xlu0 %v350, 16
  %v359 = vpop.permute.xlu0 %358
  %vm360 = vcmask 130048
  %v361 = vsel %vm360, %v355, %v357
  %v362 = vsel %vm360, %v357, %v359
  %v365 = vadd.f32 %v316, %v361
  %v366 = vadd.f32 %v317, %v362
  %v367 = vlaneseq
  %v368 = vshrl.u32 %v367, 7
  %v369 = vsub.s32 0, %v368
  %v370 = vrot.slane %v16, %v369
  %v371 = vlaneseq
  %v372 = vshrl.u32 %v371, 7
  %v373 = vsub.s32 0, %v372
  %v374 = vrot.slane %v17, %v373
  %v375 = vmul.f32 %v335, %v370
  %v376 = vmul.f32 %v335, %v374
  %379 = vrot.lane.b32.xlu0 %v375, 16
  %v380 = vpop.permute.xlu0 %379
  %381 = vrot.lane.b32.xlu0 %v376, 16
  %v382 = vpop.permute.xlu0 %381
  %v383 = vsel %vm360, %v355, %v380
  %v384 = vsel %vm360, %v380, %v382
  %v387 = vadd.f32 %v328, %v383
  %v388 = vadd.f32 %v329, %v384
  %s389 = scalar_lea.vmem %s1, 80
  %v390 = vld [vmem:[%s389] sm:$0xff]
  %392 = vset.pattern.permute.xlu0 0
  %393 = vperm.xlu0 %392, %v390
  %v394 = vpop.permute.xlu0 %393
  %v396 = vlaneseq
  %v397 = vshrl.u32 %v396, 7
  %v398 = vsub.s32 1, %v397
  %v399 = vlaneseq
  %v400 = vshrl.u32 %v399, 7
  %v401 = vsub.s32 1, %v400
  %v402 = vrot.slane %v14, %v401
  %v403 = vlaneseq
  %v404 = vshrl.u32 %v403, 7
  %v405 = vsub.s32 1, %v404
  %v406 = vrot.slane %v15, %v405
  %v407 = vmul.f32 %v394, 0.0
  %v408 = vmul.f32 %v394, %v402
  %v409 = vmul.f32 %v394, %v406
  %413 = vrot.lane.b32.xlu0 %v407, 16
  %v414 = vpop.permute.xlu0 %413
  %415 = vrot.lane.b32.xlu0 %v408, 16
  %v416 = vpop.permute.xlu0 %415
  %417 = vrot.lane.b32.xlu0 %v409, 16
  %v418 = vpop.permute.xlu0 %417
  %v419 = vsel %vm360, %v414, %v416
  %v420 = vsel %vm360, %v416, %v418
  %v423 = vadd.f32 %v365, %v419
  %v424 = vadd.f32 %v366, %v420
  %v425 = vlaneseq
  %v426 = vshrl.u32 %v425, 7
  %v427 = vsub.s32 1, %v426
  %v428 = vrot.slane %v16, %v427
  %v429 = vlaneseq
  %v430 = vshrl.u32 %v429, 7
  %v431 = vsub.s32 1, %v430
  %v432 = vrot.slane %v17, %v431
  %v433 = vmul.f32 %v394, %v428
  %v434 = vmul.f32 %v394, %v432
  %437 = vrot.lane.b32.xlu0 %v433, 16
  %v438 = vpop.permute.xlu0 %437
  %439 = vrot.lane.b32.xlu0 %v434, 16
  %v440 = vpop.permute.xlu0 %439
  %v441 = vsel %vm360, %v414, %v438
  %v442 = vsel %vm360, %v438, %v440
  %v445 = vadd.f32 %v387, %v441
  %v446 = vadd.f32 %v388, %v442
  %s447 = scalar_lea.vmem %s1, 152
  %v448 = vld [vmem:[%s447] sm:$0xff]
  %450 = vset.pattern.permute.xlu0 0
  %451 = vperm.xlu0 %450, %v448
  %v452 = vpop.permute.xlu0 %451
  %v454 = vlaneseq
  %v455 = vshrl.u32 %v454, 7
  %v456 = vsub.s32 2, %v455
  %v457 = vlaneseq
  %v458 = vshrl.u32 %v457, 7
  %v459 = vsub.s32 2, %v458
  %v460 = vrot.slane %v14, %v459
  %v461 = vlaneseq
  %v462 = vshrl.u32 %v461, 7
  %v463 = vsub.s32 2, %v462
  %v464 = vrot.slane %v15, %v463
  %v465 = vmul.f32 %v452, 0.0
  %v466 = vmul.f32 %v452, %v460
  %v467 = vmul.f32 %v452, %v464
  %471 = vrot.lane.b32.xlu0 %v465, 16
  %v472 = vpop.permute.xlu0 %471
  %473 = vrot.lane.b32.xlu0 %v466, 16
  %v474 = vpop.permute.xlu0 %473
  %475 = vrot.lane.b32.xlu0 %v467, 16
  %v476 = vpop.permute.xlu0 %475
  %v477 = vsel %vm360, %v472, %v474
  %v478 = vsel %vm360, %v474, %v476
  %v481 = vadd.f32 %v423, %v477
  %v482 = vadd.f32 %v424, %v478
  %v483 = vlaneseq
  %v484 = vshrl.u32 %v483, 7
  %v485 = vsub.s32 2, %v484
  %v486 = vrot.slane %v16, %v485
  %v487 = vlaneseq
  %v488 = vshrl.u32 %v487, 7
  %v489 = vsub.s32 2, %v488
  %v490 = vrot.slane %v17, %v489
  %v491 = vmul.f32 %v452, %v486
  %v492 = vmul.f32 %v452, %v490
  %495 = vrot.lane.b32.xlu0 %v491, 16
  %v496 = vpop.permute.xlu0 %495
  %497 = vrot.lane.b32.xlu0 %v492, 16
  %v498 = vpop.permute.xlu0 %497
  %v499 = vsel %vm360, %v472, %v496
  %v500 = vsel %vm360, %v496, %v498
  %v503 = vadd.f32 %v445, %v499
  %v504 = vadd.f32 %v446, %v500
  %s505 = scalar_lea.vmem %s1, 224
  %v506 = vld [vmem:[%s505] sm:$0xff]
  %508 = vset.pattern.permute.xlu0 0
  %509 = vperm.xlu0 %508, %v506
  %v510 = vpop.permute.xlu0 %509
  %v512 = vlaneseq
  %v513 = vshrl.u32 %v512, 7
  %v514 = vsub.s32 3, %v513
  %v515 = vlaneseq
  %v516 = vshrl.u32 %v515, 7
  %v517 = vsub.s32 3, %v516
  %v518 = vrot.slane %v14, %v517
  %v519 = vlaneseq
  %v520 = vshrl.u32 %v519, 7
  %v521 = vsub.s32 3, %v520
  %v522 = vrot.slane %v15, %v521
  %v523 = vmul.f32 %v510, 0.0
  %v524 = vmul.f32 %v510, %v518
  %v525 = vmul.f32 %v510, %v522
  %529 = vrot.lane.b32.xlu0 %v523, 16
  %v530 = vpop.permute.xlu0 %529
  %531 = vrot.lane.b32.xlu0 %v524, 16
  %v532 = vpop.permute.xlu0 %531
  %533 = vrot.lane.b32.xlu0 %v525, 16
  %v534 = vpop.permute.xlu0 %533
  %v535 = vsel %vm360, %v530, %v532
  %v536 = vsel %vm360, %v532, %v534
  %v539 = vadd.f32 %v481, %v535
  %v540 = vadd.f32 %v482, %v536
  %v541 = vlaneseq
  %v542 = vshrl.u32 %v541, 7
  %v543 = vsub.s32 3, %v542
  %v544 = vrot.slane %v16, %v543
  %v545 = vlaneseq
  %v546 = vshrl.u32 %v545, 7
  %v547 = vsub.s32 3, %v546
  %v548 = vrot.slane %v17, %v547
  %v549 = vmul.f32 %v510, %v544
  %v550 = vmul.f32 %v510, %v548
  %553 = vrot.lane.b32.xlu0 %v549, 16
  %v554 = vpop.permute.xlu0 %553
  %555 = vrot.lane.b32.xlu0 %v550, 16
  %v556 = vpop.permute.xlu0 %555
  %v557 = vsel %vm360, %v530, %v554
  %v558 = vsel %vm360, %v554, %v556
  %v561 = vadd.f32 %v503, %v557
  %v562 = vadd.f32 %v504, %v558
  %s563 = scalar_lea.vmem %s1, 296
  %v564 = vld [vmem:[%s563] sm:$0xff]
  %566 = vset.pattern.permute.xlu0 0
  %567 = vperm.xlu0 %566, %v564
  %v568 = vpop.permute.xlu0 %567
  %v570 = vlaneseq
  %v571 = vshrl.u32 %v570, 7
  %v572 = vsub.s32 4, %v571
  %v573 = vlaneseq
  %v574 = vshrl.u32 %v573, 7
  %v575 = vsub.s32 4, %v574
  %v576 = vrot.slane %v14, %v575
  %v577 = vlaneseq
  %v578 = vshrl.u32 %v577, 7
  %v579 = vsub.s32 4, %v578
  %v580 = vrot.slane %v15, %v579
  %v581 = vmul.f32 %v568, 0.0
  %v582 = vmul.f32 %v568, %v576
  %v583 = vmul.f32 %v568, %v580
  %587 = vrot.lane.b32.xlu0 %v581, 16
  %v588 = vpop.permute.xlu0 %587
  %589 = vrot.lane.b32.xlu0 %v582, 16
  %v590 = vpop.permute.xlu0 %589
  %591 = vrot.lane.b32.xlu0 %v583, 16
  %v592 = vpop.permute.xlu0 %591
  %v593 = vsel %vm360, %v588, %v590
  %v594 = vsel %vm360, %v590, %v592
  %v597 = vadd.f32 %v539, %v593
  %v598 = vadd.f32 %v540, %v594
  %v599 = vlaneseq
  %v600 = vshrl.u32 %v599, 7
  %v601 = vsub.s32 4, %v600
  %v602 = vrot.slane %v16, %v601
  %v603 = vlaneseq
  %v604 = vshrl.u32 %v603, 7
  %v605 = vsub.s32 4, %v604
  %v606 = vrot.slane %v17, %v605
  %v607 = vmul.f32 %v568, %v602
  %v608 = vmul.f32 %v568, %v606
  %611 = vrot.lane.b32.xlu0 %v607, 16
  %v612 = vpop.permute.xlu0 %611
  %613 = vrot.lane.b32.xlu0 %v608, 16
  %v614 = vpop.permute.xlu0 %613
  %v615 = vsel %vm360, %v588, %v612
  %v616 = vsel %vm360, %v612, %v614
  %v619 = vadd.f32 %v561, %v615
  %v620 = vadd.f32 %v562, %v616
  %s621 = scalar_lea.vmem %s1, 368
  %v622 = vld [vmem:[%s621] sm:$0xff]
  %624 = vset.pattern.permute.xlu0 0
  %625 = vperm.xlu0 %624, %v622
  %v626 = vpop.permute.xlu0 %625
  %v628 = vlaneseq
  %v629 = vshrl.u32 %v628, 7
  %v630 = vsub.s32 5, %v629
  %v631 = vlaneseq
  %v632 = vshrl.u32 %v631, 7
  %v633 = vsub.s32 5, %v632
  %v634 = vrot.slane %v14, %v633
  %v635 = vlaneseq
  %v636 = vshrl.u32 %v635, 7
  %v637 = vsub.s32 5, %v636
  %v638 = vrot.slane %v15, %v637
  %v639 = vmul.f32 %v626, 0.0
  %v640 = vmul.f32 %v626, %v634
  %v641 = vmul.f32 %v626, %v638
  %645 = vrot.lane.b32.xlu0 %v639, 16
  %v646 = vpop.permute.xlu0 %645
  %647 = vrot.lane.b32.xlu0 %v640, 16
  %v648 = vpop.permute.xlu0 %647
  %649 = vrot.lane.b32.xlu0 %v641, 16
  %v650 = vpop.permute.xlu0 %649
  %v651 = vsel %vm360, %v646, %v648
  %v652 = vsel %vm360, %v648, %v650
  %v655 = vadd.f32 %v597, %v651
  %v656 = vadd.f32 %v598, %v652
  %v657 = vlaneseq
  %v658 = vshrl.u32 %v657, 7
  %v659 = vsub.s32 5, %v658
  %v660 = vrot.slane %v16, %v659
  %v661 = vlaneseq
  %v662 = vshrl.u32 %v661, 7
  %v663 = vsub.s32 5, %v662
  %v664 = vrot.slane %v17, %v663
  %v665 = vmul.f32 %v626, %v660
  %v666 = vmul.f32 %v626, %v664
  %669 = vrot.lane.b32.xlu0 %v665, 16
  %v670 = vpop.permute.xlu0 %669
  %671 = vrot.lane.b32.xlu0 %v666, 16
  %v672 = vpop.permute.xlu0 %671
  %v673 = vsel %vm360, %v646, %v670
  %v674 = vsel %vm360, %v670, %v672
  %v677 = vadd.f32 %v619, %v673
  %v678 = vadd.f32 %v620, %v674
  %s679 = scalar_lea.vmem %s1, 440
  %v680 = vld [vmem:[%s679] sm:$0xff]
  %682 = vset.pattern.permute.xlu0 0
  %683 = vperm.xlu0 %682, %v680
  %v684 = vpop.permute.xlu0 %683
  %v686 = vlaneseq
  %v687 = vshrl.u32 %v686, 7
  %v688 = vsub.s32 6, %v687
  %v689 = vlaneseq
  %v690 = vshrl.u32 %v689, 7
  %v691 = vsub.s32 6, %v690
  %v692 = vrot.slane %v14, %v691
  %v693 = vlaneseq
  %v694 = vshrl.u32 %v693, 7
  %v695 = vsub.s32 6, %v694
  %v696 = vrot.slane %v15, %v695
  %v697 = vmul.f32 %v684, 0.0
  %v698 = vmul.f32 %v684, %v692
  %v699 = vmul.f32 %v684, %v696
  %703 = vrot.lane.b32.xlu0 %v697, 16
  %v704 = vpop.permute.xlu0 %703
  %705 = vrot.lane.b32.xlu0 %v698, 16
  %v706 = vpop.permute.xlu0 %705
  %707 = vrot.lane.b32.xlu0 %v699, 16
  %v708 = vpop.permute.xlu0 %707
  %v709 = vsel %vm360, %v704, %v706
  %v710 = vsel %vm360, %v706, %v708
  %v713 = vadd.f32 %v655, %v709
  %v714 = vadd.f32 %v656, %v710
  %v715 = vlaneseq
  %v716 = vshrl.u32 %v715, 7
  %v717 = vsub.s32 6, %v716
  %v718 = vrot.slane %v16, %v717
  %v719 = vlaneseq
  %v720 = vshrl.u32 %v719, 7
  %v721 = vsub.s32 6, %v720
  %v722 = vrot.slane %v17, %v721
  %v723 = vmul.f32 %v684, %v718
  %v724 = vmul.f32 %v684, %v722
  %727 = vrot.lane.b32.xlu0 %v723, 16
  %v728 = vpop.permute.xlu0 %727
  %729 = vrot.lane.b32.xlu0 %v724, 16
  %v730 = vpop.permute.xlu0 %729
  %v731 = vsel %vm360, %v704, %v728
  %v732 = vsel %vm360, %v728, %v730
  %v735 = vadd.f32 %v677, %v731
  %v736 = vadd.f32 %v678, %v732
  %s737 = scalar_lea.vmem %s1, 512
  %v738 = vld [vmem:[%s737] sm:$0xff]
  %740 = vset.pattern.permute.xlu0 0
  %741 = vperm.xlu0 %740, %v738
  %v742 = vpop.permute.xlu0 %741
  %v744 = vlaneseq
  %v745 = vshrl.u32 %v744, 7
  %v746 = vsub.s32 7, %v745
  %v747 = vlaneseq
  %v748 = vshrl.u32 %v747, 7
  %v749 = vsub.s32 7, %v748
  %v750 = vrot.slane %v14, %v749
  %v751 = vlaneseq
  %v752 = vshrl.u32 %v751, 7
  %v753 = vsub.s32 7, %v752
  %v754 = vrot.slane %v15, %v753
  %v755 = vmul.f32 %v742, 0.0
  %v756 = vmul.f32 %v742, %v750
  %v757 = vmul.f32 %v742, %v754
  %761 = vrot.lane.b32.xlu0 %v755, 16
  %v762 = vpop.permute.xlu0 %761
  %763 = vrot.lane.b32.xlu0 %v756, 16
  %v764 = vpop.permute.xlu0 %763
  %765 = vrot.lane.b32.xlu0 %v757, 16
  %v766 = vpop.permute.xlu0 %765
  %v767 = vsel %vm360, %v762, %v764
  %v768 = vsel %vm360, %v764, %v766
  %v771 = vadd.f32 %v713, %v767
  %v772 = vadd.f32 %v714, %v768
  %v773 = vlaneseq
  %v774 = vshrl.u32 %v773, 7
  %v775 = vsub.s32 7, %v774
  %v776 = vrot.slane %v16, %v775
  %v777 = vlaneseq
  %v778 = vshrl.u32 %v777, 7
  %v779 = vsub.s32 7, %v778
  %v780 = vrot.slane %v17, %v779
  %v781 = vmul.f32 %v742, %v776
  %v782 = vmul.f32 %v742, %v780
  %785 = vrot.lane.b32.xlu0 %v781, 16
  %v786 = vpop.permute.xlu0 %785
  %787 = vrot.lane.b32.xlu0 %v782, 16
  %v788 = vpop.permute.xlu0 %787
  %v789 = vsel %vm360, %v762, %v786
  %v790 = vsel %vm360, %v786, %v788
  %v793 = vadd.f32 %v735, %v789
  %v794 = vadd.f32 %v736, %v790
  %vm795 = vcmp.ge.s32.totalorder %v43, 4294967295
  %vm796 = vcmp.ge.s32.totalorder %v44, 4294967295
  %vm797 = vcmp.le.s32.totalorder %v43, 14
  %vm798 = vcmp.le.s32.totalorder %v44, 14
  %vm799 = vmand %vm795, %vm797
  %vm800 = vmand %vm796, %vm798
  %v801 = vsel %vm799, 1, 0
  %v802 = vsel %vm800, 1, 0
  %vm803 = vcmp.eq.s32.totalorder %v801, 1
  %vm804 = vcmp.eq.s32.totalorder %v802, 1
  %805 = vrot.lane.b32.xlu0 0.0, 15
  %v806 = vpop.permute.xlu0 %805
  %807 = vrot.lane.b32.xlu0 %v14, 15
  %v808 = vpop.permute.xlu0 %807
  %809 = vrot.lane.b32.xlu0 %v15, 15
  %v810 = vpop.permute.xlu0 %809
  %811 = vrot.lane.b32.xlu0 %v16, 15
  %v812 = vpop.permute.xlu0 %811
  %813 = vrot.lane.b32.xlu0 %v17, 15
  %v814 = vpop.permute.xlu0 %813
  %vm815 = vcmask 121856
  %v816 = vsel %vm815, %v806, %v808
  %v817 = vsel %vm815, %v808, %v810
  %v818 = vsel %vm815, %v806, %v812
  %v819 = vsel %vm815, %v812, %v814
  %v824 = vsel %vm803, %v816, 0.0
  %v825 = vsel %vm804, %v817, 0.0
  %v826 = vsel %vm803, %v818, 0.0
  %v827 = vsel %vm804, %v819, 0.0
  %s828 = scalar_lea.vmem %s1, 16
  %v829 = vld [vmem:[%s828] sm:$0xff]
  %831 = vset.pattern.permute.xlu0 0
  %832 = vperm.xlu0 %831, %v829
  %v833 = vpop.permute.xlu0 %832
  %v835 = vlaneseq
  %v836 = vshrl.u32 %v835, 7
  %v837 = vsub.s32 0, %v836
  %v838 = vrot.slane %v824, %v837
  %v839 = vlaneseq
  %v840 = vshrl.u32 %v839, 7
  %v841 = vsub.s32 0, %v840
  %v842 = vrot.slane %v825, %v841
  %v843 = vmul.f32 %v833, %v838
  %v844 = vmul.f32 %v833, %v842
  %v845 = vadd.f32 %v771, %v843
  %v846 = vadd.f32 %v772, %v844
  %v847 = vlaneseq
  %v848 = vshrl.u32 %v847, 7
  %v849 = vsub.s32 0, %v848
  %v850 = vrot.slane %v826, %v849
  %v851 = vlaneseq
  %v852 = vshrl.u32 %v851, 7
  %v853 = vsub.s32 0, %v852
  %v854 = vrot.slane %v827, %v853
  %v855 = vmul.f32 %v833, %v850
  %v856 = vmul.f32 %v833, %v854
  %v857 = vadd.f32 %v793, %v855
  %v858 = vadd.f32 %v794, %v856
  %s859 = scalar_lea.vmem %s1, 88
  %v860 = vld [vmem:[%s859] sm:$0xff]
  %862 = vset.pattern.permute.xlu0 0
  %863 = vperm.xlu0 %862, %v860
  %v864 = vpop.permute.xlu0 %863
  %v866 = vlaneseq
  %v867 = vshrl.u32 %v866, 7
  %v868 = vsub.s32 1, %v867
  %v869 = vrot.slane %v824, %v868
  %v870 = vlaneseq
  %v871 = vshrl.u32 %v870, 7
  %v872 = vsub.s32 1, %v871
  %v873 = vrot.slane %v825, %v872
  %v874 = vmul.f32 %v864, %v869
  %v875 = vmul.f32 %v864, %v873
  %v876 = vadd.f32 %v845, %v874
  %v877 = vadd.f32 %v846, %v875
  %v878 = vlaneseq
  %v879 = vshrl.u32 %v878, 7
  %v880 = vsub.s32 1, %v879
  %v881 = vrot.slane %v826, %v880
  %v882 = vlaneseq
  %v883 = vshrl.u32 %v882, 7
  %v884 = vsub.s32 1, %v883
  %v885 = vrot.slane %v827, %v884
  %v886 = vmul.f32 %v864, %v881
  %v887 = vmul.f32 %v864, %v885
  %v888 = vadd.f32 %v857, %v886
  %v889 = vadd.f32 %v858, %v887
  %s890 = scalar_lea.vmem %s1, 160
  %v891 = vld [vmem:[%s890] sm:$0xff]
  %893 = vset.pattern.permute.xlu0 0
  %894 = vperm.xlu0 %893, %v891
  %v895 = vpop.permute.xlu0 %894
  %v897 = vlaneseq
  %v898 = vshrl.u32 %v897, 7
  %v899 = vsub.s32 2, %v898
  %v900 = vrot.slane %v824, %v899
  %v901 = vlaneseq
  %v902 = vshrl.u32 %v901, 7
  %v903 = vsub.s32 2, %v902
  %v904 = vrot.slane %v825, %v903
  %v905 = vmul.f32 %v895, %v900
  %v906 = vmul.f32 %v895, %v904
  %v907 = vadd.f32 %v876, %v905
  %v908 = vadd.f32 %v877, %v906
  %v909 = vlaneseq
  %v910 = vshrl.u32 %v909, 7
  %v911 = vsub.s32 2, %v910
  %v912 = vrot.slane %v826, %v911
  %v913 = vlaneseq
  %v914 = vshrl.u32 %v913, 7
  %v915 = vsub.s32 2, %v914
  %v916 = vrot.slane %v827, %v915
  %v917 = vmul.f32 %v895, %v912
  %v918 = vmul.f32 %v895, %v916
  %v919 = vadd.f32 %v888, %v917
  %v920 = vadd.f32 %v889, %v918
  %s921 = scalar_lea.vmem %s1, 232
  %v922 = vld [vmem:[%s921] sm:$0xff]
  %924 = vset.pattern.permute.xlu0 0
  %925 = vperm.xlu0 %924, %v922
  %v926 = vpop.permute.xlu0 %925
  %v928 = vlaneseq
  %v929 = vshrl.u32 %v928, 7
  %v930 = vsub.s32 3, %v929
  %v931 = vrot.slane %v824, %v930
  %v932 = vlaneseq
  %v933 = vshrl.u32 %v932, 7
  %v934 = vsub.s32 3, %v933
  %v935 = vrot.slane %v825, %v934
  %v936 = vmul.f32 %v926, %v931
  %v937 = vmul.f32 %v926, %v935
  %v938 = vadd.f32 %v907, %v936
  %v939 = vadd.f32 %v908, %v937
  %v940 = vlaneseq
  %v941 = vshrl.u32 %v940, 7
  %v942 = vsub.s32 3, %v941
  %v943 = vrot.slane %v826, %v942
  %v944 = vlaneseq
  %v945 = vshrl.u32 %v944, 7
  %v946 = vsub.s32 3, %v945
  %v947 = vrot.slane %v827, %v946
  %v948 = vmul.f32 %v926, %v943
  %v949 = vmul.f32 %v926, %v947
  %v950 = vadd.f32 %v919, %v948
  %v951 = vadd.f32 %v920, %v949
  %s952 = scalar_lea.vmem %s1, 304
  %v953 = vld [vmem:[%s952] sm:$0xff]
  %955 = vset.pattern.permute.xlu0 0
  %956 = vperm.xlu0 %955, %v953
  %v957 = vpop.permute.xlu0 %956
  %v959 = vlaneseq
  %v960 = vshrl.u32 %v959, 7
  %v961 = vsub.s32 4, %v960
  %v962 = vrot.slane %v824, %v961
  %v963 = vlaneseq
  %v964 = vshrl.u32 %v963, 7
  %v965 = vsub.s32 4, %v964
  %v966 = vrot.slane %v825, %v965
  %v967 = vmul.f32 %v957, %v962
  %v968 = vmul.f32 %v957, %v966
  %v969 = vadd.f32 %v938, %v967
  %v970 = vadd.f32 %v939, %v968
  %v971 = vlaneseq
  %v972 = vshrl.u32 %v971, 7
  %v973 = vsub.s32 4, %v972
  %v974 = vrot.slane %v826, %v973
  %v975 = vlaneseq
  %v976 = vshrl.u32 %v975, 7
  %v977 = vsub.s32 4, %v976
  %v978 = vrot.slane %v827, %v977
  %v979 = vmul.f32 %v957, %v974
  %v980 = vmul.f32 %v957, %v978
  %v981 = vadd.f32 %v950, %v979
  %v982 = vadd.f32 %v951, %v980
  %s983 = scalar_lea.vmem %s1, 376
  %v984 = vld [vmem:[%s983] sm:$0xff]
  %986 = vset.pattern.permute.xlu0 0
  %987 = vperm.xlu0 %986, %v984
  %v988 = vpop.permute.xlu0 %987
  %v990 = vlaneseq
  %v991 = vshrl.u32 %v990, 7
  %v992 = vsub.s32 5, %v991
  %v993 = vrot.slane %v824, %v992
  %v994 = vlaneseq
  %v995 = vshrl.u32 %v994, 7
  %v996 = vsub.s32 5, %v995
  %v997 = vrot.slane %v825, %v996
  %v998 = vmul.f32 %v988, %v993
  %v999 = vmul.f32 %v988, %v997
  %v1000 = vadd.f32 %v969, %v998
  %v1001 = vadd.f32 %v970, %v999
  %v1002 = vlaneseq
  %v1003 = vshrl.u32 %v1002, 7
  %v1004 = vsub.s32 5, %v1003
  %v1005 = vrot.slane %v826, %v1004
  %v1006 = vlaneseq
  %v1007 = vshrl.u32 %v1006, 7
  %v1008 = vsub.s32 5, %v1007
  %v1009 = vrot.slane %v827, %v1008
  %v1010 = vmul.f32 %v988, %v1005
  %v1011 = vmul.f32 %v988, %v1009
  %v1012 = vadd.f32 %v981, %v1010
  %v1013 = vadd.f32 %v982, %v1011
  %s1014 = scalar_lea.vmem %s1, 448
  %v1015 = vld [vmem:[%s1014] sm:$0xff]
  %1017 = vset.pattern.permute.xlu0 0
  %1018 = vperm.xlu0 %1017, %v1015
  %v1019 = vpop.permute.xlu0 %1018
  %v1021 = vlaneseq
  %v1022 = vshrl.u32 %v1021, 7
  %v1023 = vsub.s32 6, %v1022
  %v1024 = vrot.slane %v824, %v1023
  %v1025 = vlaneseq
  %v1026 = vshrl.u32 %v1025, 7
  %v1027 = vsub.s32 6, %v1026
  %v1028 = vrot.slane %v825, %v1027
  %v1029 = vmul.f32 %v1019, %v1024
  %v1030 = vmul.f32 %v1019, %v1028
  %v1031 = vadd.f32 %v1000, %v1029
  %v1032 = vadd.f32 %v1001, %v1030
  %v1033 = vlaneseq
  %v1034 = vshrl.u32 %v1033, 7
  %v1035 = vsub.s32 6, %v1034
  %v1036 = vrot.slane %v826, %v1035
  %v1037 = vlaneseq
  %v1038 = vshrl.u32 %v1037, 7
  %v1039 = vsub.s32 6, %v1038
  %v1040 = vrot.slane %v827, %v1039
  %v1041 = vmul.f32 %v1019, %v1036
  %v1042 = vmul.f32 %v1019, %v1040
  %v1043 = vadd.f32 %v1012, %v1041
  %v1044 = vadd.f32 %v1013, %v1042
  %s1045 = scalar_lea.vmem %s1, 520
  %v1046 = vld [vmem:[%s1045] sm:$0xff]
  %1048 = vset.pattern.permute.xlu0 0
  %1049 = vperm.xlu0 %1048, %v1046
  %v1050 = vpop.permute.xlu0 %1049
  %v1052 = vlaneseq
  %v1053 = vshrl.u32 %v1052, 7
  %v1054 = vsub.s32 7, %v1053
  %v1055 = vrot.slane %v824, %v1054
  %v1056 = vlaneseq
  %v1057 = vshrl.u32 %v1056, 7
  %v1058 = vsub.s32 7, %v1057
  %v1059 = vrot.slane %v825, %v1058
  %v1060 = vmul.f32 %v1050, %v1055
  %v1061 = vmul.f32 %v1050, %v1059
  %v1062 = vadd.f32 %v1031, %v1060
  %v1063 = vadd.f32 %v1032, %v1061
  %v1064 = vlaneseq
  %v1065 = vshrl.u32 %v1064, 7
  %v1066 = vsub.s32 7, %v1065
  %v1067 = vrot.slane %v826, %v1066
  %v1068 = vlaneseq
  %v1069 = vshrl.u32 %v1068, 7
  %v1070 = vsub.s32 7, %v1069
  %v1071 = vrot.slane %v827, %v1070
  %v1072 = vmul.f32 %v1050, %v1067
  %v1073 = vmul.f32 %v1050, %v1071
  %v1074 = vadd.f32 %v1043, %v1072
  %v1075 = vadd.f32 %v1044, %v1073
  %1076 = vrot.lane.b32.xlu0 0.0, 1
  %v1077 = vpop.permute.xlu0 %1076
  %1078 = vrot.lane.b32.xlu0 %v14, 1
  %v1079 = vpop.permute.xlu0 %1078
  %1080 = vrot.lane.b32.xlu0 %v15, 1
  %v1081 = vpop.permute.xlu0 %1080
  %1082 = vrot.lane.b32.xlu0 %v16, 1
  %v1083 = vpop.permute.xlu0 %1082
  %1084 = vrot.lane.b32.xlu0 %v17, 1
  %v1085 = vpop.permute.xlu0 %1084
  %vm1086 = vcmask 7168
  %v1087 = vsel %vm1086, %v1077, %v1079
  %v1088 = vsel %vm1086, %v1079, %v1081
  %v1089 = vsel %vm1086, %v1077, %v1083
  %v1090 = vsel %vm1086, %v1083, %v1085
  %v1095 = vsel %vm53, %v1087, 0.0
  %v1096 = vsel %vm54, %v1088, 0.0
  %v1097 = vsel %vm53, %v1089, 0.0
  %v1098 = vsel %vm54, %v1090, 0.0
  %s1099 = scalar_lea.vmem %s1, 24
  %v1100 = vld [vmem:[%s1099] sm:$0xff]
  %1102 = vset.pattern.permute.xlu0 0
  %1103 = vperm.xlu0 %1102, %v1100
  %v1104 = vpop.permute.xlu0 %1103
  %v1106 = vlaneseq
  %v1107 = vshrl.u32 %v1106, 7
  %v1108 = vsub.s32 0, %v1107
  %v1109 = vrot.slane %v1095, %v1108
  %v1110 = vlaneseq
  %v1111 = vshrl.u32 %v1110, 7
  %v1112 = vsub.s32 0, %v1111
  %v1113 = vrot.slane %v1096, %v1112
  %v1114 = vmul.f32 %v1104, %v1109
  %v1115 = vmul.f32 %v1104, %v1113
  %v1116 = vadd.f32 %v1062, %v1114
  %v1117 = vadd.f32 %v1063, %v1115
  %v1118 = vlaneseq
  %v1119 = vshrl.u32 %v1118, 7
  %v1120 = vsub.s32 0, %v1119
  %v1121 = vrot.slane %v1097, %v1120
  %v1122 = vlaneseq
  %v1123 = vshrl.u32 %v1122, 7
  %v1124 = vsub.s32 0, %v1123
  %v1125 = vrot.slane %v1098, %v1124
  %v1126 = vmul.f32 %v1104, %v1121
  %v1127 = vmul.f32 %v1104, %v1125
  %v1128 = vadd.f32 %v1074, %v1126
  %v1129 = vadd.f32 %v1075, %v1127
  %s1130 = scalar_lea.vmem %s1, 96
  %v1131 = vld [vmem:[%s1130] sm:$0xff]
  %1133 = vset.pattern.permute.xlu0 0
  %1134 = vperm.xlu0 %1133, %v1131
  %v1135 = vpop.permute.xlu0 %1134
  %v1137 = vlaneseq
  %v1138 = vshrl.u32 %v1137, 7
  %v1139 = vsub.s32 1, %v1138
  %v1140 = vrot.slane %v1095, %v1139
  %v1141 = vlaneseq
  %v1142 = vshrl.u32 %v1141, 7
  %v1143 = vsub.s32 1, %v1142
  %v1144 = vrot.slane %v1096, %v1143
  %v1145 = vmul.f32 %v1135, %v1140
  %v1146 = vmul.f32 %v1135, %v1144
  %v1147 = vadd.f32 %v1116, %v1145
  %v1148 = vadd.f32 %v1117, %v1146
  %v1149 = vlaneseq
  %v1150 = vshrl.u32 %v1149, 7
  %v1151 = vsub.s32 1, %v1150
  %v1152 = vrot.slane %v1097, %v1151
  %v1153 = vlaneseq
  %v1154 = vshrl.u32 %v1153, 7
  %v1155 = vsub.s32 1, %v1154
  %v1156 = vrot.slane %v1098, %v1155
  %v1157 = vmul.f32 %v1135, %v1152
  %v1158 = vmul.f32 %v1135, %v1156
  %v1159 = vadd.f32 %v1128, %v1157
  %v1160 = vadd.f32 %v1129, %v1158
  %s1161 = scalar_lea.vmem %s1, 168
  %v1162 = vld [vmem:[%s1161] sm:$0xff]
  %1164 = vset.pattern.permute.xlu0 0
  %1165 = vperm.xlu0 %1164, %v1162
  %v1166 = vpop.permute.xlu0 %1165
  %v1168 = vlaneseq
  %v1169 = vshrl.u32 %v1168, 7
  %v1170 = vsub.s32 2, %v1169
  %v1171 = vrot.slane %v1095, %v1170
  %v1172 = vlaneseq
  %v1173 = vshrl.u32 %v1172, 7
  %v1174 = vsub.s32 2, %v1173
  %v1175 = vrot.slane %v1096, %v1174
  %v1176 = vmul.f32 %v1166, %v1171
  %v1177 = vmul.f32 %v1166, %v1175
  %v1178 = vadd.f32 %v1147, %v1176
  %v1179 = vadd.f32 %v1148, %v1177
  %v1180 = vlaneseq
  %v1181 = vshrl.u32 %v1180, 7
  %v1182 = vsub.s32 2, %v1181
  %v1183 = vrot.slane %v1097, %v1182
  %v1184 = vlaneseq
  %v1185 = vshrl.u32 %v1184, 7
  %v1186 = vsub.s32 2, %v1185
  %v1187 = vrot.slane %v1098, %v1186
  %v1188 = vmul.f32 %v1166, %v1183
  %v1189 = vmul.f32 %v1166, %v1187
  %v1190 = vadd.f32 %v1159, %v1188
  %v1191 = vadd.f32 %v1160, %v1189
  %s1192 = scalar_lea.vmem %s1, 240
  %v1193 = vld [vmem:[%s1192] sm:$0xff]
  %1195 = vset.pattern.permute.xlu0 0
  %1196 = vperm.xlu0 %1195, %v1193
  %v1197 = vpop.permute.xlu0 %1196
  %v1199 = vlaneseq
  %v1200 = vshrl.u32 %v1199, 7
  %v1201 = vsub.s32 3, %v1200
  %v1202 = vrot.slane %v1095, %v1201
  %v1203 = vlaneseq
  %v1204 = vshrl.u32 %v1203, 7
  %v1205 = vsub.s32 3, %v1204
  %v1206 = vrot.slane %v1096, %v1205
  %v1207 = vmul.f32 %v1197, %v1202
  %v1208 = vmul.f32 %v1197, %v1206
  %v1209 = vadd.f32 %v1178, %v1207
  %v1210 = vadd.f32 %v1179, %v1208
  %v1211 = vlaneseq
  %v1212 = vshrl.u32 %v1211, 7
  %v1213 = vsub.s32 3, %v1212
  %v1214 = vrot.slane %v1097, %v1213
  %v1215 = vlaneseq
  %v1216 = vshrl.u32 %v1215, 7
  %v1217 = vsub.s32 3, %v1216
  %v1218 = vrot.slane %v1098, %v1217
  %v1219 = vmul.f32 %v1197, %v1214
  %v1220 = vmul.f32 %v1197, %v1218
  %v1221 = vadd.f32 %v1190, %v1219
  %v1222 = vadd.f32 %v1191, %v1220
  %s1223 = scalar_lea.vmem %s1, 312
  %v1224 = vld [vmem:[%s1223] sm:$0xff]
  %1226 = vset.pattern.permute.xlu0 0
  %1227 = vperm.xlu0 %1226, %v1224
  %v1228 = vpop.permute.xlu0 %1227
  %v1230 = vlaneseq
  %v1231 = vshrl.u32 %v1230, 7
  %v1232 = vsub.s32 4, %v1231
  %v1233 = vrot.slane %v1095, %v1232
  %v1234 = vlaneseq
  %v1235 = vshrl.u32 %v1234, 7
  %v1236 = vsub.s32 4, %v1235
  %v1237 = vrot.slane %v1096, %v1236
  %v1238 = vmul.f32 %v1228, %v1233
  %v1239 = vmul.f32 %v1228, %v1237
  %v1240 = vadd.f32 %v1209, %v1238
  %v1241 = vadd.f32 %v1210, %v1239
  %v1242 = vlaneseq
  %v1243 = vshrl.u32 %v1242, 7
  %v1244 = vsub.s32 4, %v1243
  %v1245 = vrot.slane %v1097, %v1244
  %v1246 = vlaneseq
  %v1247 = vshrl.u32 %v1246, 7
  %v1248 = vsub.s32 4, %v1247
  %v1249 = vrot.slane %v1098, %v1248
  %v1250 = vmul.f32 %v1228, %v1245
  %v1251 = vmul.f32 %v1228, %v1249
  %v1252 = vadd.f32 %v1221, %v1250
  %v1253 = vadd.f32 %v1222, %v1251
  %s1254 = scalar_lea.vmem %s1, 384
  %v1255 = vld [vmem:[%s1254] sm:$0xff]
  %1257 = vset.pattern.permute.xlu0 0
  %1258 = vperm.xlu0 %1257, %v1255
  %v1259 = vpop.permute.xlu0 %1258
  %v1261 = vlaneseq
  %v1262 = vshrl.u32 %v1261, 7
  %v1263 = vsub.s32 5, %v1262
  %v1264 = vrot.slane %v1095, %v1263
  %v1265 = vlaneseq
  %v1266 = vshrl.u32 %v1265, 7
  %v1267 = vsub.s32 5, %v1266
  %v1268 = vrot.slane %v1096, %v1267
  %v1269 = vmul.f32 %v1259, %v1264
  %v1270 = vmul.f32 %v1259, %v1268
  %v1271 = vadd.f32 %v1240, %v1269
  %v1272 = vadd.f32 %v1241, %v1270
  %v1273 = vlaneseq
  %v1274 = vshrl.u32 %v1273, 7
  %v1275 = vsub.s32 5, %v1274
  %v1276 = vrot.slane %v1097, %v1275
  %v1277 = vlaneseq
  %v1278 = vshrl.u32 %v1277, 7
  %v1279 = vsub.s32 5, %v1278
  %v1280 = vrot.slane %v1098, %v1279
  %v1281 = vmul.f32 %v1259, %v1276
  %v1282 = vmul.f32 %v1259, %v1280
  %v1283 = vadd.f32 %v1252, %v1281
  %v1284 = vadd.f32 %v1253, %v1282
  %s1285 = scalar_lea.vmem %s1, 456
  %v1286 = vld [vmem:[%s1285] sm:$0xff]
  %1288 = vset.pattern.permute.xlu0 0
  %1289 = vperm.xlu0 %1288, %v1286
  %v1290 = vpop.permute.xlu0 %1289
  %v1292 = vlaneseq
  %v1293 = vshrl.u32 %v1292, 7
  %v1294 = vsub.s32 6, %v1293
  %v1295 = vrot.slane %v1095, %v1294
  %v1296 = vlaneseq
  %v1297 = vshrl.u32 %v1296, 7
  %v1298 = vsub.s32 6, %v1297
  %v1299 = vrot.slane %v1096, %v1298
  %v1300 = vmul.f32 %v1290, %v1295
  %v1301 = vmul.f32 %v1290, %v1299
  %v1302 = vadd.f32 %v1271, %v1300
  %v1303 = vadd.f32 %v1272, %v1301
  %v1304 = vlaneseq
  %v1305 = vshrl.u32 %v1304, 7
  %v1306 = vsub.s32 6, %v1305
  %v1307 = vrot.slane %v1097, %v1306
  %v1308 = vlaneseq
  %v1309 = vshrl.u32 %v1308, 7
  %v1310 = vsub.s32 6, %v1309
  %v1311 = vrot.slane %v1098, %v1310
  %v1312 = vmul.f32 %v1290, %v1307
  %v1313 = vmul.f32 %v1290, %v1311
  %v1314 = vadd.f32 %v1283, %v1312
  %v1315 = vadd.f32 %v1284, %v1313
  %s1316 = scalar_lea.vmem %s1, 528
  %v1317 = vld [vmem:[%s1316] sm:$0xff]
  %1319 = vset.pattern.permute.xlu0 0
  %1320 = vperm.xlu0 %1319, %v1317
  %v1321 = vpop.permute.xlu0 %1320
  %v1323 = vlaneseq
  %v1324 = vshrl.u32 %v1323, 7
  %v1325 = vsub.s32 7, %v1324
  %v1326 = vrot.slane %v1095, %v1325
  %v1327 = vlaneseq
  %v1328 = vshrl.u32 %v1327, 7
  %v1329 = vsub.s32 7, %v1328
  %v1330 = vrot.slane %v1096, %v1329
  %v1331 = vmul.f32 %v1321, %v1326
  %v1332 = vmul.f32 %v1321, %v1330
  %v1333 = vadd.f32 %v1302, %v1331
  %v1334 = vadd.f32 %v1303, %v1332
  %v1335 = vlaneseq
  %v1336 = vshrl.u32 %v1335, 7
  %v1337 = vsub.s32 7, %v1336
  %v1338 = vrot.slane %v1097, %v1337
  %v1339 = vlaneseq
  %v1340 = vshrl.u32 %v1339, 7
  %v1341 = vsub.s32 7, %v1340
  %v1342 = vrot.slane %v1098, %v1341
  %v1343 = vmul.f32 %v1321, %v1338
  %v1344 = vmul.f32 %v1321, %v1342
  %v1345 = vadd.f32 %v1314, %v1343
  %v1346 = vadd.f32 %v1315, %v1344
  %s1347 = scalar_lea.vmem %s1, 32
  %v1348 = vld [vmem:[%s1347] sm:$0xff]
  %1350 = vset.pattern.permute.xlu0 0
  %1351 = vperm.xlu0 %1350, %v1348
  %v1352 = vpop.permute.xlu0 %1351
  %v1354 = vmul.f32 %v1352, %v343
  %v1355 = vmul.f32 %v1352, %v347
  %v1356 = vadd.f32 %v1333, %v1354
  %v1357 = vadd.f32 %v1334, %v1355
  %v1358 = vmul.f32 %v1352, %v370
  %v1359 = vmul.f32 %v1352, %v374
  %v1360 = vadd.f32 %v1345, %v1358
  %v1361 = vadd.f32 %v1346, %v1359
  %s1362 = scalar_lea.vmem %s1, 104
  %v1363 = vld [vmem:[%s1362] sm:$0xff]
  %1365 = vset.pattern.permute.xlu0 0
  %1366 = vperm.xlu0 %1365, %v1363
  %v1367 = vpop.permute.xlu0 %1366
  %v1369 = vmul.f32 %v1367, %v402
  %v1370 = vmul.f32 %v1367, %v406
  %v1371 = vadd.f32 %v1356, %v1369
  %v1372 = vadd.f32 %v1357, %v1370
  %v1373 = vmul.f32 %v1367, %v428
  %v1374 = vmul.f32 %v1367, %v432
  %v1375 = vadd.f32 %v1360, %v1373
  %v1376 = vadd.f32 %v1361, %v1374
  %s1377 = scalar_lea.vmem %s1, 176
  %v1378 = vld [vmem:[%s1377] sm:$0xff]
  %1380 = vset.pattern.permute.xlu0 0
  %1381 = vperm.xlu0 %1380, %v1378
  %v1382 = vpop.permute.xlu0 %1381
  %v1384 = vmul.f32 %v1382, %v460
  %v1385 = vmul.f32 %v1382, %v464
  %v1386 = vadd.f32 %v1371, %v1384
  %v1387 = vadd.f32 %v1372, %v1385
  %v1388 = vmul.f32 %v1382, %v486
  %v1389 = vmul.f32 %v1382, %v490
  %v1390 = vadd.f32 %v1375, %v1388
  %v1391 = vadd.f32 %v1376, %v1389
  %s1392 = scalar_lea.vmem %s1, 248
  %v1393 = vld [vmem:[%s1392] sm:$0xff]
  %1395 = vset.pattern.permute.xlu0 0
  %1396 = vperm.xlu0 %1395, %v1393
  %v1397 = vpop.permute.xlu0 %1396
  %v1399 = vmul.f32 %v1397, %v518
  %v1400 = vmul.f32 %v1397, %v522
  %v1401 = vadd.f32 %v1386, %v1399
  %v1402 = vadd.f32 %v1387, %v1400
  %v1403 = vmul.f32 %v1397, %v544
  %v1404 = vmul.f32 %v1397, %v548
  %v1405 = vadd.f32 %v1390, %v1403
  %v1406 = vadd.f32 %v1391, %v1404
  %s1407 = scalar_lea.vmem %s1, 320
  %v1408 = vld [vmem:[%s1407] sm:$0xff]
  %1410 = vset.pattern.permute.xlu0 0
  %1411 = vperm.xlu0 %1410, %v1408
  %v1412 = vpop.permute.xlu0 %1411
  %v1414 = vmul.f32 %v1412, %v576
  %v1415 = vmul.f32 %v1412, %v580
  %v1416 = vadd.f32 %v1401, %v1414
  %v1417 = vadd.f32 %v1402, %v1415
  %v1418 = vmul.f32 %v1412, %v602
  %v1419 = vmul.f32 %v1412, %v606
  %v1420 = vadd.f32 %v1405, %v1418
  %v1421 = vadd.f32 %v1406, %v1419
  %s1422 = scalar_lea.vmem %s1, 392
  %v1423 = vld [vmem:[%s1422] sm:$0xff]
  %1425 = vset.pattern.permute.xlu0 0
  %1426 = vperm.xlu0 %1425, %v1423
  %v1427 = vpop.permute.xlu0 %1426
  %v1429 = vmul.f32 %v1427, %v634
  %v1430 = vmul.f32 %v1427, %v638
  %v1431 = vadd.f32 %v1416, %v1429
  %v1432 = vadd.f32 %v1417, %v1430
  %v1433 = vmul.f32 %v1427, %v660
  %v1434 = vmul.f32 %v1427, %v664
  %v1435 = vadd.f32 %v1420, %v1433
  %v1436 = vadd.f32 %v1421, %v1434
  %s1437 = scalar_lea.vmem %s1, 464
  %v1438 = vld [vmem:[%s1437] sm:$0xff]
  %1440 = vset.pattern.permute.xlu0 0
  %1441 = vperm.xlu0 %1440, %v1438
  %v1442 = vpop.permute.xlu0 %1441
  %v1444 = vmul.f32 %v1442, %v692
  %v1445 = vmul.f32 %v1442, %v696
  %v1446 = vadd.f32 %v1431, %v1444
  %v1447 = vadd.f32 %v1432, %v1445
  %v1448 = vmul.f32 %v1442, %v718
  %v1449 = vmul.f32 %v1442, %v722
  %v1450 = vadd.f32 %v1435, %v1448
  %v1451 = vadd.f32 %v1436, %v1449
  %s1452 = scalar_lea.vmem %s1, 536
  %v1453 = vld [vmem:[%s1452] sm:$0xff]
  %1455 = vset.pattern.permute.xlu0 0
  %1456 = vperm.xlu0 %1455, %v1453
  %v1457 = vpop.permute.xlu0 %1456
  %v1459 = vmul.f32 %v1457, %v750
  %v1460 = vmul.f32 %v1457, %v754
  %v1461 = vadd.f32 %v1446, %v1459
  %v1462 = vadd.f32 %v1447, %v1460
  %v1463 = vmul.f32 %v1457, %v776
  %v1464 = vmul.f32 %v1457, %v780
  %v1465 = vadd.f32 %v1450, %v1463
  %v1466 = vadd.f32 %v1451, %v1464
  %1467 = vrot.lane.b32.xlu0 %v14, 127
  %v1468 = vpop.permute.xlu0 %1467
  %1469 = vrot.lane.b32.xlu0 %v15, 127
  %v1470 = vpop.permute.xlu0 %1469
  %1471 = vrot.lane.b32.xlu0 0.0, 127
  %v1472 = vpop.permute.xlu0 %1471
  %1473 = vrot.lane.b32.xlu0 %v16, 127
  %v1474 = vpop.permute.xlu0 %1473
  %1475 = vrot.lane.b32.xlu0 %v17, 127
  %v1476 = vpop.permute.xlu0 %1475
  %vm1477 = vcmask 1039360
  %v1478 = vsel %vm1477, %v1468, %v1470
  %v1479 = vsel %vm1477, %v1470, %v1472
  %v1480 = vsel %vm1477, %v1474, %v1476
  %v1481 = vsel %vm1477, %v1476, %v1472
  %v1486 = vsel %vm803, %v1478, 0.0
  %v1487 = vsel %vm804, %v1479, 0.0
  %v1488 = vsel %vm803, %v1480, 0.0
  %v1489 = vsel %vm804, %v1481, 0.0
  %s1490 = scalar_lea.vmem %s1, 40
  %v1491 = vld [vmem:[%s1490] sm:$0xff]
  %1493 = vset.pattern.permute.xlu0 0
  %1494 = vperm.xlu0 %1493, %v1491
  %v1495 = vpop.permute.xlu0 %1494
  %v1497 = vlaneseq
  %v1498 = vshrl.u32 %v1497, 7
  %v1499 = vsub.s32 0, %v1498
  %v1500 = vrot.slane %v1486, %v1499
  %v1501 = vlaneseq
  %v1502 = vshrl.u32 %v1501, 7
  %v1503 = vsub.s32 0, %v1502
  %v1504 = vrot.slane %v1487, %v1503
  %v1505 = vmul.f32 %v1495, %v1500
  %v1506 = vmul.f32 %v1495, %v1504
  %v1507 = vadd.f32 %v1461, %v1505
  %v1508 = vadd.f32 %v1462, %v1506
  %v1509 = vlaneseq
  %v1510 = vshrl.u32 %v1509, 7
  %v1511 = vsub.s32 0, %v1510
  %v1512 = vrot.slane %v1488, %v1511
  %v1513 = vlaneseq
  %v1514 = vshrl.u32 %v1513, 7
  %v1515 = vsub.s32 0, %v1514
  %v1516 = vrot.slane %v1489, %v1515
  %v1517 = vmul.f32 %v1495, %v1512
  %v1518 = vmul.f32 %v1495, %v1516
  %v1519 = vadd.f32 %v1465, %v1517
  %v1520 = vadd.f32 %v1466, %v1518
  %s1521 = scalar_lea.vmem %s1, 112
  %v1522 = vld [vmem:[%s1521] sm:$0xff]
  %1524 = vset.pattern.permute.xlu0 0
  %1525 = vperm.xlu0 %1524, %v1522
  %v1526 = vpop.permute.xlu0 %1525
  %v1528 = vlaneseq
  %v1529 = vshrl.u32 %v1528, 7
  %v1530 = vsub.s32 1, %v1529
  %v1531 = vrot.slane %v1486, %v1530
  %v1532 = vlaneseq
  %v1533 = vshrl.u32 %v1532, 7
  %v1534 = vsub.s32 1, %v1533
  %v1535 = vrot.slane %v1487, %v1534
  %v1536 = vmul.f32 %v1526, %v1531
  %v1537 = vmul.f32 %v1526, %v1535
  %v1538 = vadd.f32 %v1507, %v1536
  %v1539 = vadd.f32 %v1508, %v1537
  %v1540 = vlaneseq
  %v1541 = vshrl.u32 %v1540, 7
  %v1542 = vsub.s32 1, %v1541
  %v1543 = vrot.slane %v1488, %v1542
  %v1544 = vlaneseq
  %v1545 = vshrl.u32 %v1544, 7
  %v1546 = vsub.s32 1, %v1545
  %v1547 = vrot.slane %v1489, %v1546
  %v1548 = vmul.f32 %v1526, %v1543
  %v1549 = vmul.f32 %v1526, %v1547
  %v1550 = vadd.f32 %v1519, %v1548
  %v1551 = vadd.f32 %v1520, %v1549
  %s1552 = scalar_lea.vmem %s1, 184
  %v1553 = vld [vmem:[%s1552] sm:$0xff]
  %1555 = vset.pattern.permute.xlu0 0
  %1556 = vperm.xlu0 %1555, %v1553
  %v1557 = vpop.permute.xlu0 %1556
  %v1559 = vlaneseq
  %v1560 = vshrl.u32 %v1559, 7
  %v1561 = vsub.s32 2, %v1560
  %v1562 = vrot.slane %v1486, %v1561
  %v1563 = vlaneseq
  %v1564 = vshrl.u32 %v1563, 7
  %v1565 = vsub.s32 2, %v1564
  %v1566 = vrot.slane %v1487, %v1565
  %v1567 = vmul.f32 %v1557, %v1562
  %v1568 = vmul.f32 %v1557, %v1566
  %v1569 = vadd.f32 %v1538, %v1567
  %v1570 = vadd.f32 %v1539, %v1568
  %v1571 = vlaneseq
  %v1572 = vshrl.u32 %v1571, 7
  %v1573 = vsub.s32 2, %v1572
  %v1574 = vrot.slane %v1488, %v1573
  %v1575 = vlaneseq
  %v1576 = vshrl.u32 %v1575, 7
  %v1577 = vsub.s32 2, %v1576
  %v1578 = vrot.slane %v1489, %v1577
  %v1579 = vmul.f32 %v1557, %v1574
  %v1580 = vmul.f32 %v1557, %v1578
  %v1581 = vadd.f32 %v1550, %v1579
  %v1582 = vadd.f32 %v1551, %v1580
  %s1583 = scalar_lea.vmem %s1, 256
  %v1584 = vld [vmem:[%s1583] sm:$0xff]
  %1586 = vset.pattern.permute.xlu0 0
  %1587 = vperm.xlu0 %1586, %v1584
  %v1588 = vpop.permute.xlu0 %1587
  %v1590 = vlaneseq
  %v1591 = vshrl.u32 %v1590, 7
  %v1592 = vsub.s32 3, %v1591
  %v1593 = vrot.slane %v1486, %v1592
  %v1594 = vlaneseq
  %v1595 = vshrl.u32 %v1594, 7
  %v1596 = vsub.s32 3, %v1595
  %v1597 = vrot.slane %v1487, %v1596
  %v1598 = vmul.f32 %v1588, %v1593
  %v1599 = vmul.f32 %v1588, %v1597
  %v1600 = vadd.f32 %v1569, %v1598
  %v1601 = vadd.f32 %v1570, %v1599
  %v1602 = vlaneseq
  %v1603 = vshrl.u32 %v1602, 7
  %v1604 = vsub.s32 3, %v1603
  %v1605 = vrot.slane %v1488, %v1604
  %v1606 = vlaneseq
  %v1607 = vshrl.u32 %v1606, 7
  %v1608 = vsub.s32 3, %v1607
  %v1609 = vrot.slane %v1489, %v1608
  %v1610 = vmul.f32 %v1588, %v1605
  %v1611 = vmul.f32 %v1588, %v1609
  %v1612 = vadd.f32 %v1581, %v1610
  %v1613 = vadd.f32 %v1582, %v1611
  %s1614 = scalar_lea.vmem %s1, 328
  %v1615 = vld [vmem:[%s1614] sm:$0xff]
  %1617 = vset.pattern.permute.xlu0 0
  %1618 = vperm.xlu0 %1617, %v1615
  %v1619 = vpop.permute.xlu0 %1618
  %v1621 = vlaneseq
  %v1622 = vshrl.u32 %v1621, 7
  %v1623 = vsub.s32 4, %v1622
  %v1624 = vrot.slane %v1486, %v1623
  %v1625 = vlaneseq
  %v1626 = vshrl.u32 %v1625, 7
  %v1627 = vsub.s32 4, %v1626
  %v1628 = vrot.slane %v1487, %v1627
  %v1629 = vmul.f32 %v1619, %v1624
  %v1630 = vmul.f32 %v1619, %v1628
  %v1631 = vadd.f32 %v1600, %v1629
  %v1632 = vadd.f32 %v1601, %v1630
  %v1633 = vlaneseq
  %v1634 = vshrl.u32 %v1633, 7
  %v1635 = vsub.s32 4, %v1634
  %v1636 = vrot.slane %v1488, %v1635
  %v1637 = vlaneseq
  %v1638 = vshrl.u32 %v1637, 7
  %v1639 = vsub.s32 4, %v1638
  %v1640 = vrot.slane %v1489, %v1639
  %v1641 = vmul.f32 %v1619, %v1636
  %v1642 = vmul.f32 %v1619, %v1640
  %v1643 = vadd.f32 %v1612, %v1641
  %v1644 = vadd.f32 %v1613, %v1642
  %s1645 = scalar_lea.vmem %s1, 400
  %v1646 = vld [vmem:[%s1645] sm:$0xff]
  %1648 = vset.pattern.permute.xlu0 0
  %1649 = vperm.xlu0 %1648, %v1646
  %v1650 = vpop.permute.xlu0 %1649
  %v1652 = vlaneseq
  %v1653 = vshrl.u32 %v1652, 7
  %v1654 = vsub.s32 5, %v1653
  %v1655 = vrot.slane %v1486, %v1654
  %v1656 = vlaneseq
  %v1657 = vshrl.u32 %v1656, 7
  %v1658 = vsub.s32 5, %v1657
  %v1659 = vrot.slane %v1487, %v1658
  %v1660 = vmul.f32 %v1650, %v1655
  %v1661 = vmul.f32 %v1650, %v1659
  %v1662 = vadd.f32 %v1631, %v1660
  %v1663 = vadd.f32 %v1632, %v1661
  %v1664 = vlaneseq
  %v1665 = vshrl.u32 %v1664, 7
  %v1666 = vsub.s32 5, %v1665
  %v1667 = vrot.slane %v1488, %v1666
  %v1668 = vlaneseq
  %v1669 = vshrl.u32 %v1668, 7
  %v1670 = vsub.s32 5, %v1669
  %v1671 = vrot.slane %v1489, %v1670
  %v1672 = vmul.f32 %v1650, %v1667
  %v1673 = vmul.f32 %v1650, %v1671
  %v1674 = vadd.f32 %v1643, %v1672
  %v1675 = vadd.f32 %v1644, %v1673
  %s1676 = scalar_lea.vmem %s1, 472
  %v1677 = vld [vmem:[%s1676] sm:$0xff]
  %1679 = vset.pattern.permute.xlu0 0
  %1680 = vperm.xlu0 %1679, %v1677
  %v1681 = vpop.permute.xlu0 %1680
  %v1683 = vlaneseq
  %v1684 = vshrl.u32 %v1683, 7
  %v1685 = vsub.s32 6, %v1684
  %v1686 = vrot.slane %v1486, %v1685
  %v1687 = vlaneseq
  %v1688 = vshrl.u32 %v1687, 7
  %v1689 = vsub.s32 6, %v1688
  %v1690 = vrot.slane %v1487, %v1689
  %v1691 = vmul.f32 %v1681, %v1686
  %v1692 = vmul.f32 %v1681, %v1690
  %v1693 = vadd.f32 %v1662, %v1691
  %v1694 = vadd.f32 %v1663, %v1692
  %v1695 = vlaneseq
  %v1696 = vshrl.u32 %v1695, 7
  %v1697 = vsub.s32 6, %v1696
  %v1698 = vrot.slane %v1488, %v1697
  %v1699 = vlaneseq
  %v1700 = vshrl.u32 %v1699, 7
  %v1701 = vsub.s32 6, %v1700
  %v1702 = vrot.slane %v1489, %v1701
  %v1703 = vmul.f32 %v1681, %v1698
  %v1704 = vmul.f32 %v1681, %v1702
  %v1705 = vadd.f32 %v1674, %v1703
  %v1706 = vadd.f32 %v1675, %v1704
  %s1707 = scalar_lea.vmem %s1, 544
  %v1708 = vld [vmem:[%s1707] sm:$0xff]
  %1710 = vset.pattern.permute.xlu0 0
  %1711 = vperm.xlu0 %1710, %v1708
  %v1712 = vpop.permute.xlu0 %1711
  %v1714 = vlaneseq
  %v1715 = vshrl.u32 %v1714, 7
  %v1716 = vsub.s32 7, %v1715
  %v1717 = vrot.slane %v1486, %v1716
  %v1718 = vlaneseq
  %v1719 = vshrl.u32 %v1718, 7
  %v1720 = vsub.s32 7, %v1719
  %v1721 = vrot.slane %v1487, %v1720
  %v1722 = vmul.f32 %v1712, %v1717
  %v1723 = vmul.f32 %v1712, %v1721
  %v1724 = vadd.f32 %v1693, %v1722
  %v1725 = vadd.f32 %v1694, %v1723
  %v1726 = vlaneseq
  %v1727 = vshrl.u32 %v1726, 7
  %v1728 = vsub.s32 7, %v1727
  %v1729 = vrot.slane %v1488, %v1728
  %v1730 = vlaneseq
  %v1731 = vshrl.u32 %v1730, 7
  %v1732 = vsub.s32 7, %v1731
  %v1733 = vrot.slane %v1489, %v1732
  %v1734 = vmul.f32 %v1712, %v1729
  %v1735 = vmul.f32 %v1712, %v1733
  %v1736 = vadd.f32 %v1705, %v1734
  %v1737 = vadd.f32 %v1706, %v1735
  %1738 = vrot.lane.b32.xlu0 %v14, 113
  %v1739 = vpop.permute.xlu0 %1738
  %1740 = vrot.lane.b32.xlu0 %v15, 113
  %v1741 = vpop.permute.xlu0 %1740
  %1742 = vrot.lane.b32.xlu0 0.0, 113
  %v1743 = vpop.permute.xlu0 %1742
  %1744 = vrot.lane.b32.xlu0 %v16, 113
  %v1745 = vpop.permute.xlu0 %1744
  %1746 = vrot.lane.b32.xlu0 %v17, 113
  %v1747 = vpop.permute.xlu0 %1746
  %vm1748 = vcmask 924672
  %v1749 = vsel %vm1748, %v1739, %v1741
  %v1750 = vsel %vm1748, %v1741, %v1743
  %v1751 = vsel %vm1748, %v1745, %v1747
  %v1752 = vsel %vm1748, %v1747, %v1743
  %v1757 = vsel %vm53, %v1749, 0.0
  %v1758 = vsel %vm54, %v1750, 0.0
  %v1759 = vsel %vm53, %v1751, 0.0
  %v1760 = vsel %vm54, %v1752, 0.0
  %s1761 = scalar_lea.vmem %s1, 48
  %v1762 = vld [vmem:[%s1761] sm:$0xff]
  %1764 = vset.pattern.permute.xlu0 0
  %1765 = vperm.xlu0 %1764, %v1762
  %v1766 = vpop.permute.xlu0 %1765
  %v1768 = vlaneseq
  %v1769 = vshrl.u32 %v1768, 7
  %v1770 = vsub.s32 0, %v1769
  %v1771 = vrot.slane %v1757, %v1770
  %v1772 = vlaneseq
  %v1773 = vshrl.u32 %v1772, 7
  %v1774 = vsub.s32 0, %v1773
  %v1775 = vrot.slane %v1758, %v1774
  %v1776 = vmul.f32 %v1766, %v1771
  %v1777 = vmul.f32 %v1766, %v1775
  %v1778 = vadd.f32 %v1724, %v1776
  %v1779 = vadd.f32 %v1725, %v1777
  %v1780 = vlaneseq
  %v1781 = vshrl.u32 %v1780, 7
  %v1782 = vsub.s32 0, %v1781
  %v1783 = vrot.slane %v1759, %v1782
  %v1784 = vlaneseq
  %v1785 = vshrl.u32 %v1784, 7
  %v1786 = vsub.s32 0, %v1785
  %v1787 = vrot.slane %v1760, %v1786
  %v1788 = vmul.f32 %v1766, %v1783
  %v1789 = vmul.f32 %v1766, %v1787
  %v1790 = vadd.f32 %v1736, %v1788
  %v1791 = vadd.f32 %v1737, %v1789
  %s1792 = scalar_lea.vmem %s1, 120
  %v1793 = vld [vmem:[%s1792] sm:$0xff]
  %1795 = vset.pattern.permute.xlu0 0
  %1796 = vperm.xlu0 %1795, %v1793
  %v1797 = vpop.permute.xlu0 %1796
  %v1799 = vlaneseq
  %v1800 = vshrl.u32 %v1799, 7
  %v1801 = vsub.s32 1, %v1800
  %v1802 = vrot.slane %v1757, %v1801
  %v1803 = vlaneseq
  %v1804 = vshrl.u32 %v1803, 7
  %v1805 = vsub.s32 1, %v1804
  %v1806 = vrot.slane %v1758, %v1805
  %v1807 = vmul.f32 %v1797, %v1802
  %v1808 = vmul.f32 %v1797, %v1806
  %v1809 = vadd.f32 %v1778, %v1807
  %v1810 = vadd.f32 %v1779, %v1808
  %v1811 = vlaneseq
  %v1812 = vshrl.u32 %v1811, 7
  %v1813 = vsub.s32 1, %v1812
  %v1814 = vrot.slane %v1759, %v1813
  %v1815 = vlaneseq
  %v1816 = vshrl.u32 %v1815, 7
  %v1817 = vsub.s32 1, %v1816
  %v1818 = vrot.slane %v1760, %v1817
  %v1819 = vmul.f32 %v1797, %v1814
  %v1820 = vmul.f32 %v1797, %v1818
  %v1821 = vadd.f32 %v1790, %v1819
  %v1822 = vadd.f32 %v1791, %v1820
  %s1823 = scalar_lea.vmem %s1, 192
  %v1824 = vld [vmem:[%s1823] sm:$0xff]
  %1826 = vset.pattern.permute.xlu0 0
  %1827 = vperm.xlu0 %1826, %v1824
  %v1828 = vpop.permute.xlu0 %1827
  %v1830 = vlaneseq
  %v1831 = vshrl.u32 %v1830, 7
  %v1832 = vsub.s32 2, %v1831
  %v1833 = vrot.slane %v1757, %v1832
  %v1834 = vlaneseq
  %v1835 = vshrl.u32 %v1834, 7
  %v1836 = vsub.s32 2, %v1835
  %v1837 = vrot.slane %v1758, %v1836
  %v1838 = vmul.f32 %v1828, %v1833
  %v1839 = vmul.f32 %v1828, %v1837
  %v1840 = vadd.f32 %v1809, %v1838
  %v1841 = vadd.f32 %v1810, %v1839
  %v1842 = vlaneseq
  %v1843 = vshrl.u32 %v1842, 7
  %v1844 = vsub.s32 2, %v1843
  %v1845 = vrot.slane %v1759, %v1844
  %v1846 = vlaneseq
  %v1847 = vshrl.u32 %v1846, 7
  %v1848 = vsub.s32 2, %v1847
  %v1849 = vrot.slane %v1760, %v1848
  %v1850 = vmul.f32 %v1828, %v1845
  %v1851 = vmul.f32 %v1828, %v1849
  %v1852 = vadd.f32 %v1821, %v1850
  %v1853 = vadd.f32 %v1822, %v1851
  %s1854 = scalar_lea.vmem %s1, 264
  %v1855 = vld [vmem:[%s1854] sm:$0xff]
  %1857 = vset.pattern.permute.xlu0 0
  %1858 = vperm.xlu0 %1857, %v1855
  %v1859 = vpop.permute.xlu0 %1858
  %v1861 = vlaneseq
  %v1862 = vshrl.u32 %v1861, 7
  %v1863 = vsub.s32 3, %v1862
  %v1864 = vrot.slane %v1757, %v1863
  %v1865 = vlaneseq
  %v1866 = vshrl.u32 %v1865, 7
  %v1867 = vsub.s32 3, %v1866
  %v1868 = vrot.slane %v1758, %v1867
  %v1869 = vmul.f32 %v1859, %v1864
  %v1870 = vmul.f32 %v1859, %v1868
  %v1871 = vadd.f32 %v1840, %v1869
  %v1872 = vadd.f32 %v1841, %v1870
  %v1873 = vlaneseq
  %v1874 = vshrl.u32 %v1873, 7
  %v1875 = vsub.s32 3, %v1874
  %v1876 = vrot.slane %v1759, %v1875
  %v1877 = vlaneseq
  %v1878 = vshrl.u32 %v1877, 7
  %v1879 = vsub.s32 3, %v1878
  %v1880 = vrot.slane %v1760, %v1879
  %v1881 = vmul.f32 %v1859, %v1876
  %v1882 = vmul.f32 %v1859, %v1880
  %v1883 = vadd.f32 %v1852, %v1881
  %v1884 = vadd.f32 %v1853, %v1882
  %s1885 = scalar_lea.vmem %s1, 336
  %v1886 = vld [vmem:[%s1885] sm:$0xff]
  %1888 = vset.pattern.permute.xlu0 0
  %1889 = vperm.xlu0 %1888, %v1886
  %v1890 = vpop.permute.xlu0 %1889
  %v1892 = vlaneseq
  %v1893 = vshrl.u32 %v1892, 7
  %v1894 = vsub.s32 4, %v1893
  %v1895 = vrot.slane %v1757, %v1894
  %v1896 = vlaneseq
  %v1897 = vshrl.u32 %v1896, 7
  %v1898 = vsub.s32 4, %v1897
  %v1899 = vrot.slane %v1758, %v1898
  %v1900 = vmul.f32 %v1890, %v1895
  %v1901 = vmul.f32 %v1890, %v1899
  %v1902 = vadd.f32 %v1871, %v1900
  %v1903 = vadd.f32 %v1872, %v1901
  %v1904 = vlaneseq
  %v1905 = vshrl.u32 %v1904, 7
  %v1906 = vsub.s32 4, %v1905
  %v1907 = vrot.slane %v1759, %v1906
  %v1908 = vlaneseq
  %v1909 = vshrl.u32 %v1908, 7
  %v1910 = vsub.s32 4, %v1909
  %v1911 = vrot.slane %v1760, %v1910
  %v1912 = vmul.f32 %v1890, %v1907
  %v1913 = vmul.f32 %v1890, %v1911
  %v1914 = vadd.f32 %v1883, %v1912
  %v1915 = vadd.f32 %v1884, %v1913
  %s1916 = scalar_lea.vmem %s1, 408
  %v1917 = vld [vmem:[%s1916] sm:$0xff]
  %1919 = vset.pattern.permute.xlu0 0
  %1920 = vperm.xlu0 %1919, %v1917
  %v1921 = vpop.permute.xlu0 %1920
  %v1923 = vlaneseq
  %v1924 = vshrl.u32 %v1923, 7
  %v1925 = vsub.s32 5, %v1924
  %v1926 = vrot.slane %v1757, %v1925
  %v1927 = vlaneseq
  %v1928 = vshrl.u32 %v1927, 7
  %v1929 = vsub.s32 5, %v1928
  %v1930 = vrot.slane %v1758, %v1929
  %v1931 = vmul.f32 %v1921, %v1926
  %v1932 = vmul.f32 %v1921, %v1930
  %v1933 = vadd.f32 %v1902, %v1931
  %v1934 = vadd.f32 %v1903, %v1932
  %v1935 = vlaneseq
  %v1936 = vshrl.u32 %v1935, 7
  %v1937 = vsub.s32 5, %v1936
  %v1938 = vrot.slane %v1759, %v1937
  %v1939 = vlaneseq
  %v1940 = vshrl.u32 %v1939, 7
  %v1941 = vsub.s32 5, %v1940
  %v1942 = vrot.slane %v1760, %v1941
  %v1943 = vmul.f32 %v1921, %v1938
  %v1944 = vmul.f32 %v1921, %v1942
  %v1945 = vadd.f32 %v1914, %v1943
  %v1946 = vadd.f32 %v1915, %v1944
  %s1947 = scalar_lea.vmem %s1, 480
  %v1948 = vld [vmem:[%s1947] sm:$0xff]
  %1950 = vset.pattern.permute.xlu0 0
  %1951 = vperm.xlu0 %1950, %v1948
  %v1952 = vpop.permute.xlu0 %1951
  %v1954 = vlaneseq
  %v1955 = vshrl.u32 %v1954, 7
  %v1956 = vsub.s32 6, %v1955
  %v1957 = vrot.slane %v1757, %v1956
  %v1958 = vlaneseq
  %v1959 = vshrl.u32 %v1958, 7
  %v1960 = vsub.s32 6, %v1959
  %v1961 = vrot.slane %v1758, %v1960
  %v1962 = vmul.f32 %v1952, %v1957
  %v1963 = vmul.f32 %v1952, %v1961
  %v1964 = vadd.f32 %v1933, %v1962
  %v1965 = vadd.f32 %v1934, %v1963
  %v1966 = vlaneseq
  %v1967 = vshrl.u32 %v1966, 7
  %v1968 = vsub.s32 6, %v1967
  %v1969 = vrot.slane %v1759, %v1968
  %v1970 = vlaneseq
  %v1971 = vshrl.u32 %v1970, 7
  %v1972 = vsub.s32 6, %v1971
  %v1973 = vrot.slane %v1760, %v1972
  %v1974 = vmul.f32 %v1952, %v1969
  %v1975 = vmul.f32 %v1952, %v1973
  %v1976 = vadd.f32 %v1945, %v1974
  %v1977 = vadd.f32 %v1946, %v1975
  %s1978 = scalar_lea.vmem %s1, 552
  %v1979 = vld [vmem:[%s1978] sm:$0xff]
  %1981 = vset.pattern.permute.xlu0 0
  %1982 = vperm.xlu0 %1981, %v1979
  %v1983 = vpop.permute.xlu0 %1982
  %v1985 = vlaneseq
  %v1986 = vshrl.u32 %v1985, 7
  %v1987 = vsub.s32 7, %v1986
  %v1988 = vrot.slane %v1757, %v1987
  %v1989 = vlaneseq
  %v1990 = vshrl.u32 %v1989, 7
  %v1991 = vsub.s32 7, %v1990
  %v1992 = vrot.slane %v1758, %v1991
  %v1993 = vmul.f32 %v1983, %v1988
  %v1994 = vmul.f32 %v1983, %v1992
  %v1995 = vadd.f32 %v1964, %v1993
  %v1996 = vadd.f32 %v1965, %v1994
  %v1997 = vlaneseq
  %v1998 = vshrl.u32 %v1997, 7
  %v1999 = vsub.s32 7, %v1998
  %v2000 = vrot.slane %v1759, %v1999
  %v2001 = vlaneseq
  %v2002 = vshrl.u32 %v2001, 7
  %v2003 = vsub.s32 7, %v2002
  %v2004 = vrot.slane %v1760, %v2003
  %v2005 = vmul.f32 %v1983, %v2000
  %v2006 = vmul.f32 %v1983, %v2004
  %v2007 = vadd.f32 %v1976, %v2005
  %v2008 = vadd.f32 %v1977, %v2006
  %s2009 = scalar_lea.vmem %s1, 56
  %v2010 = vld [vmem:[%s2009] sm:$0xff]
  %2012 = vset.pattern.permute.xlu0 0
  %2013 = vperm.xlu0 %2012, %v2010
  %v2014 = vpop.permute.xlu0 %2013
  %v2016 = vmul.f32 %v2014, %v343
  %v2017 = vmul.f32 %v2014, %v347
  %v2018 = vmul.f32 %v2014, 0.0
  %2022 = vrot.lane.b32.xlu0 %v2016, 112
  %v2023 = vpop.permute.xlu0 %2022
  %2024 = vrot.lane.b32.xlu0 %v2017, 112
  %v2025 = vpop.permute.xlu0 %2024
  %2026 = vrot.lane.b32.xlu0 %v2018, 112
  %v2027 = vpop.permute.xlu0 %2026
  %vm2028 = vcmask 916480
  %v2029 = vsel %vm2028, %v2023, %v2025
  %v2030 = vsel %vm2028, %v2025, %v2027
  %v2033 = vadd.f32 %v1995, %v2029
  %v2034 = vadd.f32 %v1996, %v2030
  %v2035 = vmul.f32 %v2014, %v370
  %v2036 = vmul.f32 %v2014, %v374
  %2039 = vrot.lane.b32.xlu0 %v2035, 112
  %v2040 = vpop.permute.xlu0 %2039
  %2041 = vrot.lane.b32.xlu0 %v2036, 112
  %v2042 = vpop.permute.xlu0 %2041
  %v2043 = vsel %vm2028, %v2040, %v2042
  %v2044 = vsel %vm2028, %v2042, %v2027
  %v2047 = vadd.f32 %v2007, %v2043
  %v2048 = vadd.f32 %v2008, %v2044
  %s2049 = scalar_lea.vmem %s1, 128
  %v2050 = vld [vmem:[%s2049] sm:$0xff]
  %2052 = vset.pattern.permute.xlu0 0
  %2053 = vperm.xlu0 %2052, %v2050
  %v2054 = vpop.permute.xlu0 %2053
  %v2056 = vmul.f32 %v2054, %v402
  %v2057 = vmul.f32 %v2054, %v406
  %v2058 = vmul.f32 %v2054, 0.0
  %2062 = vrot.lane.b32.xlu0 %v2056, 112
  %v2063 = vpop.permute.xlu0 %2062
  %2064 = vrot.lane.b32.xlu0 %v2057, 112
  %v2065 = vpop.permute.xlu0 %2064
  %2066 = vrot.lane.b32.xlu0 %v2058, 112
  %v2067 = vpop.permute.xlu0 %2066
  %v2068 = vsel %vm2028, %v2063, %v2065
  %v2069 = vsel %vm2028, %v2065, %v2067
  %v2072 = vadd.f32 %v2033, %v2068
  %v2073 = vadd.f32 %v2034, %v2069
  %v2074 = vmul.f32 %v2054, %v428
  %v2075 = vmul.f32 %v2054, %v432
  %2078 = vrot.lane.b32.xlu0 %v2074, 112
  %v2079 = vpop.permute.xlu0 %2078
  %2080 = vrot.lane.b32.xlu0 %v2075, 112
  %v2081 = vpop.permute.xlu0 %2080
  %v2082 = vsel %vm2028, %v2079, %v2081
  %v2083 = vsel %vm2028, %v2081, %v2067
  %v2086 = vadd.f32 %v2047, %v2082
  %v2087 = vadd.f32 %v2048, %v2083
  %s2088 = scalar_lea.vmem %s1, 200
  %v2089 = vld [vmem:[%s2088] sm:$0xff]
  %2091 = vset.pattern.permute.xlu0 0
  %2092 = vperm.xlu0 %2091, %v2089
  %v2093 = vpop.permute.xlu0 %2092
  %v2095 = vmul.f32 %v2093, %v460
  %v2096 = vmul.f32 %v2093, %v464
  %v2097 = vmul.f32 %v2093, 0.0
  %2101 = vrot.lane.b32.xlu0 %v2095, 112
  %v2102 = vpop.permute.xlu0 %2101
  %2103 = vrot.lane.b32.xlu0 %v2096, 112
  %v2104 = vpop.permute.xlu0 %2103
  %2105 = vrot.lane.b32.xlu0 %v2097, 112
  %v2106 = vpop.permute.xlu0 %2105
  %v2107 = vsel %vm2028, %v2102, %v2104
  %v2108 = vsel %vm2028, %v2104, %v2106
  %v2111 = vadd.f32 %v2072, %v2107
  %v2112 = vadd.f32 %v2073, %v2108
  %v2113 = vmul.f32 %v2093, %v486
  %v2114 = vmul.f32 %v2093, %v490
  %2117 = vrot.lane.b32.xlu0 %v2113, 112
  %v2118 = vpop.permute.xlu0 %2117
  %2119 = vrot.lane.b32.xlu0 %v2114, 112
  %v2120 = vpop.permute.xlu0 %2119
  %v2121 = vsel %vm2028, %v2118, %v2120
  %v2122 = vsel %vm2028, %v2120, %v2106
  %v2125 = vadd.f32 %v2086, %v2121
  %v2126 = vadd.f32 %v2087, %v2122
  %s2127 = scalar_lea.vmem %s1, 272
  %v2128 = vld [vmem:[%s2127] sm:$0xff]
  %2130 = vset.pattern.permute.xlu0 0
  %2131 = vperm.xlu0 %2130, %v2128
  %v2132 = vpop.permute.xlu0 %2131
  %v2134 = vmul.f32 %v2132, %v518
  %v2135 = vmul.f32 %v2132, %v522
  %v2136 = vmul.f32 %v2132, 0.0
  %2140 = vrot.lane.b32.xlu0 %v2134, 112
  %v2141 = vpop.permute.xlu0 %2140
  %2142 = vrot.lane.b32.xlu0 %v2135, 112
  %v2143 = vpop.permute.xlu0 %2142
  %2144 = vrot.lane.b32.xlu0 %v2136, 112
  %v2145 = vpop.permute.xlu0 %2144
  %v2146 = vsel %vm2028, %v2141, %v2143
  %v2147 = vsel %vm2028, %v2143, %v2145
  %v2150 = vadd.f32 %v2111, %v2146
  %v2151 = vadd.f32 %v2112, %v2147
  %v2152 = vmul.f32 %v2132, %v544
  %v2153 = vmul.f32 %v2132, %v548
  %2156 = vrot.lane.b32.xlu0 %v2152, 112
  %v2157 = vpop.permute.xlu0 %2156
  %2158 = vrot.lane.b32.xlu0 %v2153, 112
  %v2159 = vpop.permute.xlu0 %2158
  %v2160 = vsel %vm2028, %v2157, %v2159
  %v2161 = vsel %vm2028, %v2159, %v2145
  %v2164 = vadd.f32 %v2125, %v2160
  %v2165 = vadd.f32 %v2126, %v2161
  %s2166 = scalar_lea.vmem %s1, 344
  %v2167 = vld [vmem:[%s2166] sm:$0xff]
  %2169 = vset.pattern.permute.xlu0 0
  %2170 = vperm.xlu0 %2169, %v2167
  %v2171 = vpop.permute.xlu0 %2170
  %v2173 = vmul.f32 %v2171, %v576
  %v2174 = vmul.f32 %v2171, %v580
  %v2175 = vmul.f32 %v2171, 0.0
  %2179 = vrot.lane.b32.xlu0 %v2173, 112
  %v2180 = vpop.permute.xlu0 %2179
  %2181 = vrot.lane.b32.xlu0 %v2174, 112
  %v2182 = vpop.permute.xlu0 %2181
  %2183 = vrot.lane.b32.xlu0 %v2175, 112
  %v2184 = vpop.permute.xlu0 %2183
  %v2185 = vsel %vm2028, %v2180, %v2182
  %v2186 = vsel %vm2028, %v2182, %v2184
  %v2189 = vadd.f32 %v2150, %v2185
  %v2190 = vadd.f32 %v2151, %v2186
  %v2191 = vmul.f32 %v2171, %v602
  %v2192 = vmul.f32 %v2171, %v606
  %2195 = vrot.lane.b32.xlu0 %v2191, 112
  %v2196 = vpop.permute.xlu0 %2195
  %2197 = vrot.lane.b32.xlu0 %v2192, 112
  %v2198 = vpop.permute.xlu0 %2197
  %v2199 = vsel %vm2028, %v2196, %v2198
  %v2200 = vsel %vm2028, %v2198, %v2184
  %v2203 = vadd.f32 %v2164, %v2199
  %v2204 = vadd.f32 %v2165, %v2200
  %s2205 = scalar_lea.vmem %s1, 416
  %v2206 = vld [vmem:[%s2205] sm:$0xff]
  %2208 = vset.pattern.permute.xlu0 0
  %2209 = vperm.xlu0 %2208, %v2206
  %v2210 = vpop.permute.xlu0 %2209
  %v2212 = vmul.f32 %v2210, %v634
  %v2213 = vmul.f32 %v2210, %v638
  %v2214 = vmul.f32 %v2210, 0.0
  %2218 = vrot.lane.b32.xlu0 %v2212, 112
  %v2219 = vpop.permute.xlu0 %2218
  %2220 = vrot.lane.b32.xlu0 %v2213, 112
  %v2221 = vpop.permute.xlu0 %2220
  %2222 = vrot.lane.b32.xlu0 %v2214, 112
  %v2223 = vpop.permute.xlu0 %2222
  %v2224 = vsel %vm2028, %v2219, %v2221
  %v2225 = vsel %vm2028, %v2221, %v2223
  %v2228 = vadd.f32 %v2189, %v2224
  %v2229 = vadd.f32 %v2190, %v2225
  %v2230 = vmul.f32 %v2210, %v660
  %v2231 = vmul.f32 %v2210, %v664
  %2234 = vrot.lane.b32.xlu0 %v2230, 112
  %v2235 = vpop.permute.xlu0 %2234
  %2236 = vrot.lane.b32.xlu0 %v2231, 112
  %v2237 = vpop.permute.xlu0 %2236
  %v2238 = vsel %vm2028, %v2235, %v2237
  %v2239 = vsel %vm2028, %v2237, %v2223
  %v2242 = vadd.f32 %v2203, %v2238
  %v2243 = vadd.f32 %v2204, %v2239
  %s2244 = scalar_lea.vmem %s1, 488
  %v2245 = vld [vmem:[%s2244] sm:$0xff]
  %2247 = vset.pattern.permute.xlu0 0
  %2248 = vperm.xlu0 %2247, %v2245
  %v2249 = vpop.permute.xlu0 %2248
  %v2251 = vmul.f32 %v2249, %v692
  %v2252 = vmul.f32 %v2249, %v696
  %v2253 = vmul.f32 %v2249, 0.0
  %2257 = vrot.lane.b32.xlu0 %v2251, 112
  %v2258 = vpop.permute.xlu0 %2257
  %2259 = vrot.lane.b32.xlu0 %v2252, 112
  %v2260 = vpop.permute.xlu0 %2259
  %2261 = vrot.lane.b32.xlu0 %v2253, 112
  %v2262 = vpop.permute.xlu0 %2261
  %v2263 = vsel %vm2028, %v2258, %v2260
  %v2264 = vsel %vm2028, %v2260, %v2262
  %v2267 = vadd.f32 %v2228, %v2263
  %v2268 = vadd.f32 %v2229, %v2264
  %v2269 = vmul.f32 %v2249, %v718
  %v2270 = vmul.f32 %v2249, %v722
  %2273 = vrot.lane.b32.xlu0 %v2269, 112
  %v2274 = vpop.permute.xlu0 %2273
  %2275 = vrot.lane.b32.xlu0 %v2270, 112
  %v2276 = vpop.permute.xlu0 %2275
  %v2277 = vsel %vm2028, %v2274, %v2276
  %v2278 = vsel %vm2028, %v2276, %v2262
  %v2281 = vadd.f32 %v2242, %v2277
  %v2282 = vadd.f32 %v2243, %v2278
  %s2283 = scalar_lea.vmem %s1, 560
  %v2284 = vld [vmem:[%s2283] sm:$0xff]
  %2286 = vset.pattern.permute.xlu0 0
  %2287 = vperm.xlu0 %2286, %v2284
  %v2288 = vpop.permute.xlu0 %2287
  %v2290 = vmul.f32 %v2288, %v750
  %v2291 = vmul.f32 %v2288, %v754
  %v2292 = vmul.f32 %v2288, 0.0
  %2296 = vrot.lane.b32.xlu0 %v2290, 112
  %v2297 = vpop.permute.xlu0 %2296
  %2298 = vrot.lane.b32.xlu0 %v2291, 112
  %v2299 = vpop.permute.xlu0 %2298
  %2300 = vrot.lane.b32.xlu0 %v2292, 112
  %v2301 = vpop.permute.xlu0 %2300
  %v2302 = vsel %vm2028, %v2297, %v2299
  %v2303 = vsel %vm2028, %v2299, %v2301
  %v2306 = vadd.f32 %v2267, %v2302
  %v2307 = vadd.f32 %v2268, %v2303
  %v2308 = vmul.f32 %v2288, %v776
  %v2309 = vmul.f32 %v2288, %v780
  %2312 = vrot.lane.b32.xlu0 %v2308, 112
  %v2313 = vpop.permute.xlu0 %2312
  %2314 = vrot.lane.b32.xlu0 %v2309, 112
  %v2315 = vpop.permute.xlu0 %2314
  %v2316 = vsel %vm2028, %v2313, %v2315
  %v2317 = vsel %vm2028, %v2315, %v2301
  %v2320 = vadd.f32 %v2281, %v2316
  %v2321 = vadd.f32 %v2282, %v2317
  %2322 = vrot.lane.b32.xlu0 %v14, 111
  %v2323 = vpop.permute.xlu0 %2322
  %2324 = vrot.lane.b32.xlu0 %v15, 111
  %v2325 = vpop.permute.xlu0 %2324
  %2326 = vrot.lane.b32.xlu0 0.0, 111
  %v2327 = vpop.permute.xlu0 %2326
  %2328 = vrot.lane.b32.xlu0 %v16, 111
  %v2329 = vpop.permute.xlu0 %2328
  %2330 = vrot.lane.b32.xlu0 %v17, 111
  %v2331 = vpop.permute.xlu0 %2330
  %vm2332 = vcmask 908288
  %v2333 = vsel %vm2332, %v2323, %v2325
  %v2334 = vsel %vm2332, %v2325, %v2327
  %v2335 = vsel %vm2332, %v2329, %v2331
  %v2336 = vsel %vm2332, %v2331, %v2327
  %v2341 = vsel %vm803, %v2333, 0.0
  %v2342 = vsel %vm804, %v2334, 0.0
  %v2343 = vsel %vm803, %v2335, 0.0
  %v2344 = vsel %vm804, %v2336, 0.0
  %s2345 = scalar_lea.vmem %s1, 64
  %v2346 = vld [vmem:[%s2345] sm:$0xff]
  %2348 = vset.pattern.permute.xlu0 0
  %2349 = vperm.xlu0 %2348, %v2346
  %v2350 = vpop.permute.xlu0 %2349
  %v2352 = vlaneseq
  %v2353 = vshrl.u32 %v2352, 7
  %v2354 = vsub.s32 0, %v2353
  %v2355 = vrot.slane %v2341, %v2354
  %v2356 = vlaneseq
  %v2357 = vshrl.u32 %v2356, 7
  %v2358 = vsub.s32 0, %v2357
  %v2359 = vrot.slane %v2342, %v2358
  %v2360 = vmul.f32 %v2350, %v2355
  %v2361 = vmul.f32 %v2350, %v2359
  %v2362 = vadd.f32 %v2306, %v2360
  %v2363 = vadd.f32 %v2307, %v2361
  %v2364 = vlaneseq
  %v2365 = vshrl.u32 %v2364, 7
  %v2366 = vsub.s32 0, %v2365
  %v2367 = vrot.slane %v2343, %v2366
  %v2368 = vlaneseq
  %v2369 = vshrl.u32 %v2368, 7
  %v2370 = vsub.s32 0, %v2369
  %v2371 = vrot.slane %v2344, %v2370
  %v2372 = vmul.f32 %v2350, %v2367
  %v2373 = vmul.f32 %v2350, %v2371
  %v2374 = vadd.f32 %v2320, %v2372
  %v2375 = vadd.f32 %v2321, %v2373
  %s2376 = scalar_lea.vmem %s1, 136
  %v2377 = vld [vmem:[%s2376] sm:$0xff]
  %2379 = vset.pattern.permute.xlu0 0
  %2380 = vperm.xlu0 %2379, %v2377
  %v2381 = vpop.permute.xlu0 %2380
  %v2383 = vlaneseq
  %v2384 = vshrl.u32 %v2383, 7
  %v2385 = vsub.s32 1, %v2384
  %v2386 = vrot.slane %v2341, %v2385
  %v2387 = vlaneseq
  %v2388 = vshrl.u32 %v2387, 7
  %v2389 = vsub.s32 1, %v2388
  %v2390 = vrot.slane %v2342, %v2389
  %v2391 = vmul.f32 %v2381, %v2386
  %v2392 = vmul.f32 %v2381, %v2390
  %v2393 = vadd.f32 %v2362, %v2391
  %v2394 = vadd.f32 %v2363, %v2392
  %v2395 = vlaneseq
  %v2396 = vshrl.u32 %v2395, 7
  %v2397 = vsub.s32 1, %v2396
  %v2398 = vrot.slane %v2343, %v2397
  %v2399 = vlaneseq
  %v2400 = vshrl.u32 %v2399, 7
  %v2401 = vsub.s32 1, %v2400
  %v2402 = vrot.slane %v2344, %v2401
  %v2403 = vmul.f32 %v2381, %v2398
  %v2404 = vmul.f32 %v2381, %v2402
  %v2405 = vadd.f32 %v2374, %v2403
  %v2406 = vadd.f32 %v2375, %v2404
  %s2407 = scalar_lea.vmem %s1, 208
  %v2408 = vld [vmem:[%s2407] sm:$0xff]
  %2410 = vset.pattern.permute.xlu0 0
  %2411 = vperm.xlu0 %2410, %v2408
  %v2412 = vpop.permute.xlu0 %2411
  %v2414 = vlaneseq
  %v2415 = vshrl.u32 %v2414, 7
  %v2416 = vsub.s32 2, %v2415
  %v2417 = vrot.slane %v2341, %v2416
  %v2418 = vlaneseq
  %v2419 = vshrl.u32 %v2418, 7
  %v2420 = vsub.s32 2, %v2419
  %v2421 = vrot.slane %v2342, %v2420
  %v2422 = vmul.f32 %v2412, %v2417
  %v2423 = vmul.f32 %v2412, %v2421
  %v2424 = vadd.f32 %v2393, %v2422
  %v2425 = vadd.f32 %v2394, %v2423
  %v2426 = vlaneseq
  %v2427 = vshrl.u32 %v2426, 7
  %v2428 = vsub.s32 2, %v2427
  %v2429 = vrot.slane %v2343, %v2428
  %v2430 = vlaneseq
  %v2431 = vshrl.u32 %v2430, 7
  %v2432 = vsub.s32 2, %v2431
  %v2433 = vrot.slane %v2344, %v2432
  %v2434 = vmul.f32 %v2412, %v2429
  %v2435 = vmul.f32 %v2412, %v2433
  %v2436 = vadd.f32 %v2405, %v2434
  %v2437 = vadd.f32 %v2406, %v2435
  %s2438 = scalar_lea.vmem %s1, 280
  %v2439 = vld [vmem:[%s2438] sm:$0xff]
  %2441 = vset.pattern.permute.xlu0 0
  %2442 = vperm.xlu0 %2441, %v2439
  %v2443 = vpop.permute.xlu0 %2442
  %v2445 = vlaneseq
  %v2446 = vshrl.u32 %v2445, 7
  %v2447 = vsub.s32 3, %v2446
  %v2448 = vrot.slane %v2341, %v2447
  %v2449 = vlaneseq
  %v2450 = vshrl.u32 %v2449, 7
  %v2451 = vsub.s32 3, %v2450
  %v2452 = vrot.slane %v2342, %v2451
  %v2453 = vmul.f32 %v2443, %v2448
  %v2454 = vmul.f32 %v2443, %v2452
  %v2455 = vadd.f32 %v2424, %v2453
  %v2456 = vadd.f32 %v2425, %v2454
  %v2457 = vlaneseq
  %v2458 = vshrl.u32 %v2457, 7
  %v2459 = vsub.s32 3, %v2458
  %v2460 = vrot.slane %v2343, %v2459
  %v2461 = vlaneseq
  %v2462 = vshrl.u32 %v2461, 7
  %v2463 = vsub.s32 3, %v2462
  %v2464 = vrot.slane %v2344, %v2463
  %v2465 = vmul.f32 %v2443, %v2460
  %v2466 = vmul.f32 %v2443, %v2464
  %v2467 = vadd.f32 %v2436, %v2465
  %v2468 = vadd.f32 %v2437, %v2466
  %s2469 = scalar_lea.vmem %s1, 352
  %v2470 = vld [vmem:[%s2469] sm:$0xff]
  %2472 = vset.pattern.permute.xlu0 0
  %2473 = vperm.xlu0 %2472, %v2470
  %v2474 = vpop.permute.xlu0 %2473
  %v2476 = vlaneseq
  %v2477 = vshrl.u32 %v2476, 7
  %v2478 = vsub.s32 4, %v2477
  %v2479 = vrot.slane %v2341, %v2478
  %v2480 = vlaneseq
  %v2481 = vshrl.u32 %v2480, 7
  %v2482 = vsub.s32 4, %v2481
  %v2483 = vrot.slane %v2342, %v2482
  %v2484 = vmul.f32 %v2474, %v2479
  %v2485 = vmul.f32 %v2474, %v2483
  %v2486 = vadd.f32 %v2455, %v2484
  %v2487 = vadd.f32 %v2456, %v2485
  %v2488 = vlaneseq
  %v2489 = vshrl.u32 %v2488, 7
  %v2490 = vsub.s32 4, %v2489
  %v2491 = vrot.slane %v2343, %v2490
  %v2492 = vlaneseq
  %v2493 = vshrl.u32 %v2492, 7
  %v2494 = vsub.s32 4, %v2493
  %v2495 = vrot.slane %v2344, %v2494
  %v2496 = vmul.f32 %v2474, %v2491
  %v2497 = vmul.f32 %v2474, %v2495
  %v2498 = vadd.f32 %v2467, %v2496
  %v2499 = vadd.f32 %v2468, %v2497
  %s2500 = scalar_lea.vmem %s1, 424
  %v2501 = vld [vmem:[%s2500] sm:$0xff]
  %2503 = vset.pattern.permute.xlu0 0
  %2504 = vperm.xlu0 %2503, %v2501
  %v2505 = vpop.permute.xlu0 %2504
  %v2507 = vlaneseq
  %v2508 = vshrl.u32 %v2507, 7
  %v2509 = vsub.s32 5, %v2508
  %v2510 = vrot.slane %v2341, %v2509
  %v2511 = vlaneseq
  %v2512 = vshrl.u32 %v2511, 7
  %v2513 = vsub.s32 5, %v2512
  %v2514 = vrot.slane %v2342, %v2513
  %v2515 = vmul.f32 %v2505, %v2510
  %v2516 = vmul.f32 %v2505, %v2514
  %v2517 = vadd.f32 %v2486, %v2515
  %v2518 = vadd.f32 %v2487, %v2516
  %v2519 = vlaneseq
  %v2520 = vshrl.u32 %v2519, 7
  %v2521 = vsub.s32 5, %v2520
  %v2522 = vrot.slane %v2343, %v2521
  %v2523 = vlaneseq
  %v2524 = vshrl.u32 %v2523, 7
  %v2525 = vsub.s32 5, %v2524
  %v2526 = vrot.slane %v2344, %v2525
  %v2527 = vmul.f32 %v2505, %v2522
  %v2528 = vmul.f32 %v2505, %v2526
  %v2529 = vadd.f32 %v2498, %v2527
  %v2530 = vadd.f32 %v2499, %v2528
  %s2531 = scalar_lea.vmem %s1, 496
  %v2532 = vld [vmem:[%s2531] sm:$0xff]
  %2534 = vset.pattern.permute.xlu0 0
  %2535 = vperm.xlu0 %2534, %v2532
  %v2536 = vpop.permute.xlu0 %2535
  %v2538 = vlaneseq
  %v2539 = vshrl.u32 %v2538, 7
  %v2540 = vsub.s32 6, %v2539
  %v2541 = vrot.slane %v2341, %v2540
  %v2542 = vlaneseq
  %v2543 = vshrl.u32 %v2542, 7
  %v2544 = vsub.s32 6, %v2543
  %v2545 = vrot.slane %v2342, %v2544
  %v2546 = vmul.f32 %v2536, %v2541
  %v2547 = vmul.f32 %v2536, %v2545
  %v2548 = vadd.f32 %v2517, %v2546
  %v2549 = vadd.f32 %v2518, %v2547
  %v2550 = vlaneseq
  %v2551 = vshrl.u32 %v2550, 7
  %v2552 = vsub.s32 6, %v2551
  %v2553 = vrot.slane %v2343, %v2552
  %v2554 = vlaneseq
  %v2555 = vshrl.u32 %v2554, 7
  %v2556 = vsub.s32 6, %v2555
  %v2557 = vrot.slane %v2344, %v2556
  %v2558 = vmul.f32 %v2536, %v2553
  %v2559 = vmul.f32 %v2536, %v2557
  %v2560 = vadd.f32 %v2529, %v2558
  %v2561 = vadd.f32 %v2530, %v2559
  %s2562 = scalar_lea.vmem %s1, 568
  %v2563 = vld [vmem:[%s2562] sm:$0xff]
  %2565 = vset.pattern.permute.xlu0 0
  %2566 = vperm.xlu0 %2565, %v2563
  %v2567 = vpop.permute.xlu0 %2566
  %v2569 = vlaneseq
  %v2570 = vshrl.u32 %v2569, 7
  %v2571 = vsub.s32 7, %v2570
  %v2572 = vrot.slane %v2341, %v2571
  %v2573 = vlaneseq
  %v2574 = vshrl.u32 %v2573, 7
  %v2575 = vsub.s32 7, %v2574
  %v2576 = vrot.slane %v2342, %v2575
  %v2577 = vmul.f32 %v2567, %v2572
  %v2578 = vmul.f32 %v2567, %v2576
  %v2579 = vadd.f32 %v2548, %v2577
  %v2580 = vadd.f32 %v2549, %v2578
  %v2581 = vlaneseq
  %v2582 = vshrl.u32 %v2581, 7
  %v2583 = vsub.s32 7, %v2582
  %v2584 = vrot.slane %v2343, %v2583
  %v2585 = vlaneseq
  %v2586 = vshrl.u32 %v2585, 7
  %v2587 = vsub.s32 7, %v2586
  %v2588 = vrot.slane %v2344, %v2587
  %v2589 = vmul.f32 %v2567, %v2584
  %v2590 = vmul.f32 %v2567, %v2588
  %v2591 = vadd.f32 %v2560, %v2589
  %v2592 = vadd.f32 %v2561, %v2590
  %v2593 = vld [vmem:[%s2] sm:$0xff]
  %2595 = vset.pattern.permute.xlu0 0
  %2596 = vperm.xlu0 %2595, %v2593
  %v2597 = vpop.permute.xlu0 %2596
  %v2599 = vadd.f32 %v2579, %v2597
  %v2600 = vadd.f32 %v2580, %v2597
  %v2601 = vadd.f32 %v2591, %v2597
  %v2602 = vadd.f32 %v2592, %v2597
  %v2603 = vmul.f32 %v2599, 0.05
  %v2604 = vmul.f32 %v2600, 0.05
  %v2605 = vmul.f32 %v2601, 0.05
  %v2606 = vmul.f32 %v2602, 0.05
  %v2607 = vmax.f32 %v2603, %v2599
  %v2608 = vmax.f32 %v2604, %v2600
  %v2609 = vmax.f32 %v2605, %v2601
  %v2610 = vmax.f32 %v2606, %v2602
  %2611 = vst [vmem:[%s3] sm:$0xff] %v2607
  %2612 = vst [vmem:[%s3 + $0x8] sm:$0xff] %v2608
  %2613 = vst [vmem:[%s3 + $0x10] sm:$0xff] %v2609
  %2614 = vst [vmem:[%s3 + $0x18] sm:$0xff] %v2610
  // Predicated region
  $region14: #{group_conv2d.1} parent=0 // pred_check
    _
  $region15: #{group_conv2d.1} parent=0 // pred_check_branch
    %2616 = sbr.rel (0) target = $region17
  $region16: #{group_conv2d.1} parent=0 // pred_region
    _
  $region17: #{group_conv2d.1} parent=0 // pred_fallthru
    _
  // Predicated region
  $region18: #{group_conv2d.1} parent=0 // pred_check
    _
  $region19: #{group_conv2d.1} parent=0 // pred_check_branch
    %2618 = sbr.rel (0) target = $region21
  $region20: #{group_conv2d.1} parent=0 // pred_region
    _
  $region21: #{group_conv2d.1} parent=0 // pred_fallthru
    _

</llo_original>
